<compile_context>
chip_gen: v6e
topology: v6e:2x2x1
jax: 0.10.0
libtpu: 0.0.40
codegen_flags: <defaults>
</compile_context>

<pallas_src>
import math

import jax
import jax.numpy as jnp
from jax.experimental import pallas as pl
from jax.experimental.pallas import tpu as pltpu

N_INPUT = 392
HIDDEN = (1024, 512, 256)
N_OUT = 1
NEG_SLOPE = 0.2
DEFAULT_TILE_B = 1024       # batch tile (multiple of 128)


def _round_up(n, m):
    return ((n + m - 1) // m) * m


def _leaky_relu(x, slope):
    return jnp.where(x > 0, x, slope * x)


def _mlp_kernel(x_ref,
                w1_ref, b1_ref,
                w2_ref, b2_ref,
                w3_ref, b3_ref,
                w4t_ref, b4_ref,
                o_ref):
    # x_ref: (TILE_B, 392) f32. Cast to bf16 right before each MXU matmul,
    # accumulate in f32; bias add / LeakyReLU / sigmoid in f32.
    x = x_ref[...].astype(jnp.bfloat16)

    h = jnp.dot(x, w1_ref[...], preferred_element_type=jnp.float32) + b1_ref[...]
    h = _leaky_relu(h, NEG_SLOPE)
    # Dropout(0.3): identity in eval mode.

    h = jnp.dot(h.astype(jnp.bfloat16), w2_ref[...],
                preferred_element_type=jnp.float32) + b2_ref[...]
    h = _leaky_relu(h, NEG_SLOPE)

    h = jnp.dot(h.astype(jnp.bfloat16), w3_ref[...],
                preferred_element_type=jnp.float32) + b3_ref[...]
    h = _leaky_relu(h, NEG_SLOPE)

    # Final 256 -> 1 layer: VPU multiply + XLU lane reduction (avoids feeding a
    # 255/256-empty RHS through the MXU); stays in f32.
    logits = jnp.sum(h * w4t_ref[...], axis=-1, keepdims=True) + b4_ref[...]
    o_ref[...] = jax.nn.sigmoid(logits).astype(o_ref.dtype)


def discriminator_forward(x, params, *, tile_b=DEFAULT_TILE_B):
    """x: any shape reshapeable to (-1, 392). Returns (B, 1) float32 probabilities."""
    x2d = x.reshape(-1, N_INPUT).astype(jnp.float32)
    B = x2d.shape[0]

    # Batch tile selection: multiple of 128 for large batches; keep >= 2 grid
    # steps when possible so v7x's two TensorCores both get work; snug 8-aligned
    # tile for tiny batches.
    tile_b = max(128, _round_up(tile_b, 128))
    if B >= 2 * tile_b:
        tb = tile_b
    elif B > 128:
        tb = _round_up(pl.cdiv(B, 2), 128)
    else:
        tb = _round_up(max(B, 8), 8)
    grid = (pl.cdiv(B, tb),)

    # Weights (in, out) -> bf16 for the MXU; biases -> (1, out) f32.
    # Last layer stays f32: its (256, 1) weight is passed transposed as (1, 256)
    # and applied on the VPU inside the kernel.
    (w1, b1), (w2, b2), (w3, b3), (w4, b4) = params
    flat_params = [
        w1.astype(jnp.bfloat16), b1.reshape(1, -1).astype(jnp.float32),
        w2.astype(jnp.bfloat16), b2.reshape(1, -1).astype(jnp.float32),
        w3.astype(jnp.bfloat16), b3.reshape(1, -1).astype(jnp.float32),
        w4.reshape(1, -1).astype(jnp.float32), b4.reshape(1, -1).astype(jnp.float32),
    ]

    in_specs = [pl.BlockSpec((tb, N_INPUT), lambda i: (i, 0))]
    for arr in flat_params:
        # Constant block index -> weights/biases stay VMEM-resident across the grid.
        in_specs.append(pl.BlockSpec(arr.shape, lambda i: (0, 0)))

    out = pl.pallas_call(
        _mlp_kernel,
        out_shape=jax.ShapeDtypeStruct((B, N_OUT), jnp.float32),
        grid=grid,
        in_specs=in_specs,
        out_specs=pl.BlockSpec((tb, N_OUT), lambda i: (i, 0)),
        compiler_params=pltpu.CompilerParams(
            dimension_semantics=("parallel",),
            vmem_limit_bytes=48 * 1024 * 1024,
        ),
    )(x2d, *flat_params)

    return out


def init_params(key):
    """Deterministic init matching nn.Linear default: U(-1/sqrt(fan_in), 1/sqrt(fan_in))."""
    dims = (N_INPUT,) + HIDDEN + (N_OUT,)
    params = []
    for i in range(len(dims) - 1):
        fan_in, fan_out = dims[i], dims[i + 1]
        key, kw, kb = jax.random.split(key, 3)
        bound = 1.0 / math.sqrt(fan_in)
        # stored as (in, out): equals PyTorch's W.T
        w = jax.random.uniform(kw, (fan_in, fan_out), jnp.float32, -bound, bound)
        b = jax.random.uniform(kb, (fan_out,), jnp.float32, -bound, bound)
        params.append((w, b))
    return params


def _reference_forward(x, params):
    """Pure-f32 reference (PyTorch eval-mode semantics)."""
    h = x.reshape(-1, N_INPUT)
    for i, (w, b) in enumerate(params):
        h = h @ w + b
        if i < len(params) - 1:
            h = jnp.where(h > 0, h, NEG_SLOPE * h)
        else:
            h = jax.nn.sigmoid(h)
    return h


if __name__ == "__main__":
    key = jax.random.PRNGKey(0)
    pkey, xkey, xkey2 = jax.random.split(key, 3)
    params = init_params(pkey)

    # Small batch (single snug block).
    x = jax.random.normal(xkey, (8, N_INPUT), dtype=jnp.float32)
    out = jax.block_until_ready(discriminator_forward(x, params))
    ref = _reference_forward(x, params)
    assert out.shape == (8, 1), out.shape
    # bf16 matmul inputs with f32 accumulation vs pure-f32 reference: small tolerance.
    assert jnp.allclose(out, ref, atol=2e-2, rtol=0.0), "mismatch vs reference (B=8)"

    # Larger, ragged batch: exercises the multi-step grid and the OOB-masked last block.
    x2 = jax.random.normal(xkey2, (300, N_INPUT), dtype=jnp.float32)
    out2 = jax.block_until_ready(discriminator_forward(x2, params))
    ref2 = _reference_forward(x2, params)
    assert out2.shape == (300, 1), out2.shape
    assert jnp.allclose(out2, ref2, atol=2e-2, rtol=0.0), "mismatch vs reference (B=300)"

    print("KERNEL_OK")
</pallas_src>

<mosaic_0001>
module attributes {stable_mosaic.version = 11 : i64} {
  func.func @_mlp_kernel(%arg0: i32, %arg1: memref<8x392xf32, #tpu.memory_space<vmem>>, %arg2: memref<392x1024xbf16, #tpu.memory_space<vmem>>, %arg3: memref<1x1024xf32, #tpu.memory_space<vmem>>, %arg4: memref<1024x512xbf16, #tpu.memory_space<vmem>>, %arg5: memref<1x512xf32, #tpu.memory_space<vmem>>, %arg6: memref<512x256xbf16, #tpu.memory_space<vmem>>, %arg7: memref<1x256xf32, #tpu.memory_space<vmem>>, %arg8: memref<1x256xf32, #tpu.memory_space<vmem>>, %arg9: memref<1x1xf32, #tpu.memory_space<vmem>>, %arg10: memref<8x1xf32, #tpu.memory_space<vmem>>) attributes {dimension_semantics = [#tpu.dimension_semantics<parallel>], iteration_bounds = array<i64: 1>, scalar_prefetch = 0 : i64, scratch_operands = 0 : i64, tpu.core_type = #tpu.core_type<tc>, window_params = [{transform_indices = @transform_0, window_bounds = array<i64: 8, 392>}, {pipeline_mode = #tpu.pipeline_mode<synchronous>, transform_indices = @transform_1, window_bounds = array<i64: 392, 1024>}, {pipeline_mode = #tpu.pipeline_mode<synchronous>, transform_indices = @transform_2, window_bounds = array<i64: 1, 1024>}, {pipeline_mode = #tpu.pipeline_mode<synchronous>, transform_indices = @transform_3, window_bounds = array<i64: 1024, 512>}, {pipeline_mode = #tpu.pipeline_mode<synchronous>, transform_indices = @transform_4, window_bounds = array<i64: 1, 512>}, {pipeline_mode = #tpu.pipeline_mode<synchronous>, transform_indices = @transform_5, window_bounds = array<i64: 512, 256>}, {pipeline_mode = #tpu.pipeline_mode<synchronous>, transform_indices = @transform_6, window_bounds = array<i64: 1, 256>}, {pipeline_mode = #tpu.pipeline_mode<synchronous>, transform_indices = @transform_7, window_bounds = array<i64: 1, 256>}, {pipeline_mode = #tpu.pipeline_mode<synchronous>, transform_indices = @transform_8, window_bounds = array<i64: 1, 1>}, {transform_indices = @transform_9, window_bounds = array<i64: 8, 1>}]} {
    %c0 = arith.constant 0 : index
    %c0_0 = arith.constant 0 : index
    %0 = vector.load %arg1[%c0, %c0_0] : memref<8x392xf32, #tpu.memory_space<vmem>>, vector<8x392xf32>
    %1 = arith.truncf %0 : vector<8x392xf32> to vector<8x392xbf16>
    %c0_1 = arith.constant 0 : index
    %c0_2 = arith.constant 0 : index
    %2 = vector.load %arg2[%c0_1, %c0_2] : memref<392x1024xbf16, #tpu.memory_space<vmem>>, vector<392x1024xbf16>
    %cst = arith.constant dense<0.000000e+00> : vector<8x1024xf32>
    %3 = tpu.matmul %1, %2, %cst {dimension_numbers = #tpu.dot_dimension_numbers<[1], [0], [0], [1], [0, 0, 1, 1], [], []>} : vector<8x392xbf16>, vector<392x1024xbf16>, vector<8x1024xf32> -> vector<8x1024xf32>
    %c0_3 = arith.constant 0 : index
    %c0_4 = arith.constant 0 : index
    %4 = vector.load %arg3[%c0_3, %c0_4] : memref<1x1024xf32, #tpu.memory_space<vmem>>, vector<1x1024xf32>
    %5 = vector.broadcast %4 : vector<1x1024xf32> to vector<8x1024xf32>
    %6 = arith.addf %3, %5 : vector<8x1024xf32>
    %cst_5 = arith.constant 0.000000e+00 : f32
    %7 = vector.broadcast %cst_5 : f32 to vector<8x1024xf32>
    %8 = arith.cmpf ogt, %6, %7 : vector<8x1024xf32>
    %cst_6 = arith.constant 2.000000e-01 : f32
    %9 = vector.broadcast %cst_6 : f32 to vector<8x1024xf32>
    %10 = arith.mulf %9, %6 : vector<8x1024xf32>
    %11 = arith.select %8, %6, %10 : vector<8x1024xi1>, vector<8x1024xf32>
    %12 = arith.truncf %11 : vector<8x1024xf32> to vector<8x1024xbf16>
    %c0_7 = arith.constant 0 : index
    %c0_8 = arith.constant 0 : index
    %13 = vector.load %arg4[%c0_7, %c0_8] : memref<1024x512xbf16, #tpu.memory_space<vmem>>, vector<1024x512xbf16>
    %cst_9 = arith.constant dense<0.000000e+00> : vector<8x512xf32>
    %14 = tpu.matmul %12, %13, %cst_9 {dimension_numbers = #tpu.dot_dimension_numbers<[1], [0], [0], [1], [0, 0, 1, 1], [], []>} : vector<8x1024xbf16>, vector<1024x512xbf16>, vector<8x512xf32> -> vector<8x512xf32>
    %c0_10 = arith.constant 0 : index
    %c0_11 = arith.constant 0 : index
    %15 = vector.load %arg5[%c0_10, %c0_11] : memref<1x512xf32, #tpu.memory_space<vmem>>, vector<1x512xf32>
    %16 = vector.broadcast %15 : vector<1x512xf32> to vector<8x512xf32>
    %17 = arith.addf %14, %16 : vector<8x512xf32>
    %cst_12 = arith.constant 0.000000e+00 : f32
    %18 = vector.broadcast %cst_12 : f32 to vector<8x512xf32>
    %19 = arith.cmpf ogt, %17, %18 : vector<8x512xf32>
    %cst_13 = arith.constant 2.000000e-01 : f32
    %20 = vector.broadcast %cst_13 : f32 to vector<8x512xf32>
    %21 = arith.mulf %20, %17 : vector<8x512xf32>
    %22 = arith.select %19, %17, %21 : vector<8x512xi1>, vector<8x512xf32>
    %23 = arith.truncf %22 : vector<8x512xf32> to vector<8x512xbf16>
    %c0_14 = arith.constant 0 : index
    %c0_15 = arith.constant 0 : index
    %24 = vector.load %arg6[%c0_14, %c0_15] : memref<512x256xbf16, #tpu.memory_space<vmem>>, vector<512x256xbf16>
    %cst_16 = arith.constant dense<0.000000e+00> : vector<8x256xf32>
    %25 = tpu.matmul %23, %24, %cst_16 {dimension_numbers = #tpu.dot_dimension_numbers<[1], [0], [0], [1], [0, 0, 1, 1], [], []>} : vector<8x512xbf16>, vector<512x256xbf16>, vector<8x256xf32> -> vector<8x256xf32>
    %c0_17 = arith.constant 0 : index
    %c0_18 = arith.constant 0 : index
    %26 = vector.load %arg7[%c0_17, %c0_18] : memref<1x256xf32, #tpu.memory_space<vmem>>, vector<1x256xf32>
    %27 = vector.broadcast %26 : vector<1x256xf32> to vector<8x256xf32>
    %28 = arith.addf %25, %27 : vector<8x256xf32>
    %cst_19 = arith.constant 0.000000e+00 : f32
    %29 = vector.broadcast %cst_19 : f32 to vector<8x256xf32>
    %30 = arith.cmpf ogt, %28, %29 : vector<8x256xf32>
    %cst_20 = arith.constant 2.000000e-01 : f32
    %31 = vector.broadcast %cst_20 : f32 to vector<8x256xf32>
    %32 = arith.mulf %31, %28 : vector<8x256xf32>
    %33 = arith.select %30, %28, %32 : vector<8x256xi1>, vector<8x256xf32>
    %c0_21 = arith.constant 0 : index
    %c0_22 = arith.constant 0 : index
    %34 = vector.load %arg8[%c0_21, %c0_22] : memref<1x256xf32, #tpu.memory_space<vmem>>, vector<1x256xf32>
    %35 = vector.broadcast %34 : vector<1x256xf32> to vector<8x256xf32>
    %36 = arith.mulf %33, %35 : vector<8x256xf32>
    %cst_23 = arith.constant dense<0.000000e+00> : vector<8xf32>
    %37 = vector.multi_reduction <add>, %36, %cst_23 [1] : vector<8x256xf32> to vector<8xf32>
    %38 = vector.shape_cast %37 : vector<8xf32> to vector<8x1xf32>
    %c0_24 = arith.constant 0 : index
    %c0_25 = arith.constant 0 : index
    %39 = vector.load %arg9[%c0_24, %c0_25] : memref<1x1xf32, #tpu.memory_space<vmem>>, vector<1x1xf32>
    %40 = vector.broadcast %39 : vector<1x1xf32> to vector<8x1xf32>
    %41 = arith.addf %38, %40 : vector<8x1xf32>
    %42 = arith.negf %41 : vector<8x1xf32>
    %43 = math.exp %42 : vector<8x1xf32>
    %cst_26 = arith.constant 1.000000e+00 : f32
    %44 = vector.broadcast %cst_26 : f32 to vector<8x1xf32>
    %45 = arith.addf %44, %43 : vector<8x1xf32>
    %46 = arith.divf %44, %45 : vector<8x1xf32>
    %c0_27 = arith.constant 0 : index
    %c0_28 = arith.constant 0 : index
    %47 = vector.load %arg10[%c0_27, %c0_28] : memref<8x1xf32, #tpu.memory_space<vmem>>, vector<8x1xf32>
    tpu.vector_store %arg10[%c0_27, %c0_28], %46 {strides = array<i32>} : memref<8x1xf32, #tpu.memory_space<vmem>>, vector<8x1xf32>,
    return
  }
  func.func @transform_0(%arg0: i32) -> (i32, i32) {
    %c0_i32 = arith.constant 0 : i32
    %c0_i32_0 = arith.constant 0 : i32
    return %arg0, %c0_i32 : i32, i32
  }
  func.func @transform_1(%arg0: i32) -> (i32, i32) {
    %c0_i32 = arith.constant 0 : i32
    %c0_i32_0 = arith.constant 0 : i32
    %c0_i32_1 = arith.constant 0 : i32
    return %c0_i32, %c0_i32_0 : i32, i32
  }
  func.func @transform_2(%arg0: i32) -> (i32, i32) {
    %c0_i32 = arith.constant 0 : i32
    %c0_i32_0 = arith.constant 0 : i32
    %c0_i32_1 = arith.constant 0 : i32
    return %c0_i32, %c0_i32_0 : i32, i32
  }
  func.func @transform_3(%arg0: i32) -> (i32, i32) {
    %c0_i32 = arith.constant 0 : i32
    %c0_i32_0 = arith.constant 0 : i32
    %c0_i32_1 = arith.constant 0 : i32
    return %c0_i32, %c0_i32_0 : i32, i32
  }
  func.func @transform_4(%arg0: i32) -> (i32, i32) {
    %c0_i32 = arith.constant 0 : i32
    %c0_i32_0 = arith.constant 0 : i32
    %c0_i32_1 = arith.constant 0 : i32
    return %c0_i32, %c0_i32_0 : i32, i32
  }
  func.func @transform_5(%arg0: i32) -> (i32, i32) {
    %c0_i32 = arith.constant 0 : i32
    %c0_i32_0 = arith.constant 0 : i32
    %c0_i32_1 = arith.constant 0 : i32
    return %c0_i32, %c0_i32_0 : i32, i32
  }
  func.func @transform_6(%arg0: i32) -> (i32, i32) {
    %c0_i32 = arith.constant 0 : i32
    %c0_i32_0 = arith.constant 0 : i32
    %c0_i32_1 = arith.constant 0 : i32
    return %c0_i32, %c0_i32_0 : i32, i32
  }
  func.func @transform_7(%arg0: i32) -> (i32, i32) {
    %c0_i32 = arith.constant 0 : i32
    %c0_i32_0 = arith.constant 0 : i32
    %c0_i32_1 = arith.constant 0 : i32
    return %c0_i32, %c0_i32_0 : i32, i32
  }
  func.func @transform_8(%arg0: i32) -> (i32, i32) {
    %c0_i32 = arith.constant 0 : i32
    %c0_i32_0 = arith.constant 0 : i32
    %c0_i32_1 = arith.constant 0 : i32
    return %c0_i32, %c0_i32_0 : i32, i32
  }
  func.func @transform_9(%arg0: i32) -> (i32, i32) {
    %c0_i32 = arith.constant 0 : i32
    %c0_i32_0 = arith.constant 0 : i32
    return %arg0, %c0_i32 : i32, i32
  }
}

</mosaic_0001>

<llo_original>
// kernel: tpu_custom_call.1
$region0: #{tpu_custom_call.1}
  #allocation0 [shape = 'u32[]', space=smem, size = 0x4, offset = 0x4, fixed_abs, tag = 'smem constant byte address 0x4 - core index']
  #allocation1 [shape = 'u32[144,128]{1,0:T(1,128)}', space=vmem, size = 0x12000, scoped, tag = 'internal scratch']
  #allocation2 [shape = 'f32[1,1]{1,0:T(1,128)S(1)}', space=vmem, size = 0x200, scoped, tag = 'scoped memory for tpu_custom_call.1']
  %s0 = inlined_call_operand.hbm [shape: f32[8,392], index: 0, kind: input, shape index: {}]
  %s1 = inlined_call_operand.hbm [shape: bf16[392,1024], index: 1, kind: input, shape index: {}]
  %s2 = inlined_call_operand.hbm [shape: f32[1,1024], index: 2, kind: input, shape index: {}]
  %s3 = inlined_call_operand.hbm [shape: bf16[1024,512], index: 3, kind: input, shape index: {}]
  %s4 = inlined_call_operand.vmem [shape: f32[1,512], index: 4, kind: input, shape index: {}]
  %s5 = inlined_call_operand.hbm [shape: bf16[512,256], index: 5, kind: input, shape index: {}]
  %s6 = inlined_call_operand.vmem [shape: f32[1,256], index: 6, kind: input, shape index: {}]
  %s7 = inlined_call_operand.vmem [shape: f32[1,256], index: 7, kind: input, shape index: {}]
  %s8 = inlined_call_operand.<no memory space> [shape: f32[1,1], index: 8, kind: input, shape index: {}]
  %s9 = inlined_call_operand.vmem [shape: f32[8,1], index: 9, kind: output, shape index: {}]
  %s10 = sld [smem:[#allocation0]]
  $region66: #{tpu_custom_call.1} parent=0
    _
  %s12 = ssub.s32 1, %s10
  %s13 = scalar_select 0, %s12, %s10
  %v14 = vstv %s8
  %15 = vst [vmem:[#allocation2] sm:$0x1] %v14
  $region1: #{tpu_custom_call.1} parent=0
    #allocation3 [shape = 'u8[16384]{0}', space=vmem, size = 0x4000, scoped, tag = 'input window, operand 0, single buffered']
    #allocation4 [shape = 's32[1]{0}', space=sflag, size = 0x4, scoped, tag = 'scoped memory for tpu_custom_call.1']
    #allocation5 [shape = 'u8[802816]{0}', space=vmem, size = 0xc4000, scoped, tag = 'input window, operand 1, single buffered']
    #allocation6 [shape = 's32[1]{0}', space=sflag, size = 0x4, scoped, tag = 'scoped memory for tpu_custom_call.1']
    #allocation7 [shape = 'u8[4096]{0}', space=vmem, size = 0x1000, scoped, tag = 'input window, operand 2, single buffered']
    #allocation8 [shape = 'u8[1048576]{0}', space=vmem, size = 0x100000, scoped, tag = 'input window, operand 3, single buffered']
    #allocation9 [shape = 's32[1]{0}', space=sflag, size = 0x4, scoped, tag = 'scoped memory for tpu_custom_call.1']
    #allocation10 [shape = 'u8[262144]{0}', space=vmem, size = 0x40000, scoped, tag = 'input window, operand 5, single buffered']
    %16 = vsyncpa [#allocation4], 0
    %17 = vsyncpa [#allocation6], 0
    %18 = vsyncpa [#allocation9], 0
    // Predicated region
    $region2: #{tpu_custom_call.1} parent=1 // pred_check
      _
    $region3: #{tpu_custom_call.1} parent=1 // pred_check_branch
      %20 = sbr.rel (0) target = $region5
    $region4: #{tpu_custom_call.1} parent=1 // pred_region
      %s22 = ssub.s32 512, 512
      %23 = vsyncadd [#allocation4], %s22
      %s25 = sshll.u32 [#allocation3], 4
      %s26 = int_to_ptr.vmem [resolvable:$true] %s25
      %28 = dma.hbm_to_vmem [thread:$0]  %s0, 512, %s26, [#allocation4]
    $region5: #{tpu_custom_call.1} parent=1 // pred_fallthru
      _
    // Predicated region
    $region6: #{tpu_custom_call.1} parent=1 // pred_check
      _
    $region7: #{tpu_custom_call.1} parent=1 // pred_check_branch
      %30 = sbr.rel (0) target = $region9
    $region8: #{tpu_custom_call.1} parent=1 // pred_region
      %s32 = ssub.s32 25088, 25088
      %33 = vsyncadd [#allocation6], %s32
      %s34 = sshll.u32 [#allocation5], 4
      %s35 = int_to_ptr.vmem [resolvable:$true] %s34
      %40 = dma.hbm_to_vmem [thread:$0]  %s1, 25088, %s35, [#allocation6], 512, 512, 32
    $region9: #{tpu_custom_call.1} parent=1 // pred_fallthru
      _
    // Predicated region
    $region10: #{tpu_custom_call.1} parent=1 // pred_check
      _
    $region11: #{tpu_custom_call.1} parent=1 // pred_check_branch
      %42 = sbr.rel (0) target = $region13
    $region12: #{tpu_custom_call.1} parent=1 // pred_region
      %s44 = ssub.s32 128, 128
      %45 = vsyncadd [#allocation6], %s44
      %s47 = sshll.u32 [#allocation7], 4
      %s48 = int_to_ptr.vmem [resolvable:$true] %s47
      %50 = dma.hbm_to_vmem [thread:$0]  %s2, 128, %s48, [#allocation6]
    $region13: #{tpu_custom_call.1} parent=1 // pred_fallthru
      _
    // Predicated region
    $region14: #{tpu_custom_call.1} parent=1 // pred_check
      _
    $region15: #{tpu_custom_call.1} parent=1 // pred_check_branch
      %52 = sbr.rel (0) target = $region17
    $region16: #{tpu_custom_call.1} parent=1 // pred_region
      %s54 = ssub.s32 32768, 32768
      %55 = vsyncadd [#allocation9], %s54
      %s56 = sshll.u32 [#allocation8], 4
      %s57 = int_to_ptr.vmem [resolvable:$true] %s56
      %62 = dma.hbm_to_vmem [thread:$0]  %s3, 32768, %s57, [#allocation9], 256, 256, 16
    $region17: #{tpu_custom_call.1} parent=1 // pred_fallthru
      _
    // Predicated region
    $region18: #{tpu_custom_call.1} parent=1 // pred_check
      _
    $region19: #{tpu_custom_call.1} parent=1 // pred_check_branch
      %64 = sbr.rel (0) target = $region21
    $region20: #{tpu_custom_call.1} parent=1 // pred_region
      _
    $region21: #{tpu_custom_call.1} parent=1 // pred_fallthru
      _
    // Predicated region
    $region22: #{tpu_custom_call.1} parent=1 // pred_check
      _
    $region23: #{tpu_custom_call.1} parent=1 // pred_check_branch
      %66 = sbr.rel (0) target = $region25
    $region24: #{tpu_custom_call.1} parent=1 // pred_region
      %s68 = ssub.s32 8192, 8192
      %69 = vsyncadd [#allocation9], %s68
      %s70 = sshll.u32 [#allocation10], 4
      %s71 = int_to_ptr.vmem [resolvable:$true] %s70
      %76 = dma.hbm_to_vmem [thread:$0]  %s5, 8192, %s71, [#allocation9], 128, 128, 8
    $region25: #{tpu_custom_call.1} parent=1 // pred_fallthru
      _
    // Predicated region
    $region26: #{tpu_custom_call.1} parent=1 // pred_check
      _
    $region27: #{tpu_custom_call.1} parent=1 // pred_check_branch
      %78 = sbr.rel (0) target = $region29
    $region28: #{tpu_custom_call.1} parent=1 // pred_region
      _
    $region29: #{tpu_custom_call.1} parent=1 // pred_fallthru
      _
    // Predicated region
    $region30: #{tpu_custom_call.1} parent=1 // pred_check
      _
    $region31: #{tpu_custom_call.1} parent=1 // pred_check_branch
      %80 = sbr.rel (0) target = $region33
    $region32: #{tpu_custom_call.1} parent=1 // pred_region
      _
    $region33: #{tpu_custom_call.1} parent=1 // pred_fallthru
      _
    // Predicated region
    $region34: #{tpu_custom_call.1} parent=1 // pred_check
      _
    $region35: #{tpu_custom_call.1} parent=1 // pred_check_branch
      %82 = sbr.rel (0) target = $region37
    $region36: #{tpu_custom_call.1} parent=1 // pred_region
      _
    $region37: #{tpu_custom_call.1} parent=1 // pred_fallthru
      _
    // Predicated region
    $region38: #{tpu_custom_call.1} parent=1 // pred_check
      _
    $region39: #{tpu_custom_call.1} parent=1 // pred_check_branch
      %84 = sbr.rel (0) target = $region41
    $region40: #{tpu_custom_call.1} parent=1 // pred_region
      %85 = dma.done [#allocation4], 512
    $region41: #{tpu_custom_call.1} parent=1 // pred_fallthru
      _
    // Predicated region
    $region42: #{tpu_custom_call.1} parent=1 // pred_check
      _
    $region43: #{tpu_custom_call.1} parent=1 // pred_check_branch
      %87 = sbr.rel (0) target = $region45
    $region44: #{tpu_custom_call.1} parent=1 // pred_region
      %88 = dma.done [#allocation6], 25088
    $region45: #{tpu_custom_call.1} parent=1 // pred_fallthru
      _
    // Predicated region
    $region46: #{tpu_custom_call.1} parent=1 // pred_check
      _
    $region47: #{tpu_custom_call.1} parent=1 // pred_check_branch
      %90 = sbr.rel (0) target = $region49
    $region48: #{tpu_custom_call.1} parent=1 // pred_region
      %91 = dma.done [#allocation6], 128
    $region49: #{tpu_custom_call.1} parent=1 // pred_fallthru
      _
    // Predicated region
    $region50: #{tpu_custom_call.1} parent=1 // pred_check
      _
    $region51: #{tpu_custom_call.1} parent=1 // pred_check_branch
      %93 = sbr.rel (0) target = $region53
    $region52: #{tpu_custom_call.1} parent=1 // pred_region
      %94 = dma.done [#allocation9], 32768
    $region53: #{tpu_custom_call.1} parent=1 // pred_fallthru
      _
    // Predicated region
    $region54: #{tpu_custom_call.1} parent=1 // pred_check
      _
    $region55: #{tpu_custom_call.1} parent=1 // pred_check_branch
      %96 = sbr.rel (0) target = $region57
    $region56: #{tpu_custom_call.1} parent=1 // pred_region
      %97 = dma.done [#allocation9], 8192
    $region57: #{tpu_custom_call.1} parent=1 // pred_fallthru
      _
    %v99 = vld [vmem:[#allocation3] sm:$0xff]
    %v100 = vld [vmem:[#allocation3 + $0x8] sm:$0xff]
    %v101 = vld [vmem:[#allocation3 + $0x10] sm:$0xff]
    %v102 = vld [vmem:[#allocation3 + $0x18] sm:$0xff]
    %v103 = vpack.c.bf16 %v99, %v99
    %v104 = vpack.c.bf16 %v100, %v100
    %v105 = vpack.c.bf16 %v101, %v101
    %v106 = vpack.c.bf16 %v102, %v102
    %v107 = vld [vmem:[#allocation5] sm:$0xff]
    %v108 = vld [vmem:[#allocation5 + $0x8] sm:$0xff]
    %v109 = vld [vmem:[#allocation5 + $0x10] sm:$0xff]
    %v110 = vld [vmem:[#allocation5 + $0x18] sm:$0xff]
    %v111 = vld [vmem:[#allocation5 + $0x20] sm:$0xff]
    %v112 = vld [vmem:[#allocation5 + $0x28] sm:$0xff]
    %v113 = vld [vmem:[#allocation5 + $0x30] sm:$0xff]
    %v114 = vld [vmem:[#allocation5 + $0x38] sm:$0xff]
    %v115 = vld [vmem:[#allocation5 + $0x40] sm:$0xff]
    %v116 = vld [vmem:[#allocation5 + $0x48] sm:$0xff]
    %v117 = vld [vmem:[#allocation5 + $0x50] sm:$0xff]
    %v118 = vld [vmem:[#allocation5 + $0x58] sm:$0xff]
    %v119 = vld [vmem:[#allocation5 + $0x60] sm:$0xff]
    %v120 = vld [vmem:[#allocation5 + $0x68] sm:$0xff]
    %v121 = vld [vmem:[#allocation5 + $0x70] sm:$0xff]
    %v122 = vld [vmem:[#allocation5 + $0x78] sm:$0xff]
    %v123 = vld [vmem:[#allocation5 + $0x80] sm:$0xff]
    %v124 = vld [vmem:[#allocation5 + $0x88] sm:$0xff]
    %v125 = vld [vmem:[#allocation5 + $0x90] sm:$0xff]
    %v126 = vld [vmem:[#allocation5 + $0x98] sm:$0xff]
    %v127 = vld [vmem:[#allocation5 + $0xa0] sm:$0xff]
    %v128 = vld [vmem:[#allocation5 + $0xa8] sm:$0xff]
    %v129 = vld [vmem:[#allocation5 + $0xb0] sm:$0xff]
    %v130 = vld [vmem:[#allocation5 + $0xb8] sm:$0xff]
    %v131 = vld [vmem:[#allocation5 + $0xc0] sm:$0xff]
    %v132 = vld [vmem:[#allocation5 + $0xc8] sm:$0xff]
    %v133 = vld [vmem:[#allocation5 + $0xd0] sm:$0xff]
    %v134 = vld [vmem:[#allocation5 + $0xd8] sm:$0xff]
    %v135 = vld [vmem:[#allocation5 + $0xe0] sm:$0xff]
    %v136 = vld [vmem:[#allocation5 + $0xe8] sm:$0xff]
    %v137 = vld [vmem:[#allocation5 + $0xf0] sm:$0xff]
    %v138 = vld [vmem:[#allocation5 + $0xf8] sm:$0xff]
    %v139 = vld [vmem:[#allocation5 + $0x100] sm:$0xff]
    %v140 = vld [vmem:[#allocation5 + $0x108] sm:$0xff]
    %v141 = vld [vmem:[#allocation5 + $0x110] sm:$0xff]
    %v142 = vld [vmem:[#allocation5 + $0x118] sm:$0xff]
    %v143 = vld [vmem:[#allocation5 + $0x120] sm:$0xff]
    %v144 = vld [vmem:[#allocation5 + $0x128] sm:$0xff]
    %v145 = vld [vmem:[#allocation5 + $0x130] sm:$0xff]
    %v146 = vld [vmem:[#allocation5 + $0x138] sm:$0xff]
    %v147 = vld [vmem:[#allocation5 + $0x140] sm:$0xff]
    %v148 = vld [vmem:[#allocation5 + $0x148] sm:$0xff]
    %v149 = vld [vmem:[#allocation5 + $0x150] sm:$0xff]
    %v150 = vld [vmem:[#allocation5 + $0x158] sm:$0xff]
    %v151 = vld [vmem:[#allocation5 + $0x160] sm:$0xff]
    %v152 = vld [vmem:[#allocation5 + $0x168] sm:$0xff]
    %v153 = vld [vmem:[#allocation5 + $0x170] sm:$0xff]
    %v154 = vld [vmem:[#allocation5 + $0x178] sm:$0xff]
    %v155 = vld [vmem:[#allocation5 + $0x180] sm:$0xff]
    %v156 = vld [vmem:[#allocation5 + $0x188] sm:$0xff]
    %v157 = vld [vmem:[#allocation5 + $0x190] sm:$0xff]
    %v158 = vld [vmem:[#allocation5 + $0x198] sm:$0xff]
    %v159 = vld [vmem:[#allocation5 + $0x1a0] sm:$0xff]
    %v160 = vld [vmem:[#allocation5 + $0x1a8] sm:$0xff]
    %v161 = vld [vmem:[#allocation5 + $0x1b0] sm:$0xff]
    %v162 = vld [vmem:[#allocation5 + $0x1b8] sm:$0xff]
    %v163 = vld [vmem:[#allocation5 + $0x1c0] sm:$0xff]
    %v164 = vld [vmem:[#allocation5 + $0x1c8] sm:$0xff]
    %v165 = vld [vmem:[#allocation5 + $0x1d0] sm:$0xff]
    %v166 = vld [vmem:[#allocation5 + $0x1d8] sm:$0xff]
    %v167 = vld [vmem:[#allocation5 + $0x1e0] sm:$0xff]
    %v168 = vld [vmem:[#allocation5 + $0x1e8] sm:$0xff]
    %v169 = vld [vmem:[#allocation5 + $0x1f0] sm:$0xff]
    %v170 = vld [vmem:[#allocation5 + $0x1f8] sm:$0xff]
    %v171 = vld [vmem:[#allocation5 + $0x200] sm:$0xff]
    %v172 = vld [vmem:[#allocation5 + $0x208] sm:$0xff]
    %v173 = vld [vmem:[#allocation5 + $0x210] sm:$0xff]
    %v174 = vld [vmem:[#allocation5 + $0x218] sm:$0xff]
    %v175 = vld [vmem:[#allocation5 + $0x220] sm:$0xff]
    %v176 = vld [vmem:[#allocation5 + $0x228] sm:$0xff]
    %v177 = vld [vmem:[#allocation5 + $0x230] sm:$0xff]
    %v178 = vld [vmem:[#allocation5 + $0x238] sm:$0xff]
    %v179 = vld [vmem:[#allocation5 + $0x240] sm:$0xff]
    %v180 = vld [vmem:[#allocation5 + $0x248] sm:$0xff]
    %v181 = vld [vmem:[#allocation5 + $0x250] sm:$0xff]
    %v182 = vld [vmem:[#allocation5 + $0x258] sm:$0xff]
    %v183 = vld [vmem:[#allocation5 + $0x260] sm:$0xff]
    %v184 = vld [vmem:[#allocation5 + $0x268] sm:$0xff]
    %v185 = vld [vmem:[#allocation5 + $0x270] sm:$0xff]
    %v186 = vld [vmem:[#allocation5 + $0x278] sm:$0xff]
    %v187 = vld [vmem:[#allocation5 + $0x280] sm:$0xff]
    %v188 = vld [vmem:[#allocation5 + $0x288] sm:$0xff]
    %v189 = vld [vmem:[#allocation5 + $0x290] sm:$0xff]
    %v190 = vld [vmem:[#allocation5 + $0x298] sm:$0xff]
    %v191 = vld [vmem:[#allocation5 + $0x2a0] sm:$0xff]
    %v192 = vld [vmem:[#allocation5 + $0x2a8] sm:$0xff]
    %v193 = vld [vmem:[#allocation5 + $0x2b0] sm:$0xff]
    %v194 = vld [vmem:[#allocation5 + $0x2b8] sm:$0xff]
    %v195 = vld [vmem:[#allocation5 + $0x2c0] sm:$0xff]
    %v196 = vld [vmem:[#allocation5 + $0x2c8] sm:$0xff]
    %v197 = vld [vmem:[#allocation5 + $0x2d0] sm:$0xff]
    %v198 = vld [vmem:[#allocation5 + $0x2d8] sm:$0xff]
    %v199 = vld [vmem:[#allocation5 + $0x2e0] sm:$0xff]
    %v200 = vld [vmem:[#allocation5 + $0x2e8] sm:$0xff]
    %v201 = vld [vmem:[#allocation5 + $0x2f0] sm:$0xff]
    %v202 = vld [vmem:[#allocation5 + $0x2f8] sm:$0xff]
    %v203 = vld [vmem:[#allocation5 + $0x300] sm:$0xff]
    %v204 = vld [vmem:[#allocation5 + $0x308] sm:$0xff]
    %v205 = vld [vmem:[#allocation5 + $0x310] sm:$0xff]
    %v206 = vld [vmem:[#allocation5 + $0x318] sm:$0xff]
    %v207 = vld [vmem:[#allocation5 + $0x320] sm:$0xff]
    %v208 = vld [vmem:[#allocation5 + $0x328] sm:$0xff]
    %v209 = vld [vmem:[#allocation5 + $0x330] sm:$0xff]
    %v210 = vld [vmem:[#allocation5 + $0x338] sm:$0xff]
    %v211 = vld [vmem:[#allocation5 + $0x340] sm:$0xff]
    %v212 = vld [vmem:[#allocation5 + $0x348] sm:$0xff]
    %v213 = vld [vmem:[#allocation5 + $0x350] sm:$0xff]
    %v214 = vld [vmem:[#allocation5 + $0x358] sm:$0xff]
    %v215 = vld [vmem:[#allocation5 + $0x360] sm:$0xff]
    %v216 = vld [vmem:[#allocation5 + $0x368] sm:$0xff]
    %v217 = vld [vmem:[#allocation5 + $0x370] sm:$0xff]
    %v218 = vld [vmem:[#allocation5 + $0x378] sm:$0xff]
    %v219 = vld [vmem:[#allocation5 + $0x380] sm:$0xff]
    %v220 = vld [vmem:[#allocation5 + $0x388] sm:$0xff]
    %v221 = vld [vmem:[#allocation5 + $0x390] sm:$0xff]
    %v222 = vld [vmem:[#allocation5 + $0x398] sm:$0xff]
    %v223 = vld [vmem:[#allocation5 + $0x3a0] sm:$0xff]
    %v224 = vld [vmem:[#allocation5 + $0x3a8] sm:$0xff]
    %v225 = vld [vmem:[#allocation5 + $0x3b0] sm:$0xff]
    %v226 = vld [vmem:[#allocation5 + $0x3b8] sm:$0xff]
    %v227 = vld [vmem:[#allocation5 + $0x3c0] sm:$0xff]
    %v228 = vld [vmem:[#allocation5 + $0x3c8] sm:$0xff]
    %v229 = vld [vmem:[#allocation5 + $0x3d0] sm:$0xff]
    %v230 = vld [vmem:[#allocation5 + $0x3d8] sm:$0xff]
    %v231 = vld [vmem:[#allocation5 + $0x3e0] sm:$0xff]
    %v232 = vld [vmem:[#allocation5 + $0x3e8] sm:$0xff]
    %v233 = vld [vmem:[#allocation5 + $0x3f0] sm:$0xff]
    %v234 = vld [vmem:[#allocation5 + $0x3f8] sm:$0xff]
    %v235 = vld [vmem:[#allocation5 + $0x400] sm:$0xff]
    %v236 = vld [vmem:[#allocation5 + $0x408] sm:$0xff]
    %v237 = vld [vmem:[#allocation5 + $0x410] sm:$0xff]
    %v238 = vld [vmem:[#allocation5 + $0x418] sm:$0xff]
    %v239 = vld [vmem:[#allocation5 + $0x420] sm:$0xff]
    %v240 = vld [vmem:[#allocation5 + $0x428] sm:$0xff]
    %v241 = vld [vmem:[#allocation5 + $0x430] sm:$0xff]
    %v242 = vld [vmem:[#allocation5 + $0x438] sm:$0xff]
    %v243 = vld [vmem:[#allocation5 + $0x440] sm:$0xff]
    %v244 = vld [vmem:[#allocation5 + $0x448] sm:$0xff]
    %v245 = vld [vmem:[#allocation5 + $0x450] sm:$0xff]
    %v246 = vld [vmem:[#allocation5 + $0x458] sm:$0xff]
    %v247 = vld [vmem:[#allocation5 + $0x460] sm:$0xff]
    %v248 = vld [vmem:[#allocation5 + $0x468] sm:$0xff]
    %v249 = vld [vmem:[#allocation5 + $0x470] sm:$0xff]
    %v250 = vld [vmem:[#allocation5 + $0x478] sm:$0xff]
    %v251 = vld [vmem:[#allocation5 + $0x480] sm:$0xff]
    %v252 = vld [vmem:[#allocation5 + $0x488] sm:$0xff]
    %v253 = vld [vmem:[#allocation5 + $0x490] sm:$0xff]
    %v254 = vld [vmem:[#allocation5 + $0x498] sm:$0xff]
    %v255 = vld [vmem:[#allocation5 + $0x4a0] sm:$0xff]
    %v256 = vld [vmem:[#allocation5 + $0x4a8] sm:$0xff]
    %v257 = vld [vmem:[#allocation5 + $0x4b0] sm:$0xff]
    %v258 = vld [vmem:[#allocation5 + $0x4b8] sm:$0xff]
    %v259 = vld [vmem:[#allocation5 + $0x4c0] sm:$0xff]
    %v260 = vld [vmem:[#allocation5 + $0x4c8] sm:$0xff]
    %v261 = vld [vmem:[#allocation5 + $0x4d0] sm:$0xff]
    %v262 = vld [vmem:[#allocation5 + $0x4d8] sm:$0xff]
    %v263 = vld [vmem:[#allocation5 + $0x4e0] sm:$0xff]
    %v264 = vld [vmem:[#allocation5 + $0x4e8] sm:$0xff]
    %v265 = vld [vmem:[#allocation5 + $0x4f0] sm:$0xff]
    %v266 = vld [vmem:[#allocation5 + $0x4f8] sm:$0xff]
    %v267 = vld [vmem:[#allocation5 + $0x500] sm:$0xff]
    %v268 = vld [vmem:[#allocation5 + $0x508] sm:$0xff]
    %v269 = vld [vmem:[#allocation5 + $0x510] sm:$0xff]
    %v270 = vld [vmem:[#allocation5 + $0x518] sm:$0xff]
    %v271 = vld [vmem:[#allocation5 + $0x520] sm:$0xff]
    %v272 = vld [vmem:[#allocation5 + $0x528] sm:$0xff]
    %v273 = vld [vmem:[#allocation5 + $0x530] sm:$0xff]
    %v274 = vld [vmem:[#allocation5 + $0x538] sm:$0xff]
    %v275 = vld [vmem:[#allocation5 + $0x540] sm:$0xff]
    %v276 = vld [vmem:[#allocation5 + $0x548] sm:$0xff]
    %v277 = vld [vmem:[#allocation5 + $0x550] sm:$0xff]
    %v278 = vld [vmem:[#allocation5 + $0x558] sm:$0xff]
    %v279 = vld [vmem:[#allocation5 + $0x560] sm:$0xff]
    %v280 = vld [vmem:[#allocation5 + $0x568] sm:$0xff]
    %v281 = vld [vmem:[#allocation5 + $0x570] sm:$0xff]
    %v282 = vld [vmem:[#allocation5 + $0x578] sm:$0xff]
    %v283 = vld [vmem:[#allocation5 + $0x580] sm:$0xff]
    %v284 = vld [vmem:[#allocation5 + $0x588] sm:$0xff]
    %v285 = vld [vmem:[#allocation5 + $0x590] sm:$0xff]
    %v286 = vld [vmem:[#allocation5 + $0x598] sm:$0xff]
    %v287 = vld [vmem:[#allocation5 + $0x5a0] sm:$0xff]
    %v288 = vld [vmem:[#allocation5 + $0x5a8] sm:$0xff]
    %v289 = vld [vmem:[#allocation5 + $0x5b0] sm:$0xff]
    %v290 = vld [vmem:[#allocation5 + $0x5b8] sm:$0xff]
    %v291 = vld [vmem:[#allocation5 + $0x5c0] sm:$0xff]
    %v292 = vld [vmem:[#allocation5 + $0x5c8] sm:$0xff]
    %v293 = vld [vmem:[#allocation5 + $0x5d0] sm:$0xff]
    %v294 = vld [vmem:[#allocation5 + $0x5d8] sm:$0xff]
    %v295 = vld [vmem:[#allocation5 + $0x5e0] sm:$0xff]
    %v296 = vld [vmem:[#allocation5 + $0x5e8] sm:$0xff]
    %v297 = vld [vmem:[#allocation5 + $0x5f0] sm:$0xff]
    %v298 = vld [vmem:[#allocation5 + $0x5f8] sm:$0xff]
    %v299 = vld [vmem:[#allocation5 + $0x600] sm:$0xff]
    %v300 = vld [vmem:[#allocation5 + $0x608] sm:$0xff]
    %v301 = vld [vmem:[#allocation5 + $0x610] sm:$0xff]
    %v302 = vld [vmem:[#allocation5 + $0x618] sm:$0xff]
    %v303 = vld [vmem:[#allocation7] sm:$0xff]
    %v305 = vlaneseq
    %v306 = vshrl.u32 %v305, 7
    %v307 = vsub.s32 0, %v306
    %v308 = vrot.slane %v303, %v307
    %v309 = vlaneseq
    %v310 = vshrl.u32 %v309, 7
    %v311 = vsub.s32 1, %v310
    %v312 = vrot.slane %v303, %v311
    %v313 = vlaneseq
    %v314 = vshrl.u32 %v313, 7
    %v315 = vsub.s32 2, %v314
    %v316 = vrot.slane %v303, %v315
    %v317 = vlaneseq
    %v318 = vshrl.u32 %v317, 7
    %v319 = vsub.s32 3, %v318
    %v320 = vrot.slane %v303, %v319
    %v321 = vlaneseq
    %v322 = vshrl.u32 %v321, 7
    %v323 = vsub.s32 4, %v322
    %v324 = vrot.slane %v303, %v323
    %v325 = vlaneseq
    %v326 = vshrl.u32 %v325, 7
    %v327 = vsub.s32 5, %v326
    %v328 = vrot.slane %v303, %v327
    %v329 = vlaneseq
    %v330 = vshrl.u32 %v329, 7
    %v331 = vsub.s32 6, %v330
    %v332 = vrot.slane %v303, %v331
    %v333 = vlaneseq
    %v334 = vshrl.u32 %v333, 7
    %v335 = vsub.s32 7, %v334
    %v336 = vrot.slane %v303, %v335
    %v541 = vunpack.c.l.b16 %v107
    %v542 = vunpack.c.h.b16 %v107
    %v543 = vunpack.c.l.b16 %v108
    %v544 = vunpack.c.h.b16 %v108
    %v545 = vunpack.c.l.b16 %v109
    %v546 = vunpack.c.h.b16 %v109
    %v547 = vunpack.c.l.b16 %v110
    %v548 = vunpack.c.h.b16 %v110
    %v549 = vunpack.c.l.b16 %v111
    %v550 = vunpack.c.h.b16 %v111
    %v551 = vunpack.c.l.b16 %v112
    %v552 = vunpack.c.h.b16 %v112
    %v553 = vunpack.c.l.b16 %v113
    %v554 = vunpack.c.h.b16 %v113
    %v555 = vunpack.c.l.b16 %v114
    %v556 = vunpack.c.h.b16 %v114
    %v557 = vunpack.c.l.b16 %v115
    %v558 = vunpack.c.h.b16 %v115
    %v559 = vunpack.c.l.b16 %v116
    %v560 = vunpack.c.h.b16 %v116
    %v561 = vunpack.c.l.b16 %v117
    %v562 = vunpack.c.h.b16 %v117
    %v563 = vunpack.c.l.b16 %v118
    %v564 = vunpack.c.h.b16 %v118
    %v565 = vunpack.c.l.b16 %v119
    %v566 = vunpack.c.h.b16 %v119
    %v567 = vunpack.c.l.b16 %v120
    %v568 = vunpack.c.h.b16 %v120
    %v569 = vunpack.c.l.b16 %v121
    %v570 = vunpack.c.h.b16 %v121
    %v571 = vunpack.c.l.b16 %v122
    %v572 = vunpack.c.h.b16 %v122
    %v573 = vunpack.c.l.b16 %v123
    %v574 = vunpack.c.h.b16 %v123
    %v575 = vunpack.c.l.b16 %v124
    %v576 = vunpack.c.h.b16 %v124
    %v577 = vunpack.c.l.b16 %v125
    %v578 = vunpack.c.h.b16 %v125
    %v579 = vunpack.c.l.b16 %v126
    %v580 = vunpack.c.h.b16 %v126
    %v581 = vunpack.c.l.b16 %v127
    %v582 = vunpack.c.h.b16 %v127
    %v583 = vunpack.c.l.b16 %v128
    %v584 = vunpack.c.h.b16 %v128
    %v585 = vunpack.c.l.b16 %v129
    %v586 = vunpack.c.h.b16 %v129
    %v587 = vunpack.c.l.b16 %v130
    %v588 = vunpack.c.h.b16 %v130
    %v589 = vunpack.c.l.b16 %v131
    %v590 = vunpack.c.h.b16 %v131
    %v591 = vunpack.c.l.b16 %v132
    %v592 = vunpack.c.h.b16 %v132
    %v593 = vunpack.c.l.b16 %v133
    %v594 = vunpack.c.h.b16 %v133
    %v595 = vunpack.c.l.b16 %v134
    %v596 = vunpack.c.h.b16 %v134
    %v597 = vunpack.c.l.b16 %v135
    %v598 = vunpack.c.h.b16 %v135
    %v599 = vunpack.c.l.b16 %v136
    %v600 = vunpack.c.h.b16 %v136
    %v601 = vunpack.c.l.b16 %v137
    %v602 = vunpack.c.h.b16 %v137
    %v603 = vunpack.c.l.b16 %v138
    %v604 = vunpack.c.h.b16 %v138
    %v605 = vunpack.c.l.b16 %v139
    %v606 = vunpack.c.h.b16 %v139
    %v607 = vunpack.c.l.b16 %v140
    %v608 = vunpack.c.h.b16 %v140
    %v609 = vunpack.c.l.b16 %v141
    %v610 = vunpack.c.h.b16 %v141
    %v611 = vunpack.c.l.b16 %v142
    %v612 = vunpack.c.h.b16 %v142
    %v613 = vunpack.c.l.b16 %v143
    %v614 = vunpack.c.h.b16 %v143
    %v615 = vunpack.c.l.b16 %v144
    %v616 = vunpack.c.h.b16 %v144
    %v617 = vunpack.c.l.b16 %v145
    %v618 = vunpack.c.h.b16 %v145
    %v619 = vunpack.c.l.b16 %v146
    %v620 = vunpack.c.h.b16 %v146
    %v621 = vunpack.c.l.b16 %v147
    %v622 = vunpack.c.h.b16 %v147
    %v623 = vunpack.c.l.b16 %v148
    %v624 = vunpack.c.h.b16 %v148
    %v625 = vunpack.c.l.b16 %v149
    %v626 = vunpack.c.h.b16 %v149
    %v627 = vunpack.c.l.b16 %v150
    %v628 = vunpack.c.h.b16 %v150
    %v629 = vunpack.c.l.b16 %v151
    %v630 = vunpack.c.h.b16 %v151
    %v631 = vunpack.c.l.b16 %v152
    %v632 = vunpack.c.h.b16 %v152
    %v633 = vunpack.c.l.b16 %v153
    %v634 = vunpack.c.h.b16 %v153
    %v635 = vunpack.c.l.b16 %v154
    %v636 = vunpack.c.h.b16 %v154
    %v637 = vunpack.c.l.b16 %v155
    %v638 = vunpack.c.h.b16 %v155
    %v639 = vunpack.c.l.b16 %v156
    %v640 = vunpack.c.h.b16 %v156
    %v641 = vunpack.c.l.b16 %v157
    %v642 = vunpack.c.h.b16 %v157
    %v643 = vunpack.c.l.b16 %v158
    %v644 = vunpack.c.h.b16 %v158
    %v645 = vunpack.c.l.b16 %v159
    %v646 = vunpack.c.h.b16 %v159
    %v647 = vunpack.c.l.b16 %v160
    %v648 = vunpack.c.h.b16 %v160
    %v649 = vunpack.c.l.b16 %v161
    %v650 = vunpack.c.h.b16 %v161
    %v651 = vunpack.c.l.b16 %v162
    %v652 = vunpack.c.h.b16 %v162
    %v653 = vunpack.c.l.b16 %v163
    %v654 = vunpack.c.h.b16 %v163
    %v655 = vunpack.c.l.b16 %v164
    %v656 = vunpack.c.h.b16 %v164
    %v657 = vunpack.c.l.b16 %v165
    %v658 = vunpack.c.h.b16 %v165
    %v659 = vunpack.c.l.b16 %v166
    %v660 = vunpack.c.h.b16 %v166
    %v661 = vunpack.c.l.b16 %v167
    %v662 = vunpack.c.h.b16 %v167
    %v663 = vunpack.c.l.b16 %v168
    %v664 = vunpack.c.h.b16 %v168
    %v665 = vunpack.c.l.b16 %v169
    %v666 = vunpack.c.h.b16 %v169
    %v667 = vunpack.c.l.b16 %v170
    %v668 = vunpack.c.h.b16 %v170
    %v669 = vunpack.c.l.b16 %v171
    %v670 = vunpack.c.h.b16 %v171
    %v671 = vunpack.c.l.b16 %v172
    %v672 = vunpack.c.h.b16 %v172
    %v673 = vunpack.c.l.b16 %v173
    %v674 = vunpack.c.h.b16 %v173
    %v675 = vunpack.c.l.b16 %v174
    %v676 = vunpack.c.h.b16 %v174
    %v677 = vunpack.c.l.b16 %v175
    %v678 = vunpack.c.h.b16 %v175
    %v679 = vunpack.c.l.b16 %v176
    %v680 = vunpack.c.h.b16 %v176
    %v681 = vunpack.c.l.b16 %v177
    %v682 = vunpack.c.h.b16 %v177
    %v683 = vunpack.c.l.b16 %v178
    %v684 = vunpack.c.h.b16 %v178
    %v685 = vunpack.c.l.b16 %v179
    %v686 = vunpack.c.h.b16 %v179
    %v687 = vunpack.c.l.b16 %v180
    %v688 = vunpack.c.h.b16 %v180
    %v689 = vunpack.c.l.b16 %v181
    %v690 = vunpack.c.h.b16 %v181
    %v691 = vunpack.c.l.b16 %v182
    %v692 = vunpack.c.h.b16 %v182
    %v693 = vunpack.c.l.b16 %v183
    %v694 = vunpack.c.h.b16 %v183
    %v695 = vunpack.c.l.b16 %v184
    %v696 = vunpack.c.h.b16 %v184
    %v697 = vunpack.c.l.b16 %v185
    %v698 = vunpack.c.h.b16 %v185
    %v699 = vunpack.c.l.b16 %v186
    %v700 = vunpack.c.h.b16 %v186
    %v701 = vunpack.c.l.b16 %v187
    %v702 = vunpack.c.h.b16 %v187
    %v703 = vunpack.c.l.b16 %v188
    %v704 = vunpack.c.h.b16 %v188
    %v705 = vunpack.c.l.b16 %v189
    %v706 = vunpack.c.h.b16 %v189
    %v707 = vunpack.c.l.b16 %v190
    %v708 = vunpack.c.h.b16 %v190
    %v709 = vunpack.c.l.b16 %v191
    %v710 = vunpack.c.h.b16 %v191
    %v711 = vunpack.c.l.b16 %v192
    %v712 = vunpack.c.h.b16 %v192
    %v713 = vunpack.c.l.b16 %v193
    %v714 = vunpack.c.h.b16 %v193
    %v715 = vunpack.c.l.b16 %v194
    %v716 = vunpack.c.h.b16 %v194
    %v717 = vunpack.c.l.b16 %v195
    %v718 = vunpack.c.h.b16 %v195
    %v719 = vunpack.c.l.b16 %v196
    %v720 = vunpack.c.h.b16 %v196
    %v721 = vunpack.c.l.b16 %v197
    %v722 = vunpack.c.h.b16 %v197
    %v723 = vunpack.c.l.b16 %v198
    %v724 = vunpack.c.h.b16 %v198
    %v725 = vunpack.c.l.b16 %v199
    %v726 = vunpack.c.h.b16 %v199
    %v727 = vunpack.c.l.b16 %v200
    %v728 = vunpack.c.h.b16 %v200
    %v729 = vunpack.c.l.b16 %v201
    %v730 = vunpack.c.h.b16 %v201
    %v731 = vunpack.c.l.b16 %v202
    %v732 = vunpack.c.h.b16 %v202
    %v733 = vunpack.c.l.b16 %v203
    %v734 = vunpack.c.h.b16 %v203
    %v735 = vunpack.c.l.b16 %v204
    %v736 = vunpack.c.h.b16 %v204
    %v737 = vunpack.c.l.b16 %v205
    %v738 = vunpack.c.h.b16 %v205
    %v739 = vunpack.c.l.b16 %v206
    %v740 = vunpack.c.h.b16 %v206
    %v741 = vunpack.c.l.b16 %v207
    %v742 = vunpack.c.h.b16 %v207
    %v743 = vunpack.c.l.b16 %v208
    %v744 = vunpack.c.h.b16 %v208
    %v745 = vunpack.c.l.b16 %v209
    %v746 = vunpack.c.h.b16 %v209
    %v747 = vunpack.c.l.b16 %v210
    %v748 = vunpack.c.h.b16 %v210
    %v749 = vunpack.c.l.b16 %v211
    %v750 = vunpack.c.h.b16 %v211
    %v751 = vunpack.c.l.b16 %v212
    %v752 = vunpack.c.h.b16 %v212
    %v753 = vunpack.c.l.b16 %v213
    %v754 = vunpack.c.h.b16 %v213
    %v755 = vunpack.c.l.b16 %v214
    %v756 = vunpack.c.h.b16 %v214
    %v757 = vunpack.c.l.b16 %v215
    %v758 = vunpack.c.h.b16 %v215
    %v759 = vunpack.c.l.b16 %v216
    %v760 = vunpack.c.h.b16 %v216
    %v761 = vunpack.c.l.b16 %v217
    %v762 = vunpack.c.h.b16 %v217
    %v763 = vunpack.c.l.b16 %v218
    %v764 = vunpack.c.h.b16 %v218
    %v765 = vunpack.c.l.b16 %v219
    %v766 = vunpack.c.h.b16 %v219
    %v767 = vunpack.c.l.b16 %v220
    %v768 = vunpack.c.h.b16 %v220
    %v769 = vunpack.c.l.b16 %v221
    %v770 = vunpack.c.h.b16 %v221
    %v771 = vunpack.c.l.b16 %v222
    %v772 = vunpack.c.h.b16 %v222
    %v773 = vunpack.c.l.b16 %v223
    %v774 = vunpack.c.h.b16 %v223
    %v775 = vunpack.c.l.b16 %v224
    %v776 = vunpack.c.h.b16 %v224
    %v777 = vunpack.c.l.b16 %v225
    %v778 = vunpack.c.h.b16 %v225
    %v779 = vunpack.c.l.b16 %v226
    %v780 = vunpack.c.h.b16 %v226
    %v781 = vunpack.c.l.b16 %v227
    %v782 = vunpack.c.h.b16 %v227
    %v783 = vunpack.c.l.b16 %v228
    %v784 = vunpack.c.h.b16 %v228
    %v785 = vunpack.c.l.b16 %v229
    %v786 = vunpack.c.h.b16 %v229
    %v787 = vunpack.c.l.b16 %v230
    %v788 = vunpack.c.h.b16 %v230
    %v789 = vunpack.c.l.b16 %v231
    %v790 = vunpack.c.h.b16 %v231
    %v791 = vunpack.c.l.b16 %v232
    %v792 = vunpack.c.h.b16 %v232
    %v793 = vunpack.c.l.b16 %v233
    %v794 = vunpack.c.h.b16 %v233
    %v795 = vunpack.c.l.b16 %v234
    %v796 = vunpack.c.h.b16 %v234
    %v797 = vunpack.c.l.b16 %v235
    %v798 = vunpack.c.h.b16 %v235
    %v799 = vunpack.c.l.b16 %v236
    %v800 = vunpack.c.h.b16 %v236
    %v801 = vunpack.c.l.b16 %v237
    %v802 = vunpack.c.h.b16 %v237
    %v803 = vunpack.c.l.b16 %v238
    %v804 = vunpack.c.h.b16 %v238
    %v805 = vunpack.c.l.b16 %v239
    %v806 = vunpack.c.h.b16 %v239
    %v807 = vunpack.c.l.b16 %v240
    %v808 = vunpack.c.h.b16 %v240
    %v809 = vunpack.c.l.b16 %v241
    %v810 = vunpack.c.h.b16 %v241
    %v811 = vunpack.c.l.b16 %v242
    %v812 = vunpack.c.h.b16 %v242
    %v813 = vunpack.c.l.b16 %v243
    %v814 = vunpack.c.h.b16 %v243
    %v815 = vunpack.c.l.b16 %v244
    %v816 = vunpack.c.h.b16 %v244
    %v817 = vunpack.c.l.b16 %v245
    %v818 = vunpack.c.h.b16 %v245
    %v819 = vunpack.c.l.b16 %v246
    %v820 = vunpack.c.h.b16 %v246
    %v821 = vunpack.c.l.b16 %v247
    %v822 = vunpack.c.h.b16 %v247
    %v823 = vunpack.c.l.b16 %v248
    %v824 = vunpack.c.h.b16 %v248
    %v825 = vunpack.c.l.b16 %v249
    %v826 = vunpack.c.h.b16 %v249
    %v827 = vunpack.c.l.b16 %v250
    %v828 = vunpack.c.h.b16 %v250
    %v829 = vunpack.c.l.b16 %v251
    %v830 = vunpack.c.h.b16 %v251
    %v831 = vunpack.c.l.b16 %v252
    %v832 = vunpack.c.h.b16 %v252
    %v833 = vunpack.c.l.b16 %v253
    %v834 = vunpack.c.h.b16 %v253
    %v835 = vunpack.c.l.b16 %v254
    %v836 = vunpack.c.h.b16 %v254
    %v837 = vunpack.c.l.b16 %v255
    %v838 = vunpack.c.h.b16 %v255
    %v839 = vunpack.c.l.b16 %v256
    %v840 = vunpack.c.h.b16 %v256
    %v841 = vunpack.c.l.b16 %v257
    %v842 = vunpack.c.h.b16 %v257
    %v843 = vunpack.c.l.b16 %v258
    %v844 = vunpack.c.h.b16 %v258
    %v845 = vunpack.c.l.b16 %v259
    %v846 = vunpack.c.h.b16 %v259
    %v847 = vunpack.c.l.b16 %v260
    %v848 = vunpack.c.h.b16 %v260
    %v849 = vunpack.c.l.b16 %v261
    %v850 = vunpack.c.h.b16 %v261
    %v851 = vunpack.c.l.b16 %v262
    %v852 = vunpack.c.h.b16 %v262
    %v853 = vunpack.c.l.b16 %v263
    %v854 = vunpack.c.h.b16 %v263
    %v855 = vunpack.c.l.b16 %v264
    %v856 = vunpack.c.h.b16 %v264
    %v857 = vunpack.c.l.b16 %v265
    %v858 = vunpack.c.h.b16 %v265
    %v859 = vunpack.c.l.b16 %v266
    %v860 = vunpack.c.h.b16 %v266
    %v861 = vunpack.c.l.b16 %v267
    %v862 = vunpack.c.h.b16 %v267
    %v863 = vunpack.c.l.b16 %v268
    %v864 = vunpack.c.h.b16 %v268
    %v865 = vunpack.c.l.b16 %v269
    %v866 = vunpack.c.h.b16 %v269
    %v867 = vunpack.c.l.b16 %v270
    %v868 = vunpack.c.h.b16 %v270
    %v869 = vunpack.c.l.b16 %v271
    %v870 = vunpack.c.h.b16 %v271
    %v871 = vunpack.c.l.b16 %v272
    %v872 = vunpack.c.h.b16 %v272
    %v873 = vunpack.c.l.b16 %v273
    %v874 = vunpack.c.h.b16 %v273
    %v875 = vunpack.c.l.b16 %v274
    %v876 = vunpack.c.h.b16 %v274
    %v877 = vunpack.c.l.b16 %v275
    %v878 = vunpack.c.h.b16 %v275
    %v879 = vunpack.c.l.b16 %v276
    %v880 = vunpack.c.h.b16 %v276
    %v881 = vunpack.c.l.b16 %v277
    %v882 = vunpack.c.h.b16 %v277
    %v883 = vunpack.c.l.b16 %v278
    %v884 = vunpack.c.h.b16 %v278
    %v885 = vunpack.c.l.b16 %v279
    %v886 = vunpack.c.h.b16 %v279
    %v887 = vunpack.c.l.b16 %v280
    %v888 = vunpack.c.h.b16 %v280
    %v889 = vunpack.c.l.b16 %v281
    %v890 = vunpack.c.h.b16 %v281
    %v891 = vunpack.c.l.b16 %v282
    %v892 = vunpack.c.h.b16 %v282
    %v893 = vunpack.c.l.b16 %v283
    %v894 = vunpack.c.h.b16 %v283
    %v895 = vunpack.c.l.b16 %v284
    %v896 = vunpack.c.h.b16 %v284
    %v897 = vunpack.c.l.b16 %v285
    %v898 = vunpack.c.h.b16 %v285
    %v899 = vunpack.c.l.b16 %v286
    %v900 = vunpack.c.h.b16 %v286
    %v901 = vunpack.c.l.b16 %v287
    %v902 = vunpack.c.h.b16 %v287
    %v903 = vunpack.c.l.b16 %v288
    %v904 = vunpack.c.h.b16 %v288
    %v905 = vunpack.c.l.b16 %v289
    %v906 = vunpack.c.h.b16 %v289
    %v907 = vunpack.c.l.b16 %v290
    %v908 = vunpack.c.h.b16 %v290
    %v909 = vunpack.c.l.b16 %v291
    %v910 = vunpack.c.h.b16 %v291
    %v911 = vunpack.c.l.b16 %v292
    %v912 = vunpack.c.h.b16 %v292
    %v913 = vunpack.c.l.b16 %v293
    %v914 = vunpack.c.h.b16 %v293
    %v915 = vunpack.c.l.b16 %v294
    %v916 = vunpack.c.h.b16 %v294
    %v917 = vunpack.c.l.b16 %v295
    %v918 = vunpack.c.h.b16 %v295
    %v919 = vunpack.c.l.b16 %v296
    %v920 = vunpack.c.h.b16 %v296
    %v921 = vunpack.c.l.b16 %v297
    %v922 = vunpack.c.h.b16 %v297
    %v923 = vunpack.c.l.b16 %v298
    %v924 = vunpack.c.h.b16 %v298
    %v925 = vunpack.c.l.b16 %v299
    %v926 = vunpack.c.h.b16 %v299
    %v927 = vunpack.c.l.b16 %v300
    %v928 = vunpack.c.h.b16 %v300
    %v929 = vunpack.c.l.b16 %v301
    %v930 = vunpack.c.h.b16 %v301
    %v931 = vunpack.c.l.b16 %v302
    %v932 = vunpack.c.h.b16 %v302
    %v933 = vpack.c.b16 %v549, %v541
    %v934 = vpack.c.b16 %v550, %v542
    %v935 = vpack.c.b16 %v551, %v543
    %v936 = vpack.c.b16 %v552, %v544
    %v937 = vpack.c.b16 %v553, %v545
    %v938 = vpack.c.b16 %v554, %v546
    %v939 = vpack.c.b16 %v555, %v547
    %v940 = vpack.c.b16 %v556, %v548
    %v941 = vpack.c.b16 %v565, %v557
    %v942 = vpack.c.b16 %v566, %v558
    %v943 = vpack.c.b16 %v567, %v559
    %v944 = vpack.c.b16 %v568, %v560
    %v945 = vpack.c.b16 %v569, %v561
    %v946 = vpack.c.b16 %v570, %v562
    %v947 = vpack.c.b16 %v571, %v563
    %v948 = vpack.c.b16 %v572, %v564
    %v949 = vpack.c.b16 %v581, %v573
    %v950 = vpack.c.b16 %v582, %v574
    %v951 = vpack.c.b16 %v583, %v575
    %v952 = vpack.c.b16 %v584, %v576
    %v953 = vpack.c.b16 %v585, %v577
    %v954 = vpack.c.b16 %v586, %v578
    %v955 = vpack.c.b16 %v587, %v579
    %v956 = vpack.c.b16 %v588, %v580
    %v957 = vpack.c.b16 %v597, %v589
    %v958 = vpack.c.b16 %v598, %v590
    %v959 = vpack.c.b16 %v599, %v591
    %v960 = vpack.c.b16 %v600, %v592
    %v961 = vpack.c.b16 %v601, %v593
    %v962 = vpack.c.b16 %v602, %v594
    %v963 = vpack.c.b16 %v603, %v595
    %v964 = vpack.c.b16 %v604, %v596
    %v965 = vpack.c.b16 %v613, %v605
    %v966 = vpack.c.b16 %v614, %v606
    %v967 = vpack.c.b16 %v615, %v607
    %v968 = vpack.c.b16 %v616, %v608
    %v969 = vpack.c.b16 %v617, %v609
    %v970 = vpack.c.b16 %v618, %v610
    %v971 = vpack.c.b16 %v619, %v611
    %v972 = vpack.c.b16 %v620, %v612
    %v973 = vpack.c.b16 %v629, %v621
    %v974 = vpack.c.b16 %v630, %v622
    %v975 = vpack.c.b16 %v631, %v623
    %v976 = vpack.c.b16 %v632, %v624
    %v977 = vpack.c.b16 %v633, %v625
    %v978 = vpack.c.b16 %v634, %v626
    %v979 = vpack.c.b16 %v635, %v627
    %v980 = vpack.c.b16 %v636, %v628
    %v981 = vpack.c.b16 %v645, %v637
    %v982 = vpack.c.b16 %v646, %v638
    %v983 = vpack.c.b16 %v647, %v639
    %v984 = vpack.c.b16 %v648, %v640
    %v985 = vpack.c.b16 %v649, %v641
    %v986 = vpack.c.b16 %v650, %v642
    %v987 = vpack.c.b16 %v651, %v643
    %v988 = vpack.c.b16 %v652, %v644
    %v989 = vpack.c.b16 %v661, %v653
    %v990 = vpack.c.b16 %v662, %v654
    %v991 = vpack.c.b16 %v663, %v655
    %v992 = vpack.c.b16 %v664, %v656
    %v993 = vpack.c.b16 %v665, %v657
    %v994 = vpack.c.b16 %v666, %v658
    %v995 = vpack.c.b16 %v667, %v659
    %v996 = vpack.c.b16 %v668, %v660
    %v997 = vpack.c.b16 %v677, %v669
    %v998 = vpack.c.b16 %v678, %v670
    %v999 = vpack.c.b16 %v679, %v671
    %v1000 = vpack.c.b16 %v680, %v672
    %v1001 = vpack.c.b16 %v681, %v673
    %v1002 = vpack.c.b16 %v682, %v674
    %v1003 = vpack.c.b16 %v683, %v675
    %v1004 = vpack.c.b16 %v684, %v676
    %v1005 = vpack.c.b16 %v693, %v685
    %v1006 = vpack.c.b16 %v694, %v686
    %v1007 = vpack.c.b16 %v695, %v687
    %v1008 = vpack.c.b16 %v696, %v688
    %v1009 = vpack.c.b16 %v697, %v689
    %v1010 = vpack.c.b16 %v698, %v690
    %v1011 = vpack.c.b16 %v699, %v691
    %v1012 = vpack.c.b16 %v700, %v692
    %v1013 = vpack.c.b16 %v709, %v701
    %v1014 = vpack.c.b16 %v710, %v702
    %v1015 = vpack.c.b16 %v711, %v703
    %v1016 = vpack.c.b16 %v712, %v704
    %v1017 = vpack.c.b16 %v713, %v705
    %v1018 = vpack.c.b16 %v714, %v706
    %v1019 = vpack.c.b16 %v715, %v707
    %v1020 = vpack.c.b16 %v716, %v708
    %v1021 = vpack.c.b16 %v725, %v717
    %v1022 = vpack.c.b16 %v726, %v718
    %v1023 = vpack.c.b16 %v727, %v719
    %v1024 = vpack.c.b16 %v728, %v720
    %v1025 = vpack.c.b16 %v729, %v721
    %v1026 = vpack.c.b16 %v730, %v722
    %v1027 = vpack.c.b16 %v731, %v723
    %v1028 = vpack.c.b16 %v732, %v724
    %v1029 = vpack.c.b16 %v741, %v733
    %v1030 = vpack.c.b16 %v742, %v734
    %v1031 = vpack.c.b16 %v743, %v735
    %v1032 = vpack.c.b16 %v744, %v736
    %v1033 = vpack.c.b16 %v745, %v737
    %v1034 = vpack.c.b16 %v746, %v738
    %v1035 = vpack.c.b16 %v747, %v739
    %v1036 = vpack.c.b16 %v748, %v740
    %v1037 = vpack.c.b16 %v757, %v749
    %v1038 = vpack.c.b16 %v758, %v750
    %v1039 = vpack.c.b16 %v759, %v751
    %v1040 = vpack.c.b16 %v760, %v752
    %v1041 = vpack.c.b16 %v761, %v753
    %v1042 = vpack.c.b16 %v762, %v754
    %v1043 = vpack.c.b16 %v763, %v755
    %v1044 = vpack.c.b16 %v764, %v756
    %v1045 = vpack.c.b16 %v773, %v765
    %v1046 = vpack.c.b16 %v774, %v766
    %v1047 = vpack.c.b16 %v775, %v767
    %v1048 = vpack.c.b16 %v776, %v768
    %v1049 = vpack.c.b16 %v777, %v769
    %v1050 = vpack.c.b16 %v778, %v770
    %v1051 = vpack.c.b16 %v779, %v771
    %v1052 = vpack.c.b16 %v780, %v772
    %v1053 = vpack.c.b16 %v789, %v781
    %v1054 = vpack.c.b16 %v790, %v782
    %v1055 = vpack.c.b16 %v791, %v783
    %v1056 = vpack.c.b16 %v792, %v784
    %v1057 = vpack.c.b16 %v793, %v785
    %v1058 = vpack.c.b16 %v794, %v786
    %v1059 = vpack.c.b16 %v795, %v787
    %v1060 = vpack.c.b16 %v796, %v788
    %v1061 = vpack.c.b16 %v805, %v797
    %v1062 = vpack.c.b16 %v806, %v798
    %v1063 = vpack.c.b16 %v807, %v799
    %v1064 = vpack.c.b16 %v808, %v800
    %v1065 = vpack.c.b16 %v809, %v801
    %v1066 = vpack.c.b16 %v810, %v802
    %v1067 = vpack.c.b16 %v811, %v803
    %v1068 = vpack.c.b16 %v812, %v804
    %v1069 = vpack.c.b16 %v821, %v813
    %v1070 = vpack.c.b16 %v822, %v814
    %v1071 = vpack.c.b16 %v823, %v815
    %v1072 = vpack.c.b16 %v824, %v816
    %v1073 = vpack.c.b16 %v825, %v817
    %v1074 = vpack.c.b16 %v826, %v818
    %v1075 = vpack.c.b16 %v827, %v819
    %v1076 = vpack.c.b16 %v828, %v820
    %v1077 = vpack.c.b16 %v837, %v829
    %v1078 = vpack.c.b16 %v838, %v830
    %v1079 = vpack.c.b16 %v839, %v831
    %v1080 = vpack.c.b16 %v840, %v832
    %v1081 = vpack.c.b16 %v841, %v833
    %v1082 = vpack.c.b16 %v842, %v834
    %v1083 = vpack.c.b16 %v843, %v835
    %v1084 = vpack.c.b16 %v844, %v836
    %v1085 = vpack.c.b16 %v853, %v845
    %v1086 = vpack.c.b16 %v854, %v846
    %v1087 = vpack.c.b16 %v855, %v847
    %v1088 = vpack.c.b16 %v856, %v848
    %v1089 = vpack.c.b16 %v857, %v849
    %v1090 = vpack.c.b16 %v858, %v850
    %v1091 = vpack.c.b16 %v859, %v851
    %v1092 = vpack.c.b16 %v860, %v852
    %v1093 = vpack.c.b16 %v869, %v861
    %v1094 = vpack.c.b16 %v870, %v862
    %v1095 = vpack.c.b16 %v871, %v863
    %v1096 = vpack.c.b16 %v872, %v864
    %v1097 = vpack.c.b16 %v873, %v865
    %v1098 = vpack.c.b16 %v874, %v866
    %v1099 = vpack.c.b16 %v875, %v867
    %v1100 = vpack.c.b16 %v876, %v868
    %v1101 = vpack.c.b16 %v885, %v877
    %v1102 = vpack.c.b16 %v886, %v878
    %v1103 = vpack.c.b16 %v887, %v879
    %v1104 = vpack.c.b16 %v888, %v880
    %v1105 = vpack.c.b16 %v889, %v881
    %v1106 = vpack.c.b16 %v890, %v882
    %v1107 = vpack.c.b16 %v891, %v883
    %v1108 = vpack.c.b16 %v892, %v884
    %v1109 = vpack.c.b16 %v901, %v893
    %v1110 = vpack.c.b16 %v902, %v894
    %v1111 = vpack.c.b16 %v903, %v895
    %v1112 = vpack.c.b16 %v904, %v896
    %v1113 = vpack.c.b16 %v905, %v897
    %v1114 = vpack.c.b16 %v906, %v898
    %v1115 = vpack.c.b16 %v907, %v899
    %v1116 = vpack.c.b16 %v908, %v900
    %v1117 = vpack.c.b16 %v917, %v909
    %v1118 = vpack.c.b16 %v918, %v910
    %v1119 = vpack.c.b16 %v919, %v911
    %v1120 = vpack.c.b16 %v920, %v912
    %v1121 = vpack.c.b16 %v921, %v913
    %v1122 = vpack.c.b16 %v922, %v914
    %v1123 = vpack.c.b16 %v923, %v915
    %v1124 = vpack.c.b16 %v924, %v916
    %v1125 = vpack.c.b16 %v925, %v925
    %v1126 = vpack.c.b16 %v926, %v926
    %v1127 = vpack.c.b16 %v927, %v927
    %v1128 = vpack.c.b16 %v928, %v928
    %v1129 = vpack.c.b16 %v929, %v929
    %v1130 = vpack.c.b16 %v930, %v930
    %v1131 = vpack.c.b16 %v931, %v931
    %v1132 = vpack.c.b16 %v932, %v932
    %vm1325 = vcmask 64512
    %v1327 = vsel %vm1325, %v106, 0
    %vm1329 = vcmask 1043456
    %v1331 = vsel %vm1329, %v1125, 0
    %v1334 = vsel %vm1329, %v1126, 0
    %v1337 = vsel %vm1329, %v1127, 0
    %v1340 = vsel %vm1329, %v1128, 0
    %v1343 = vsel %vm1329, %v1129, 0
    %v1346 = vsel %vm1329, %v1130, 0
    %v1349 = vsel %vm1329, %v1131, 0
    %v1352 = vsel %vm1329, %v1132, 0
    %1354 = vmatprep.subr.bf16.mxu0 %v990
    %1355 = vmatpush1.bf16.msra.mxu0 %v989
    %1356 = vmatprep.subr.bf16.mxu0 %v982
    %1357 = vmatpush1.bf16.msra.mxu0 %v981
    %1358 = vmatprep.subr.bf16.mxu0 %v974
    %1359 = vmatpush1.bf16.msra.mxu0 %v973
    %1360 = vmatprep.subr.bf16.mxu0 %v966
    %1361 = vmatpush1.bf16.msra.mxu0 %v965
    %1362 = vmatprep.subr.bf16.mxu0 %v958
    %1363 = vmatpush1.bf16.msra.mxu0 %v957
    %1364 = vmatprep.subr.bf16.mxu0 %v950
    %1365 = vmatpush1.bf16.msra.mxu0 %v949
    %1366 = vmatprep.subr.bf16.mxu0 %v942
    %1367 = vmatpush1.bf16.msra.mxu0 %v941
    %1368 = vmatprep.subr.bf16.mxu0 %v934
    %1369 = vmatpush1.bf16.msra.mxu0 %v933
    %1370 = vmatprep.subr.bf16.mxu0 %v1054
    %1371 = vmatpush2.bf16.msra.mxu0 %v1053
    %1372 = vmatprep.subr.bf16.mxu0 %v1046
    %1373 = vmatpush2.bf16.msra.mxu0 %v1045
    %1374 = vmatprep.subr.bf16.mxu0 %v1038
    %1375 = vmatpush2.bf16.msra.mxu0 %v1037
    %1376 = vmatprep.subr.bf16.mxu0 %v1030
    %1377 = vmatpush2.bf16.msra.mxu0 %v1029
    %1378 = vmatprep.subr.bf16.mxu0 %v1022
    %1379 = vmatpush2.bf16.msra.mxu0 %v1021
    %1380 = vmatprep.subr.bf16.mxu0 %v1014
    %1381 = vmatpush2.bf16.msra.mxu0 %v1013
    %1382 = vmatprep.subr.bf16.mxu0 %v1006
    %1383 = vmatpush2.bf16.msra.mxu0 %v1005
    %1384 = vmatprep.subr.bf16.mxu0 %v998
    %1385 = vmatpush2.bf16.msra.mxu0 %v997
    %1386 = vmatprep.mubr.bf16.mxu0 %v104
    %1387 = vmatmul.mubr.bf16.gmra.mxu0 %v103
    %v1388 = vpop.f32.mrf.mxu0
    %v1389 = vadd.f32 %v308, %v1388
    %v1390 = vpop.f32.mrf.mxu0
    %v1391 = vadd.f32 %v312, %v1390
    %v1392 = vpop.f32.mrf.mxu0
    %v1393 = vpop.f32.mrf.mxu0
    %1394 = vdwg.mxu0
    %1395 = vmatprep.subr.bf16.mxu0 %v1118
    %1396 = vmatpush1.bf16.msra.mxu0 %v1117
    %1397 = vmatprep.subr.bf16.mxu0 %v1110
    %1398 = vmatpush1.bf16.msra.mxu0 %v1109
    %1399 = vmatprep.subr.bf16.mxu0 %v1102
    %1400 = vmatpush1.bf16.msra.mxu0 %v1101
    %1401 = vmatprep.subr.bf16.mxu0 %v1094
    %1402 = vmatpush1.bf16.msra.mxu0 %v1093
    %1403 = vmatprep.subr.bf16.mxu0 %v1086
    %1404 = vmatpush1.bf16.msra.mxu0 %v1085
    %1405 = vmatprep.subr.bf16.mxu0 %v1078
    %1406 = vmatpush1.bf16.msra.mxu0 %v1077
    %1407 = vmatprep.subr.bf16.mxu0 %v1070
    %1408 = vmatpush1.bf16.msra.mxu0 %v1069
    %1409 = vmatprep.subr.bf16.mxu0 %v1062
    %1410 = vmatpush1.bf16.msra.mxu0 %v1061
    %1411 = vmatprep.subr.bf16.mxu0 0
    %1412 = vmatpush2.bf16.msra.mxu0 0
    %1413 = vmatprep.subr.bf16.mxu0 0
    %1414 = vmatpush2.bf16.msra.mxu0 0
    %1415 = vmatprep.subr.bf16.mxu0 0
    %1416 = vmatpush2.bf16.msra.mxu0 0
    %1417 = vmatprep.subr.bf16.mxu0 0
    %1418 = vmatpush2.bf16.msra.mxu0 0
    %1419 = vmatprep.subr.bf16.mxu0 0
    %1420 = vmatpush2.bf16.msra.mxu0 0
    %1421 = vmatprep.subr.bf16.mxu0 0
    %1422 = vmatpush2.bf16.msra.mxu0 0
    %1423 = vmatprep.subr.bf16.mxu0 0
    %1424 = vmatpush2.bf16.msra.mxu0 0
    %1425 = vmatprep.subr.bf16.mxu0 %v1334
    %1426 = vmatpush2.bf16.msra.mxu0 %v1331
    %1427 = vmatprep.mubr.bf16.mxu0 %v1327
    %1428 = vmatmul.mubr.bf16.gmra.mxu0 %v105
    %v1429 = vpop.f32.mrf.mxu0
    %v1430 = vadd.f32 %v1389, %v1429
    %v1431 = vpop.f32.mrf.mxu0
    %v1432 = vadd.f32 %v1391, %v1431
    %v1433 = vpop.f32.mrf.mxu0
    %v1434 = vpop.f32.mrf.mxu0
    %1435 = vdwg.mxu0
    %1436 = vmatprep.subr.bf16.mxu0 %v992
    %1437 = vmatpush1.bf16.msra.mxu0 %v991
    %1438 = vmatprep.subr.bf16.mxu0 %v984
    %1439 = vmatpush1.bf16.msra.mxu0 %v983
    %1440 = vmatprep.subr.bf16.mxu0 %v976
    %1441 = vmatpush1.bf16.msra.mxu0 %v975
    %1442 = vmatprep.subr.bf16.mxu0 %v968
    %1443 = vmatpush1.bf16.msra.mxu0 %v967
    %1444 = vmatprep.subr.bf16.mxu0 %v960
    %1445 = vmatpush1.bf16.msra.mxu0 %v959
    %1446 = vmatprep.subr.bf16.mxu0 %v952
    %1447 = vmatpush1.bf16.msra.mxu0 %v951
    %1448 = vmatprep.subr.bf16.mxu0 %v944
    %1449 = vmatpush1.bf16.msra.mxu0 %v943
    %1450 = vmatprep.subr.bf16.mxu0 %v936
    %1451 = vmatpush1.bf16.msra.mxu0 %v935
    %1452 = vmatprep.subr.bf16.mxu0 %v1056
    %1453 = vmatpush2.bf16.msra.mxu0 %v1055
    %1454 = vmatprep.subr.bf16.mxu0 %v1048
    %1455 = vmatpush2.bf16.msra.mxu0 %v1047
    %1456 = vmatprep.subr.bf16.mxu0 %v1040
    %1457 = vmatpush2.bf16.msra.mxu0 %v1039
    %1458 = vmatprep.subr.bf16.mxu0 %v1032
    %1459 = vmatpush2.bf16.msra.mxu0 %v1031
    %1460 = vmatprep.subr.bf16.mxu0 %v1024
    %1461 = vmatpush2.bf16.msra.mxu0 %v1023
    %1462 = vmatprep.subr.bf16.mxu0 %v1016
    %1463 = vmatpush2.bf16.msra.mxu0 %v1015
    %1464 = vmatprep.subr.bf16.mxu0 %v1008
    %1465 = vmatpush2.bf16.msra.mxu0 %v1007
    %1466 = vmatprep.subr.bf16.mxu0 %v1000
    %1467 = vmatpush2.bf16.msra.mxu0 %v999
    %1468 = vmatprep.mubr.bf16.mxu0 %v104
    %1469 = vmatmul.mubr.bf16.gmra.mxu0 %v103
    %v1470 = vpop.f32.mrf.mxu0
    %v1471 = vadd.f32 %v316, %v1470
    %v1472 = vpop.f32.mrf.mxu0
    %v1473 = vadd.f32 %v320, %v1472
    %v1474 = vpop.f32.mrf.mxu0
    %v1475 = vpop.f32.mrf.mxu0
    %1476 = vdwg.mxu0
    %1477 = vmatprep.subr.bf16.mxu0 %v1120
    %1478 = vmatpush1.bf16.msra.mxu0 %v1119
    %1479 = vmatprep.subr.bf16.mxu0 %v1112
    %1480 = vmatpush1.bf16.msra.mxu0 %v1111
    %1481 = vmatprep.subr.bf16.mxu0 %v1104
    %1482 = vmatpush1.bf16.msra.mxu0 %v1103
    %1483 = vmatprep.subr.bf16.mxu0 %v1096
    %1484 = vmatpush1.bf16.msra.mxu0 %v1095
    %1485 = vmatprep.subr.bf16.mxu0 %v1088
    %1486 = vmatpush1.bf16.msra.mxu0 %v1087
    %1487 = vmatprep.subr.bf16.mxu0 %v1080
    %1488 = vmatpush1.bf16.msra.mxu0 %v1079
    %1489 = vmatprep.subr.bf16.mxu0 %v1072
    %1490 = vmatpush1.bf16.msra.mxu0 %v1071
    %1491 = vmatprep.subr.bf16.mxu0 %v1064
    %1492 = vmatpush1.bf16.msra.mxu0 %v1063
    %1493 = vmatprep.subr.bf16.mxu0 0
    %1494 = vmatpush2.bf16.msra.mxu0 0
    %1495 = vmatprep.subr.bf16.mxu0 0
    %1496 = vmatpush2.bf16.msra.mxu0 0
    %1497 = vmatprep.subr.bf16.mxu0 0
    %1498 = vmatpush2.bf16.msra.mxu0 0
    %1499 = vmatprep.subr.bf16.mxu0 0
    %1500 = vmatpush2.bf16.msra.mxu0 0
    %1501 = vmatprep.subr.bf16.mxu0 0
    %1502 = vmatpush2.bf16.msra.mxu0 0
    %1503 = vmatprep.subr.bf16.mxu0 0
    %1504 = vmatpush2.bf16.msra.mxu0 0
    %1505 = vmatprep.subr.bf16.mxu0 0
    %1506 = vmatpush2.bf16.msra.mxu0 0
    %1507 = vmatprep.subr.bf16.mxu0 %v1340
    %1508 = vmatpush2.bf16.msra.mxu0 %v1337
    %1509 = vmatprep.mubr.bf16.mxu0 %v1327
    %1510 = vmatmul.mubr.bf16.gmra.mxu0 %v105
    %v1511 = vpop.f32.mrf.mxu0
    %v1512 = vadd.f32 %v1471, %v1511
    %v1513 = vpop.f32.mrf.mxu0
    %v1514 = vadd.f32 %v1473, %v1513
    %v1515 = vpop.f32.mrf.mxu0
    %v1516 = vpop.f32.mrf.mxu0
    %1517 = vdwg.mxu0
    %1518 = vmatprep.subr.bf16.mxu0 %v994
    %1519 = vmatpush1.bf16.msra.mxu0 %v993
    %1520 = vmatprep.subr.bf16.mxu0 %v986
    %1521 = vmatpush1.bf16.msra.mxu0 %v985
    %1522 = vmatprep.subr.bf16.mxu0 %v978
    %1523 = vmatpush1.bf16.msra.mxu0 %v977
    %1524 = vmatprep.subr.bf16.mxu0 %v970
    %1525 = vmatpush1.bf16.msra.mxu0 %v969
    %1526 = vmatprep.subr.bf16.mxu0 %v962
    %1527 = vmatpush1.bf16.msra.mxu0 %v961
    %1528 = vmatprep.subr.bf16.mxu0 %v954
    %1529 = vmatpush1.bf16.msra.mxu0 %v953
    %1530 = vmatprep.subr.bf16.mxu0 %v946
    %1531 = vmatpush1.bf16.msra.mxu0 %v945
    %1532 = vmatprep.subr.bf16.mxu0 %v938
    %1533 = vmatpush1.bf16.msra.mxu0 %v937
    %1534 = vmatprep.subr.bf16.mxu0 %v1058
    %1535 = vmatpush2.bf16.msra.mxu0 %v1057
    %1536 = vmatprep.subr.bf16.mxu0 %v1050
    %1537 = vmatpush2.bf16.msra.mxu0 %v1049
    %1538 = vmatprep.subr.bf16.mxu0 %v1042
    %1539 = vmatpush2.bf16.msra.mxu0 %v1041
    %1540 = vmatprep.subr.bf16.mxu0 %v1034
    %1541 = vmatpush2.bf16.msra.mxu0 %v1033
    %1542 = vmatprep.subr.bf16.mxu0 %v1026
    %1543 = vmatpush2.bf16.msra.mxu0 %v1025
    %1544 = vmatprep.subr.bf16.mxu0 %v1018
    %1545 = vmatpush2.bf16.msra.mxu0 %v1017
    %1546 = vmatprep.subr.bf16.mxu0 %v1010
    %1547 = vmatpush2.bf16.msra.mxu0 %v1009
    %1548 = vmatprep.subr.bf16.mxu0 %v1002
    %1549 = vmatpush2.bf16.msra.mxu0 %v1001
    %1550 = vmatprep.mubr.bf16.mxu0 %v104
    %1551 = vmatmul.mubr.bf16.gmra.mxu0 %v103
    %v1552 = vpop.f32.mrf.mxu0
    %v1553 = vadd.f32 %v324, %v1552
    %v1554 = vpop.f32.mrf.mxu0
    %v1555 = vadd.f32 %v328, %v1554
    %v1556 = vpop.f32.mrf.mxu0
    %v1557 = vpop.f32.mrf.mxu0
    %1558 = vdwg.mxu0
    %1559 = vmatprep.subr.bf16.mxu0 %v1122
    %1560 = vmatpush1.bf16.msra.mxu0 %v1121
    %1561 = vmatprep.subr.bf16.mxu0 %v1114
    %1562 = vmatpush1.bf16.msra.mxu0 %v1113
    %1563 = vmatprep.subr.bf16.mxu0 %v1106
    %1564 = vmatpush1.bf16.msra.mxu0 %v1105
    %1565 = vmatprep.subr.bf16.mxu0 %v1098
    %1566 = vmatpush1.bf16.msra.mxu0 %v1097
    %1567 = vmatprep.subr.bf16.mxu0 %v1090
    %1568 = vmatpush1.bf16.msra.mxu0 %v1089
    %1569 = vmatprep.subr.bf16.mxu0 %v1082
    %1570 = vmatpush1.bf16.msra.mxu0 %v1081
    %1571 = vmatprep.subr.bf16.mxu0 %v1074
    %1572 = vmatpush1.bf16.msra.mxu0 %v1073
    %1573 = vmatprep.subr.bf16.mxu0 %v1066
    %1574 = vmatpush1.bf16.msra.mxu0 %v1065
    %1575 = vmatprep.subr.bf16.mxu0 0
    %1576 = vmatpush2.bf16.msra.mxu0 0
    %1577 = vmatprep.subr.bf16.mxu0 0
    %1578 = vmatpush2.bf16.msra.mxu0 0
    %1579 = vmatprep.subr.bf16.mxu0 0
    %1580 = vmatpush2.bf16.msra.mxu0 0
    %1581 = vmatprep.subr.bf16.mxu0 0
    %1582 = vmatpush2.bf16.msra.mxu0 0
    %1583 = vmatprep.subr.bf16.mxu0 0
    %1584 = vmatpush2.bf16.msra.mxu0 0
    %1585 = vmatprep.subr.bf16.mxu0 0
    %1586 = vmatpush2.bf16.msra.mxu0 0
    %1587 = vmatprep.subr.bf16.mxu0 0
    %1588 = vmatpush2.bf16.msra.mxu0 0
    %1589 = vmatprep.subr.bf16.mxu0 %v1346
    %1590 = vmatpush2.bf16.msra.mxu0 %v1343
    %1591 = vmatprep.mubr.bf16.mxu0 %v1327
    %1592 = vmatmul.mubr.bf16.gmra.mxu0 %v105
    %v1593 = vpop.f32.mrf.mxu0
    %v1594 = vadd.f32 %v1553, %v1593
    %v1595 = vpop.f32.mrf.mxu0
    %v1596 = vadd.f32 %v1555, %v1595
    %v1597 = vpop.f32.mrf.mxu0
    %v1598 = vpop.f32.mrf.mxu0
    %1599 = vdwg.mxu0
    %1600 = vmatprep.subr.bf16.mxu0 %v996
    %1601 = vmatpush1.bf16.msra.mxu0 %v995
    %1602 = vmatprep.subr.bf16.mxu0 %v988
    %1603 = vmatpush1.bf16.msra.mxu0 %v987
    %1604 = vmatprep.subr.bf16.mxu0 %v980
    %1605 = vmatpush1.bf16.msra.mxu0 %v979
    %1606 = vmatprep.subr.bf16.mxu0 %v972
    %1607 = vmatpush1.bf16.msra.mxu0 %v971
    %1608 = vmatprep.subr.bf16.mxu0 %v964
    %1609 = vmatpush1.bf16.msra.mxu0 %v963
    %1610 = vmatprep.subr.bf16.mxu0 %v956
    %1611 = vmatpush1.bf16.msra.mxu0 %v955
    %1612 = vmatprep.subr.bf16.mxu0 %v948
    %1613 = vmatpush1.bf16.msra.mxu0 %v947
    %1614 = vmatprep.subr.bf16.mxu0 %v940
    %1615 = vmatpush1.bf16.msra.mxu0 %v939
    %1616 = vmatprep.subr.bf16.mxu0 %v1060
    %1617 = vmatpush2.bf16.msra.mxu0 %v1059
    %1618 = vmatprep.subr.bf16.mxu0 %v1052
    %1619 = vmatpush2.bf16.msra.mxu0 %v1051
    %1620 = vmatprep.subr.bf16.mxu0 %v1044
    %1621 = vmatpush2.bf16.msra.mxu0 %v1043
    %1622 = vmatprep.subr.bf16.mxu0 %v1036
    %1623 = vmatpush2.bf16.msra.mxu0 %v1035
    %1624 = vmatprep.subr.bf16.mxu0 %v1028
    %1625 = vmatpush2.bf16.msra.mxu0 %v1027
    %1626 = vmatprep.subr.bf16.mxu0 %v1020
    %1627 = vmatpush2.bf16.msra.mxu0 %v1019
    %1628 = vmatprep.subr.bf16.mxu0 %v1012
    %1629 = vmatpush2.bf16.msra.mxu0 %v1011
    %1630 = vmatprep.subr.bf16.mxu0 %v1004
    %1631 = vmatpush2.bf16.msra.mxu0 %v1003
    %1632 = vmatprep.mubr.bf16.mxu0 %v104
    %1633 = vmatmul.mubr.bf16.gmra.mxu0 %v103
    %v1634 = vpop.f32.mrf.mxu0
    %v1635 = vadd.f32 %v332, %v1634
    %v1636 = vpop.f32.mrf.mxu0
    %v1637 = vadd.f32 %v336, %v1636
    %v1638 = vpop.f32.mrf.mxu0
    %v1639 = vpop.f32.mrf.mxu0
    %1640 = vdwg.mxu0
    %1641 = vmatprep.subr.bf16.mxu0 %v1124
    %1642 = vmatpush1.bf16.msra.mxu0 %v1123
    %1643 = vmatprep.subr.bf16.mxu0 %v1116
    %1644 = vmatpush1.bf16.msra.mxu0 %v1115
    %1645 = vmatprep.subr.bf16.mxu0 %v1108
    %1646 = vmatpush1.bf16.msra.mxu0 %v1107
    %1647 = vmatprep.subr.bf16.mxu0 %v1100
    %1648 = vmatpush1.bf16.msra.mxu0 %v1099
    %1649 = vmatprep.subr.bf16.mxu0 %v1092
    %1650 = vmatpush1.bf16.msra.mxu0 %v1091
    %1651 = vmatprep.subr.bf16.mxu0 %v1084
    %1652 = vmatpush1.bf16.msra.mxu0 %v1083
    %1653 = vmatprep.subr.bf16.mxu0 %v1076
    %1654 = vmatpush1.bf16.msra.mxu0 %v1075
    %1655 = vmatprep.subr.bf16.mxu0 %v1068
    %1656 = vmatpush1.bf16.msra.mxu0 %v1067
    %1657 = vmatprep.subr.bf16.mxu0 0
    %1658 = vmatpush2.bf16.msra.mxu0 0
    %1659 = vmatprep.subr.bf16.mxu0 0
    %1660 = vmatpush2.bf16.msra.mxu0 0
    %1661 = vmatprep.subr.bf16.mxu0 0
    %1662 = vmatpush2.bf16.msra.mxu0 0
    %1663 = vmatprep.subr.bf16.mxu0 0
    %1664 = vmatpush2.bf16.msra.mxu0 0
    %1665 = vmatprep.subr.bf16.mxu0 0
    %1666 = vmatpush2.bf16.msra.mxu0 0
    %1667 = vmatprep.subr.bf16.mxu0 0
    %1668 = vmatpush2.bf16.msra.mxu0 0
    %1669 = vmatprep.subr.bf16.mxu0 0
    %1670 = vmatpush2.bf16.msra.mxu0 0
    %1671 = vmatprep.subr.bf16.mxu0 %v1352
    %1672 = vmatpush2.bf16.msra.mxu0 %v1349
    %1673 = vmatprep.mubr.bf16.mxu0 %v1327
    %1674 = vmatmul.mubr.bf16.gmra.mxu0 %v105
    %v1675 = vpop.f32.mrf.mxu0
    %v1676 = vadd.f32 %v1635, %v1675
    %v1677 = vpop.f32.mrf.mxu0
    %v1678 = vadd.f32 %v1637, %v1677
    %v1679 = vpop.f32.mrf.mxu0
    %v1680 = vpop.f32.mrf.mxu0
    %1681 = vdwg.mxu0
    %vm1682 = vcmp.gt.f32.partialorder %v1430, 0.0
    %vm1683 = vcmp.gt.f32.partialorder %v1432, 0.0
    %vm1684 = vcmp.gt.f32.partialorder %v1512, 0.0
    %vm1685 = vcmp.gt.f32.partialorder %v1514, 0.0
    %vm1686 = vcmp.gt.f32.partialorder %v1594, 0.0
    %vm1687 = vcmp.gt.f32.partialorder %v1596, 0.0
    %vm1688 = vcmp.gt.f32.partialorder %v1676, 0.0
    %vm1689 = vcmp.gt.f32.partialorder %v1678, 0.0
    %v1690 = vmul.f32 %v1430, 0.2
    %v1691 = vmul.f32 %v1432, 0.2
    %v1692 = vmul.f32 %v1512, 0.2
    %v1693 = vmul.f32 %v1514, 0.2
    %v1694 = vmul.f32 %v1594, 0.2
    %v1695 = vmul.f32 %v1596, 0.2
    %v1696 = vmul.f32 %v1676, 0.2
    %v1697 = vmul.f32 %v1678, 0.2
    %v1698 = vsel %vm1682, %v1430, %v1690
    %v1699 = vsel %vm1683, %v1432, %v1691
    %v1700 = vsel %vm1684, %v1512, %v1692
    %v1701 = vsel %vm1685, %v1514, %v1693
    %v1702 = vsel %vm1686, %v1594, %v1694
    %v1703 = vsel %vm1687, %v1596, %v1695
    %v1704 = vsel %vm1688, %v1676, %v1696
    %v1705 = vsel %vm1689, %v1678, %v1697
    %v1706 = vpack.c.bf16 %v1698, %v1698
    %v1707 = vpack.c.bf16 %v1699, %v1699
    %v1708 = vpack.c.bf16 %v1700, %v1700
    %v1709 = vpack.c.bf16 %v1701, %v1701
    %v1710 = vpack.c.bf16 %v1702, %v1702
    %v1711 = vpack.c.bf16 %v1703, %v1703
    %v1712 = vpack.c.bf16 %v1704, %v1704
    %v1713 = vpack.c.bf16 %v1705, %v1705
    %v1714 = vld [vmem:[#allocation8] sm:$0xff]
    %v1715 = vld [vmem:[#allocation8 + $0x8] sm:$0xff]
    %v1716 = vld [vmem:[#allocation8 + $0x10] sm:$0xff]
    %v1717 = vld [vmem:[#allocation8 + $0x18] sm:$0xff]
    %v1718 = vld [vmem:[#allocation8 + $0x20] sm:$0xff]
    %v1719 = vld [vmem:[#allocation8 + $0x28] sm:$0xff]
    %v1720 = vld [vmem:[#allocation8 + $0x30] sm:$0xff]
    %v1721 = vld [vmem:[#allocation8 + $0x38] sm:$0xff]
    %v1722 = vld [vmem:[#allocation8 + $0x40] sm:$0xff]
    %v1723 = vld [vmem:[#allocation8 + $0x48] sm:$0xff]
    %v1724 = vld [vmem:[#allocation8 + $0x50] sm:$0xff]
    %v1725 = vld [vmem:[#allocation8 + $0x58] sm:$0xff]
    %v1726 = vld [vmem:[#allocation8 + $0x60] sm:$0xff]
    %v1727 = vld [vmem:[#allocation8 + $0x68] sm:$0xff]
    %v1728 = vld [vmem:[#allocation8 + $0x70] sm:$0xff]
    %v1729 = vld [vmem:[#allocation8 + $0x78] sm:$0xff]
    %v1730 = vld [vmem:[#allocation8 + $0x80] sm:$0xff]
    %v1731 = vld [vmem:[#allocation8 + $0x88] sm:$0xff]
    %v1732 = vld [vmem:[#allocation8 + $0x90] sm:$0xff]
    %v1733 = vld [vmem:[#allocation8 + $0x98] sm:$0xff]
    %v1734 = vld [vmem:[#allocation8 + $0xa0] sm:$0xff]
    %v1735 = vld [vmem:[#allocation8 + $0xa8] sm:$0xff]
    %v1736 = vld [vmem:[#allocation8 + $0xb0] sm:$0xff]
    %v1737 = vld [vmem:[#allocation8 + $0xb8] sm:$0xff]
    %v1738 = vld [vmem:[#allocation8 + $0xc0] sm:$0xff]
    %v1739 = vld [vmem:[#allocation8 + $0xc8] sm:$0xff]
    %v1740 = vld [vmem:[#allocation8 + $0xd0] sm:$0xff]
    %v1741 = vld [vmem:[#allocation8 + $0xd8] sm:$0xff]
    %v1742 = vld [vmem:[#allocation8 + $0xe0] sm:$0xff]
    %v1743 = vld [vmem:[#allocation8 + $0xe8] sm:$0xff]
    %v1744 = vld [vmem:[#allocation8 + $0xf0] sm:$0xff]
    %v1745 = vld [vmem:[#allocation8 + $0xf8] sm:$0xff]
    %v1746 = vld [vmem:[#allocation8 + $0x100] sm:$0xff]
    %v1747 = vld [vmem:[#allocation8 + $0x108] sm:$0xff]
    %v1748 = vld [vmem:[#allocation8 + $0x110] sm:$0xff]
    %v1749 = vld [vmem:[#allocation8 + $0x118] sm:$0xff]
    %v1750 = vld [vmem:[#allocation8 + $0x120] sm:$0xff]
    %v1751 = vld [vmem:[#allocation8 + $0x128] sm:$0xff]
    %v1752 = vld [vmem:[#allocation8 + $0x130] sm:$0xff]
    %v1753 = vld [vmem:[#allocation8 + $0x138] sm:$0xff]
    %v1754 = vld [vmem:[#allocation8 + $0x140] sm:$0xff]
    %v1755 = vld [vmem:[#allocation8 + $0x148] sm:$0xff]
    %v1756 = vld [vmem:[#allocation8 + $0x150] sm:$0xff]
    %v1757 = vld [vmem:[#allocation8 + $0x158] sm:$0xff]
    %v1758 = vld [vmem:[#allocation8 + $0x160] sm:$0xff]
    %v1759 = vld [vmem:[#allocation8 + $0x168] sm:$0xff]
    %v1760 = vld [vmem:[#allocation8 + $0x170] sm:$0xff]
    %v1761 = vld [vmem:[#allocation8 + $0x178] sm:$0xff]
    %v1762 = vld [vmem:[#allocation8 + $0x180] sm:$0xff]
    %v1763 = vld [vmem:[#allocation8 + $0x188] sm:$0xff]
    %v1764 = vld [vmem:[#allocation8 + $0x190] sm:$0xff]
    %v1765 = vld [vmem:[#allocation8 + $0x198] sm:$0xff]
    %v1766 = vld [vmem:[#allocation8 + $0x1a0] sm:$0xff]
    %v1767 = vld [vmem:[#allocation8 + $0x1a8] sm:$0xff]
    %v1768 = vld [vmem:[#allocation8 + $0x1b0] sm:$0xff]
    %v1769 = vld [vmem:[#allocation8 + $0x1b8] sm:$0xff]
    %v1770 = vld [vmem:[#allocation8 + $0x1c0] sm:$0xff]
    %v1771 = vld [vmem:[#allocation8 + $0x1c8] sm:$0xff]
    %v1772 = vld [vmem:[#allocation8 + $0x1d0] sm:$0xff]
    %v1773 = vld [vmem:[#allocation8 + $0x1d8] sm:$0xff]
    %v1774 = vld [vmem:[#allocation8 + $0x1e0] sm:$0xff]
    %v1775 = vld [vmem:[#allocation8 + $0x1e8] sm:$0xff]
    %v1776 = vld [vmem:[#allocation8 + $0x1f0] sm:$0xff]
    %v1777 = vld [vmem:[#allocation8 + $0x1f8] sm:$0xff]
    %v1778 = vld [vmem:[#allocation8 + $0x200] sm:$0xff]
    %v1779 = vld [vmem:[#allocation8 + $0x208] sm:$0xff]
    %v1780 = vld [vmem:[#allocation8 + $0x210] sm:$0xff]
    %v1781 = vld [vmem:[#allocation8 + $0x218] sm:$0xff]
    %v1782 = vld [vmem:[#allocation8 + $0x220] sm:$0xff]
    %v1783 = vld [vmem:[#allocation8 + $0x228] sm:$0xff]
    %v1784 = vld [vmem:[#allocation8 + $0x230] sm:$0xff]
    %v1785 = vld [vmem:[#allocation8 + $0x238] sm:$0xff]
    %v1786 = vld [vmem:[#allocation8 + $0x240] sm:$0xff]
    %v1787 = vld [vmem:[#allocation8 + $0x248] sm:$0xff]
    %v1788 = vld [vmem:[#allocation8 + $0x250] sm:$0xff]
    %v1789 = vld [vmem:[#allocation8 + $0x258] sm:$0xff]
    %v1790 = vld [vmem:[#allocation8 + $0x260] sm:$0xff]
    %v1791 = vld [vmem:[#allocation8 + $0x268] sm:$0xff]
    %v1792 = vld [vmem:[#allocation8 + $0x270] sm:$0xff]
    %v1793 = vld [vmem:[#allocation8 + $0x278] sm:$0xff]
    %v1794 = vld [vmem:[#allocation8 + $0x280] sm:$0xff]
    %v1795 = vld [vmem:[#allocation8 + $0x288] sm:$0xff]
    %v1796 = vld [vmem:[#allocation8 + $0x290] sm:$0xff]
    %v1797 = vld [vmem:[#allocation8 + $0x298] sm:$0xff]
    %v1798 = vld [vmem:[#allocation8 + $0x2a0] sm:$0xff]
    %v1799 = vld [vmem:[#allocation8 + $0x2a8] sm:$0xff]
    %v1800 = vld [vmem:[#allocation8 + $0x2b0] sm:$0xff]
    %v1801 = vld [vmem:[#allocation8 + $0x2b8] sm:$0xff]
    %v1802 = vld [vmem:[#allocation8 + $0x2c0] sm:$0xff]
    %v1803 = vld [vmem:[#allocation8 + $0x2c8] sm:$0xff]
    %v1804 = vld [vmem:[#allocation8 + $0x2d0] sm:$0xff]
    %v1805 = vld [vmem:[#allocation8 + $0x2d8] sm:$0xff]
    %v1806 = vld [vmem:[#allocation8 + $0x2e0] sm:$0xff]
    %v1807 = vld [vmem:[#allocation8 + $0x2e8] sm:$0xff]
    %v1808 = vld [vmem:[#allocation8 + $0x2f0] sm:$0xff]
    %v1809 = vld [vmem:[#allocation8 + $0x2f8] sm:$0xff]
    %v1810 = vld [vmem:[#allocation8 + $0x300] sm:$0xff]
    %v1811 = vld [vmem:[#allocation8 + $0x308] sm:$0xff]
    %v1812 = vld [vmem:[#allocation8 + $0x310] sm:$0xff]
    %v1813 = vld [vmem:[#allocation8 + $0x318] sm:$0xff]
    %v1814 = vld [vmem:[#allocation8 + $0x320] sm:$0xff]
    %v1815 = vld [vmem:[#allocation8 + $0x328] sm:$0xff]
    %v1816 = vld [vmem:[#allocation8 + $0x330] sm:$0xff]
    %v1817 = vld [vmem:[#allocation8 + $0x338] sm:$0xff]
    %v1818 = vld [vmem:[#allocation8 + $0x340] sm:$0xff]
    %v1819 = vld [vmem:[#allocation8 + $0x348] sm:$0xff]
    %v1820 = vld [vmem:[#allocation8 + $0x350] sm:$0xff]
    %v1821 = vld [vmem:[#allocation8 + $0x358] sm:$0xff]
    %v1822 = vld [vmem:[#allocation8 + $0x360] sm:$0xff]
    %v1823 = vld [vmem:[#allocation8 + $0x368] sm:$0xff]
    %v1824 = vld [vmem:[#allocation8 + $0x370] sm:$0xff]
    %v1825 = vld [vmem:[#allocation8 + $0x378] sm:$0xff]
    %v1826 = vld [vmem:[#allocation8 + $0x380] sm:$0xff]
    %v1827 = vld [vmem:[#allocation8 + $0x388] sm:$0xff]
    %v1828 = vld [vmem:[#allocation8 + $0x390] sm:$0xff]
    %v1829 = vld [vmem:[#allocation8 + $0x398] sm:$0xff]
    %v1830 = vld [vmem:[#allocation8 + $0x3a0] sm:$0xff]
    %v1831 = vld [vmem:[#allocation8 + $0x3a8] sm:$0xff]
    %v1832 = vld [vmem:[#allocation8 + $0x3b0] sm:$0xff]
    %v1833 = vld [vmem:[#allocation8 + $0x3b8] sm:$0xff]
    %v1834 = vld [vmem:[#allocation8 + $0x3c0] sm:$0xff]
    %v1835 = vld [vmem:[#allocation8 + $0x3c8] sm:$0xff]
    %v1836 = vld [vmem:[#allocation8 + $0x3d0] sm:$0xff]
    %v1837 = vld [vmem:[#allocation8 + $0x3d8] sm:$0xff]
    %v1838 = vld [vmem:[#allocation8 + $0x3e0] sm:$0xff]
    %v1839 = vld [vmem:[#allocation8 + $0x3e8] sm:$0xff]
    %v1840 = vld [vmem:[#allocation8 + $0x3f0] sm:$0xff]
    %v1841 = vld [vmem:[#allocation8 + $0x3f8] sm:$0xff]
    %v1842 = vld [vmem:[#allocation8 + $0x400] sm:$0xff]
    %v1843 = vld [vmem:[#allocation8 + $0x408] sm:$0xff]
    %v1844 = vld [vmem:[#allocation8 + $0x410] sm:$0xff]
    %v1845 = vld [vmem:[#allocation8 + $0x418] sm:$0xff]
    %v1846 = vld [vmem:[#allocation8 + $0x420] sm:$0xff]
    %v1847 = vld [vmem:[#allocation8 + $0x428] sm:$0xff]
    %v1848 = vld [vmem:[#allocation8 + $0x430] sm:$0xff]
    %v1849 = vld [vmem:[#allocation8 + $0x438] sm:$0xff]
    %v1850 = vld [vmem:[#allocation8 + $0x440] sm:$0xff]
    %v1851 = vld [vmem:[#allocation8 + $0x448] sm:$0xff]
    %v1852 = vld [vmem:[#allocation8 + $0x450] sm:$0xff]
    %v1853 = vld [vmem:[#allocation8 + $0x458] sm:$0xff]
    %v1854 = vld [vmem:[#allocation8 + $0x460] sm:$0xff]
    %v1855 = vld [vmem:[#allocation8 + $0x468] sm:$0xff]
    %v1856 = vld [vmem:[#allocation8 + $0x470] sm:$0xff]
    %v1857 = vld [vmem:[#allocation8 + $0x478] sm:$0xff]
    %v1858 = vld [vmem:[#allocation8 + $0x480] sm:$0xff]
    %v1859 = vld [vmem:[#allocation8 + $0x488] sm:$0xff]
    %v1860 = vld [vmem:[#allocation8 + $0x490] sm:$0xff]
    %v1861 = vld [vmem:[#allocation8 + $0x498] sm:$0xff]
    %v1862 = vld [vmem:[#allocation8 + $0x4a0] sm:$0xff]
    %v1863 = vld [vmem:[#allocation8 + $0x4a8] sm:$0xff]
    %v1864 = vld [vmem:[#allocation8 + $0x4b0] sm:$0xff]
    %v1865 = vld [vmem:[#allocation8 + $0x4b8] sm:$0xff]
    %v1866 = vld [vmem:[#allocation8 + $0x4c0] sm:$0xff]
    %v1867 = vld [vmem:[#allocation8 + $0x4c8] sm:$0xff]
    %v1868 = vld [vmem:[#allocation8 + $0x4d0] sm:$0xff]
    %v1869 = vld [vmem:[#allocation8 + $0x4d8] sm:$0xff]
    %v1870 = vld [vmem:[#allocation8 + $0x4e0] sm:$0xff]
    %v1871 = vld [vmem:[#allocation8 + $0x4e8] sm:$0xff]
    %v1872 = vld [vmem:[#allocation8 + $0x4f0] sm:$0xff]
    %v1873 = vld [vmem:[#allocation8 + $0x4f8] sm:$0xff]
    %v1874 = vld [vmem:[#allocation8 + $0x500] sm:$0xff]
    %v1875 = vld [vmem:[#allocation8 + $0x508] sm:$0xff]
    %v1876 = vld [vmem:[#allocation8 + $0x510] sm:$0xff]
    %v1877 = vld [vmem:[#allocation8 + $0x518] sm:$0xff]
    %v1878 = vld [vmem:[#allocation8 + $0x520] sm:$0xff]
    %v1879 = vld [vmem:[#allocation8 + $0x528] sm:$0xff]
    %v1880 = vld [vmem:[#allocation8 + $0x530] sm:$0xff]
    %v1881 = vld [vmem:[#allocation8 + $0x538] sm:$0xff]
    %v1882 = vld [vmem:[#allocation8 + $0x540] sm:$0xff]
    %v1883 = vld [vmem:[#allocation8 + $0x548] sm:$0xff]
    %v1884 = vld [vmem:[#allocation8 + $0x550] sm:$0xff]
    %v1885 = vld [vmem:[#allocation8 + $0x558] sm:$0xff]
    %v1886 = vld [vmem:[#allocation8 + $0x560] sm:$0xff]
    %v1887 = vld [vmem:[#allocation8 + $0x568] sm:$0xff]
    %v1888 = vld [vmem:[#allocation8 + $0x570] sm:$0xff]
    %v1889 = vld [vmem:[#allocation8 + $0x578] sm:$0xff]
    %v1890 = vld [vmem:[#allocation8 + $0x580] sm:$0xff]
    %v1891 = vld [vmem:[#allocation8 + $0x588] sm:$0xff]
    %v1892 = vld [vmem:[#allocation8 + $0x590] sm:$0xff]
    %v1893 = vld [vmem:[#allocation8 + $0x598] sm:$0xff]
    %v1894 = vld [vmem:[#allocation8 + $0x5a0] sm:$0xff]
    %v1895 = vld [vmem:[#allocation8 + $0x5a8] sm:$0xff]
    %v1896 = vld [vmem:[#allocation8 + $0x5b0] sm:$0xff]
    %v1897 = vld [vmem:[#allocation8 + $0x5b8] sm:$0xff]
    %v1898 = vld [vmem:[#allocation8 + $0x5c0] sm:$0xff]
    %v1899 = vld [vmem:[#allocation8 + $0x5c8] sm:$0xff]
    %v1900 = vld [vmem:[#allocation8 + $0x5d0] sm:$0xff]
    %v1901 = vld [vmem:[#allocation8 + $0x5d8] sm:$0xff]
    %v1902 = vld [vmem:[#allocation8 + $0x5e0] sm:$0xff]
    %v1903 = vld [vmem:[#allocation8 + $0x5e8] sm:$0xff]
    %v1904 = vld [vmem:[#allocation8 + $0x5f0] sm:$0xff]
    %v1905 = vld [vmem:[#allocation8 + $0x5f8] sm:$0xff]
    %v1906 = vld [vmem:[#allocation8 + $0x600] sm:$0xff]
    %v1907 = vld [vmem:[#allocation8 + $0x608] sm:$0xff]
    %v1908 = vld [vmem:[#allocation8 + $0x610] sm:$0xff]
    %v1909 = vld [vmem:[#allocation8 + $0x618] sm:$0xff]
    %v1910 = vld [vmem:[#allocation8 + $0x620] sm:$0xff]
    %v1911 = vld [vmem:[#allocation8 + $0x628] sm:$0xff]
    %v1912 = vld [vmem:[#allocation8 + $0x630] sm:$0xff]
    %v1913 = vld [vmem:[#allocation8 + $0x638] sm:$0xff]
    %v1914 = vld [vmem:[#allocation8 + $0x640] sm:$0xff]
    %v1915 = vld [vmem:[#allocation8 + $0x648] sm:$0xff]
    %v1916 = vld [vmem:[#allocation8 + $0x650] sm:$0xff]
    %v1917 = vld [vmem:[#allocation8 + $0x658] sm:$0xff]
    %v1918 = vld [vmem:[#allocation8 + $0x660] sm:$0xff]
    %v1919 = vld [vmem:[#allocation8 + $0x668] sm:$0xff]
    %v1920 = vld [vmem:[#allocation8 + $0x670] sm:$0xff]
    %v1921 = vld [vmem:[#allocation8 + $0x678] sm:$0xff]
    %v1922 = vld [vmem:[#allocation8 + $0x680] sm:$0xff]
    %v1923 = vld [vmem:[#allocation8 + $0x688] sm:$0xff]
    %v1924 = vld [vmem:[#allocation8 + $0x690] sm:$0xff]
    %v1925 = vld [vmem:[#allocation8 + $0x698] sm:$0xff]
    %v1926 = vld [vmem:[#allocation8 + $0x6a0] sm:$0xff]
    %v1927 = vld [vmem:[#allocation8 + $0x6a8] sm:$0xff]
    %v1928 = vld [vmem:[#allocation8 + $0x6b0] sm:$0xff]
    %v1929 = vld [vmem:[#allocation8 + $0x6b8] sm:$0xff]
    %v1930 = vld [vmem:[#allocation8 + $0x6c0] sm:$0xff]
    %v1931 = vld [vmem:[#allocation8 + $0x6c8] sm:$0xff]
    %v1932 = vld [vmem:[#allocation8 + $0x6d0] sm:$0xff]
    %v1933 = vld [vmem:[#allocation8 + $0x6d8] sm:$0xff]
    %v1934 = vld [vmem:[#allocation8 + $0x6e0] sm:$0xff]
    %v1935 = vld [vmem:[#allocation8 + $0x6e8] sm:$0xff]
    %v1936 = vld [vmem:[#allocation8 + $0x6f0] sm:$0xff]
    %v1937 = vld [vmem:[#allocation8 + $0x6f8] sm:$0xff]
    %v1938 = vld [vmem:[#allocation8 + $0x700] sm:$0xff]
    %v1939 = vld [vmem:[#allocation8 + $0x708] sm:$0xff]
    %v1940 = vld [vmem:[#allocation8 + $0x710] sm:$0xff]
    %v1941 = vld [vmem:[#allocation8 + $0x718] sm:$0xff]
    %v1942 = vld [vmem:[#allocation8 + $0x720] sm:$0xff]
    %v1943 = vld [vmem:[#allocation8 + $0x728] sm:$0xff]
    %v1944 = vld [vmem:[#allocation8 + $0x730] sm:$0xff]
    %v1945 = vld [vmem:[#allocation8 + $0x738] sm:$0xff]
    %v1946 = vld [vmem:[#allocation8 + $0x740] sm:$0xff]
    %v1947 = vld [vmem:[#allocation8 + $0x748] sm:$0xff]
    %v1948 = vld [vmem:[#allocation8 + $0x750] sm:$0xff]
    %v1949 = vld [vmem:[#allocation8 + $0x758] sm:$0xff]
    %v1950 = vld [vmem:[#allocation8 + $0x760] sm:$0xff]
    %v1951 = vld [vmem:[#allocation8 + $0x768] sm:$0xff]
    %v1952 = vld [vmem:[#allocation8 + $0x770] sm:$0xff]
    %v1953 = vld [vmem:[#allocation8 + $0x778] sm:$0xff]
    %v1954 = vld [vmem:[#allocation8 + $0x780] sm:$0xff]
    %v1955 = vld [vmem:[#allocation8 + $0x788] sm:$0xff]
    %v1956 = vld [vmem:[#allocation8 + $0x790] sm:$0xff]
    %v1957 = vld [vmem:[#allocation8 + $0x798] sm:$0xff]
    %v1958 = vld [vmem:[#allocation8 + $0x7a0] sm:$0xff]
    %v1959 = vld [vmem:[#allocation8 + $0x7a8] sm:$0xff]
    %v1960 = vld [vmem:[#allocation8 + $0x7b0] sm:$0xff]
    %v1961 = vld [vmem:[#allocation8 + $0x7b8] sm:$0xff]
    %v1962 = vld [vmem:[#allocation8 + $0x7c0] sm:$0xff]
    %v1963 = vld [vmem:[#allocation8 + $0x7c8] sm:$0xff]
    %v1964 = vld [vmem:[#allocation8 + $0x7d0] sm:$0xff]
    %v1965 = vld [vmem:[#allocation8 + $0x7d8] sm:$0xff]
    %v1966 = vld [vmem:[#allocation8 + $0x7e0] sm:$0xff]
    %v1967 = vld [vmem:[#allocation8 + $0x7e8] sm:$0xff]
    %v1968 = vld [vmem:[#allocation8 + $0x7f0] sm:$0xff]
    %v1969 = vld [vmem:[#allocation8 + $0x7f8] sm:$0xff]
    %v1970 = vld [vmem:[%s4] sm:$0xf]
    %v1972 = vlaneseq
    %v1973 = vshrl.u32 %v1972, 7
    %v1974 = vsub.s32 0, %v1973
    %v1975 = vrot.slane %v1970, %v1974
    %v1976 = vlaneseq
    %v1977 = vshrl.u32 %v1976, 7
    %v1978 = vsub.s32 1, %v1977
    %v1979 = vrot.slane %v1970, %v1978
    %v1980 = vlaneseq
    %v1981 = vshrl.u32 %v1980, 7
    %v1982 = vsub.s32 2, %v1981
    %v1983 = vrot.slane %v1970, %v1982
    %v1984 = vlaneseq
    %v1985 = vshrl.u32 %v1984, 7
    %v1986 = vsub.s32 3, %v1985
    %v1987 = vrot.slane %v1970, %v1986
    %v2248 = vunpack.c.l.b16 %v1714
    %v2249 = vunpack.c.h.b16 %v1714
    %v2250 = vunpack.c.l.b16 %v1715
    %v2251 = vunpack.c.h.b16 %v1715
    %v2252 = vunpack.c.l.b16 %v1716
    %v2253 = vunpack.c.h.b16 %v1716
    %v2254 = vunpack.c.l.b16 %v1717
    %v2255 = vunpack.c.h.b16 %v1717
    %v2256 = vunpack.c.l.b16 %v1718
    %v2257 = vunpack.c.h.b16 %v1718
    %v2258 = vunpack.c.l.b16 %v1719
    %v2259 = vunpack.c.h.b16 %v1719
    %v2260 = vunpack.c.l.b16 %v1720
    %v2261 = vunpack.c.h.b16 %v1720
    %v2262 = vunpack.c.l.b16 %v1721
    %v2263 = vunpack.c.h.b16 %v1721
    %v2264 = vunpack.c.l.b16 %v1722
    %v2265 = vunpack.c.h.b16 %v1722
    %v2266 = vunpack.c.l.b16 %v1723
    %v2267 = vunpack.c.h.b16 %v1723
    %v2268 = vunpack.c.l.b16 %v1724
    %v2269 = vunpack.c.h.b16 %v1724
    %v2270 = vunpack.c.l.b16 %v1725
    %v2271 = vunpack.c.h.b16 %v1725
    %v2272 = vunpack.c.l.b16 %v1726
    %v2273 = vunpack.c.h.b16 %v1726
    %v2274 = vunpack.c.l.b16 %v1727
    %v2275 = vunpack.c.h.b16 %v1727
    %v2276 = vunpack.c.l.b16 %v1728
    %v2277 = vunpack.c.h.b16 %v1728
    %v2278 = vunpack.c.l.b16 %v1729
    %v2279 = vunpack.c.h.b16 %v1729
    %v2280 = vunpack.c.l.b16 %v1730
    %v2281 = vunpack.c.h.b16 %v1730
    %v2282 = vunpack.c.l.b16 %v1731
    %v2283 = vunpack.c.h.b16 %v1731
    %v2284 = vunpack.c.l.b16 %v1732
    %v2285 = vunpack.c.h.b16 %v1732
    %v2286 = vunpack.c.l.b16 %v1733
    %v2287 = vunpack.c.h.b16 %v1733
    %v2288 = vunpack.c.l.b16 %v1734
    %v2289 = vunpack.c.h.b16 %v1734
    %v2290 = vunpack.c.l.b16 %v1735
    %v2291 = vunpack.c.h.b16 %v1735
    %v2292 = vunpack.c.l.b16 %v1736
    %v2293 = vunpack.c.h.b16 %v1736
    %v2294 = vunpack.c.l.b16 %v1737
    %v2295 = vunpack.c.h.b16 %v1737
    %v2296 = vunpack.c.l.b16 %v1738
    %v2297 = vunpack.c.h.b16 %v1738
    %v2298 = vunpack.c.l.b16 %v1739
    %v2299 = vunpack.c.h.b16 %v1739
    %v2300 = vunpack.c.l.b16 %v1740
    %v2301 = vunpack.c.h.b16 %v1740
    %v2302 = vunpack.c.l.b16 %v1741
    %v2303 = vunpack.c.h.b16 %v1741
    %v2304 = vunpack.c.l.b16 %v1742
    %v2305 = vunpack.c.h.b16 %v1742
    %v2306 = vunpack.c.l.b16 %v1743
    %v2307 = vunpack.c.h.b16 %v1743
    %v2308 = vunpack.c.l.b16 %v1744
    %v2309 = vunpack.c.h.b16 %v1744
    %v2310 = vunpack.c.l.b16 %v1745
    %v2311 = vunpack.c.h.b16 %v1745
    %v2312 = vunpack.c.l.b16 %v1746
    %v2313 = vunpack.c.h.b16 %v1746
    %v2314 = vunpack.c.l.b16 %v1747
    %v2315 = vunpack.c.h.b16 %v1747
    %v2316 = vunpack.c.l.b16 %v1748
    %v2317 = vunpack.c.h.b16 %v1748
    %v2318 = vunpack.c.l.b16 %v1749
    %v2319 = vunpack.c.h.b16 %v1749
    %v2320 = vunpack.c.l.b16 %v1750
    %v2321 = vunpack.c.h.b16 %v1750
    %v2322 = vunpack.c.l.b16 %v1751
    %v2323 = vunpack.c.h.b16 %v1751
    %v2324 = vunpack.c.l.b16 %v1752
    %v2325 = vunpack.c.h.b16 %v1752
    %v2326 = vunpack.c.l.b16 %v1753
    %v2327 = vunpack.c.h.b16 %v1753
    %v2328 = vunpack.c.l.b16 %v1754
    %v2329 = vunpack.c.h.b16 %v1754
    %v2330 = vunpack.c.l.b16 %v1755
    %v2331 = vunpack.c.h.b16 %v1755
    %v2332 = vunpack.c.l.b16 %v1756
    %v2333 = vunpack.c.h.b16 %v1756
    %v2334 = vunpack.c.l.b16 %v1757
    %v2335 = vunpack.c.h.b16 %v1757
    %v2336 = vunpack.c.l.b16 %v1758
    %v2337 = vunpack.c.h.b16 %v1758
    %v2338 = vunpack.c.l.b16 %v1759
    %v2339 = vunpack.c.h.b16 %v1759
    %v2340 = vunpack.c.l.b16 %v1760
    %v2341 = vunpack.c.h.b16 %v1760
    %v2342 = vunpack.c.l.b16 %v1761
    %v2343 = vunpack.c.h.b16 %v1761
    %v2344 = vunpack.c.l.b16 %v1762
    %v2345 = vunpack.c.h.b16 %v1762
    %v2346 = vunpack.c.l.b16 %v1763
    %v2347 = vunpack.c.h.b16 %v1763
    %v2348 = vunpack.c.l.b16 %v1764
    %v2349 = vunpack.c.h.b16 %v1764
    %v2350 = vunpack.c.l.b16 %v1765
    %v2351 = vunpack.c.h.b16 %v1765
    %v2352 = vunpack.c.l.b16 %v1766
    %v2353 = vunpack.c.h.b16 %v1766
    %v2354 = vunpack.c.l.b16 %v1767
    %v2355 = vunpack.c.h.b16 %v1767
    %v2356 = vunpack.c.l.b16 %v1768
    %v2357 = vunpack.c.h.b16 %v1768
    %v2358 = vunpack.c.l.b16 %v1769
    %v2359 = vunpack.c.h.b16 %v1769
    %v2360 = vunpack.c.l.b16 %v1770
    %v2361 = vunpack.c.h.b16 %v1770
    %v2362 = vunpack.c.l.b16 %v1771
    %v2363 = vunpack.c.h.b16 %v1771
    %v2364 = vunpack.c.l.b16 %v1772
    %v2365 = vunpack.c.h.b16 %v1772
    %v2366 = vunpack.c.l.b16 %v1773
    %v2367 = vunpack.c.h.b16 %v1773
    %v2368 = vunpack.c.l.b16 %v1774
    %v2369 = vunpack.c.h.b16 %v1774
    %v2370 = vunpack.c.l.b16 %v1775
    %v2371 = vunpack.c.h.b16 %v1775
    %v2372 = vunpack.c.l.b16 %v1776
    %v2373 = vunpack.c.h.b16 %v1776
    %v2374 = vunpack.c.l.b16 %v1777
    %v2375 = vunpack.c.h.b16 %v1777
    %v2376 = vunpack.c.l.b16 %v1778
    %v2377 = vunpack.c.h.b16 %v1778
    %v2378 = vunpack.c.l.b16 %v1779
    %v2379 = vunpack.c.h.b16 %v1779
    %v2380 = vunpack.c.l.b16 %v1780
    %v2381 = vunpack.c.h.b16 %v1780
    %v2382 = vunpack.c.l.b16 %v1781
    %v2383 = vunpack.c.h.b16 %v1781
    %v2384 = vunpack.c.l.b16 %v1782
    %v2385 = vunpack.c.h.b16 %v1782
    %v2386 = vunpack.c.l.b16 %v1783
    %v2387 = vunpack.c.h.b16 %v1783
    %v2388 = vunpack.c.l.b16 %v1784
    %v2389 = vunpack.c.h.b16 %v1784
    %v2390 = vunpack.c.l.b16 %v1785
    %v2391 = vunpack.c.h.b16 %v1785
    %v2392 = vunpack.c.l.b16 %v1786
    %v2393 = vunpack.c.h.b16 %v1786
    %v2394 = vunpack.c.l.b16 %v1787
    %v2395 = vunpack.c.h.b16 %v1787
    %v2396 = vunpack.c.l.b16 %v1788
    %v2397 = vunpack.c.h.b16 %v1788
    %v2398 = vunpack.c.l.b16 %v1789
    %v2399 = vunpack.c.h.b16 %v1789
    %v2400 = vunpack.c.l.b16 %v1790
    %v2401 = vunpack.c.h.b16 %v1790
    %v2402 = vunpack.c.l.b16 %v1791
    %v2403 = vunpack.c.h.b16 %v1791
    %v2404 = vunpack.c.l.b16 %v1792
    %v2405 = vunpack.c.h.b16 %v1792
    %v2406 = vunpack.c.l.b16 %v1793
    %v2407 = vunpack.c.h.b16 %v1793
    %v2408 = vunpack.c.l.b16 %v1794
    %v2409 = vunpack.c.h.b16 %v1794
    %v2410 = vunpack.c.l.b16 %v1795
    %v2411 = vunpack.c.h.b16 %v1795
    %v2412 = vunpack.c.l.b16 %v1796
    %v2413 = vunpack.c.h.b16 %v1796
    %v2414 = vunpack.c.l.b16 %v1797
    %v2415 = vunpack.c.h.b16 %v1797
    %v2416 = vunpack.c.l.b16 %v1798
    %v2417 = vunpack.c.h.b16 %v1798
    %v2418 = vunpack.c.l.b16 %v1799
    %v2419 = vunpack.c.h.b16 %v1799
    %v2420 = vunpack.c.l.b16 %v1800
    %v2421 = vunpack.c.h.b16 %v1800
    %v2422 = vunpack.c.l.b16 %v1801
    %v2423 = vunpack.c.h.b16 %v1801
    %v2424 = vunpack.c.l.b16 %v1802
    %v2425 = vunpack.c.h.b16 %v1802
    %v2426 = vunpack.c.l.b16 %v1803
    %v2427 = vunpack.c.h.b16 %v1803
    %v2428 = vunpack.c.l.b16 %v1804
    %v2429 = vunpack.c.h.b16 %v1804
    %v2430 = vunpack.c.l.b16 %v1805
    %v2431 = vunpack.c.h.b16 %v1805
    %v2432 = vunpack.c.l.b16 %v1806
    %v2433 = vunpack.c.h.b16 %v1806
    %v2434 = vunpack.c.l.b16 %v1807
    %v2435 = vunpack.c.h.b16 %v1807
    %v2436 = vunpack.c.l.b16 %v1808
    %v2437 = vunpack.c.h.b16 %v1808
    %v2438 = vunpack.c.l.b16 %v1809
    %v2439 = vunpack.c.h.b16 %v1809
    %v2440 = vunpack.c.l.b16 %v1810
    %v2441 = vunpack.c.h.b16 %v1810
    %v2442 = vunpack.c.l.b16 %v1811
    %v2443 = vunpack.c.h.b16 %v1811
    %v2444 = vunpack.c.l.b16 %v1812
    %v2445 = vunpack.c.h.b16 %v1812
    %v2446 = vunpack.c.l.b16 %v1813
    %v2447 = vunpack.c.h.b16 %v1813
    %v2448 = vunpack.c.l.b16 %v1814
    %v2449 = vunpack.c.h.b16 %v1814
    %v2450 = vunpack.c.l.b16 %v1815
    %v2451 = vunpack.c.h.b16 %v1815
    %v2452 = vunpack.c.l.b16 %v1816
    %v2453 = vunpack.c.h.b16 %v1816
    %v2454 = vunpack.c.l.b16 %v1817
    %v2455 = vunpack.c.h.b16 %v1817
    %v2456 = vunpack.c.l.b16 %v1818
    %v2457 = vunpack.c.h.b16 %v1818
    %v2458 = vunpack.c.l.b16 %v1819
    %v2459 = vunpack.c.h.b16 %v1819
    %v2460 = vunpack.c.l.b16 %v1820
    %v2461 = vunpack.c.h.b16 %v1820
    %v2462 = vunpack.c.l.b16 %v1821
    %v2463 = vunpack.c.h.b16 %v1821
    %v2464 = vunpack.c.l.b16 %v1822
    %v2465 = vunpack.c.h.b16 %v1822
    %v2466 = vunpack.c.l.b16 %v1823
    %v2467 = vunpack.c.h.b16 %v1823
    %v2468 = vunpack.c.l.b16 %v1824
    %v2469 = vunpack.c.h.b16 %v1824
    %v2470 = vunpack.c.l.b16 %v1825
    %v2471 = vunpack.c.h.b16 %v1825
    %v2472 = vunpack.c.l.b16 %v1826
    %v2473 = vunpack.c.h.b16 %v1826
    %v2474 = vunpack.c.l.b16 %v1827
    %v2475 = vunpack.c.h.b16 %v1827
    %v2476 = vunpack.c.l.b16 %v1828
    %v2477 = vunpack.c.h.b16 %v1828
    %v2478 = vunpack.c.l.b16 %v1829
    %v2479 = vunpack.c.h.b16 %v1829
    %v2480 = vunpack.c.l.b16 %v1830
    %v2481 = vunpack.c.h.b16 %v1830
    %v2482 = vunpack.c.l.b16 %v1831
    %v2483 = vunpack.c.h.b16 %v1831
    %v2484 = vunpack.c.l.b16 %v1832
    %v2485 = vunpack.c.h.b16 %v1832
    %v2486 = vunpack.c.l.b16 %v1833
    %v2487 = vunpack.c.h.b16 %v1833
    %v2488 = vunpack.c.l.b16 %v1834
    %v2489 = vunpack.c.h.b16 %v1834
    %v2490 = vunpack.c.l.b16 %v1835
    %v2491 = vunpack.c.h.b16 %v1835
    %v2492 = vunpack.c.l.b16 %v1836
    %v2493 = vunpack.c.h.b16 %v1836
    %v2494 = vunpack.c.l.b16 %v1837
    %v2495 = vunpack.c.h.b16 %v1837
    %v2496 = vunpack.c.l.b16 %v1838
    %v2497 = vunpack.c.h.b16 %v1838
    %v2498 = vunpack.c.l.b16 %v1839
    %v2499 = vunpack.c.h.b16 %v1839
    %v2500 = vunpack.c.l.b16 %v1840
    %v2501 = vunpack.c.h.b16 %v1840
    %v2502 = vunpack.c.l.b16 %v1841
    %v2503 = vunpack.c.h.b16 %v1841
    %v2504 = vunpack.c.l.b16 %v1842
    %v2505 = vunpack.c.h.b16 %v1842
    %v2506 = vunpack.c.l.b16 %v1843
    %v2507 = vunpack.c.h.b16 %v1843
    %v2508 = vunpack.c.l.b16 %v1844
    %v2509 = vunpack.c.h.b16 %v1844
    %v2510 = vunpack.c.l.b16 %v1845
    %v2511 = vunpack.c.h.b16 %v1845
    %v2512 = vunpack.c.l.b16 %v1846
    %v2513 = vunpack.c.h.b16 %v1846
    %v2514 = vunpack.c.l.b16 %v1847
    %v2515 = vunpack.c.h.b16 %v1847
    %v2516 = vunpack.c.l.b16 %v1848
    %v2517 = vunpack.c.h.b16 %v1848
    %v2518 = vunpack.c.l.b16 %v1849
    %v2519 = vunpack.c.h.b16 %v1849
    %v2520 = vunpack.c.l.b16 %v1850
    %v2521 = vunpack.c.h.b16 %v1850
    %v2522 = vunpack.c.l.b16 %v1851
    %v2523 = vunpack.c.h.b16 %v1851
    %v2524 = vunpack.c.l.b16 %v1852
    %v2525 = vunpack.c.h.b16 %v1852
    %v2526 = vunpack.c.l.b16 %v1853
    %v2527 = vunpack.c.h.b16 %v1853
    %v2528 = vunpack.c.l.b16 %v1854
    %v2529 = vunpack.c.h.b16 %v1854
    %v2530 = vunpack.c.l.b16 %v1855
    %v2531 = vunpack.c.h.b16 %v1855
    %v2532 = vunpack.c.l.b16 %v1856
    %v2533 = vunpack.c.h.b16 %v1856
    %v2534 = vunpack.c.l.b16 %v1857
    %v2535 = vunpack.c.h.b16 %v1857
    %v2536 = vunpack.c.l.b16 %v1858
    %v2537 = vunpack.c.h.b16 %v1858
    %v2538 = vunpack.c.l.b16 %v1859
    %v2539 = vunpack.c.h.b16 %v1859
    %v2540 = vunpack.c.l.b16 %v1860
    %v2541 = vunpack.c.h.b16 %v1860
    %v2542 = vunpack.c.l.b16 %v1861
    %v2543 = vunpack.c.h.b16 %v1861
    %v2544 = vunpack.c.l.b16 %v1862
    %v2545 = vunpack.c.h.b16 %v1862
    %v2546 = vunpack.c.l.b16 %v1863
    %v2547 = vunpack.c.h.b16 %v1863
    %v2548 = vunpack.c.l.b16 %v1864
    %v2549 = vunpack.c.h.b16 %v1864
    %v2550 = vunpack.c.l.b16 %v1865
    %v2551 = vunpack.c.h.b16 %v1865
    %v2552 = vunpack.c.l.b16 %v1866
    %v2553 = vunpack.c.h.b16 %v1866
    %v2554 = vunpack.c.l.b16 %v1867
    %v2555 = vunpack.c.h.b16 %v1867
    %v2556 = vunpack.c.l.b16 %v1868
    %v2557 = vunpack.c.h.b16 %v1868
    %v2558 = vunpack.c.l.b16 %v1869
    %v2559 = vunpack.c.h.b16 %v1869
    %v2560 = vunpack.c.l.b16 %v1870
    %v2561 = vunpack.c.h.b16 %v1870
    %v2562 = vunpack.c.l.b16 %v1871
    %v2563 = vunpack.c.h.b16 %v1871
    %v2564 = vunpack.c.l.b16 %v1872
    %v2565 = vunpack.c.h.b16 %v1872
    %v2566 = vunpack.c.l.b16 %v1873
    %v2567 = vunpack.c.h.b16 %v1873
    %v2568 = vunpack.c.l.b16 %v1874
    %v2569 = vunpack.c.h.b16 %v1874
    %v2570 = vunpack.c.l.b16 %v1875
    %v2571 = vunpack.c.h.b16 %v1875
    %v2572 = vunpack.c.l.b16 %v1876
    %v2573 = vunpack.c.h.b16 %v1876
    %v2574 = vunpack.c.l.b16 %v1877
    %v2575 = vunpack.c.h.b16 %v1877
    %v2576 = vunpack.c.l.b16 %v1878
    %v2577 = vunpack.c.h.b16 %v1878
    %v2578 = vunpack.c.l.b16 %v1879
    %v2579 = vunpack.c.h.b16 %v1879
    %v2580 = vunpack.c.l.b16 %v1880
    %v2581 = vunpack.c.h.b16 %v1880
    %v2582 = vunpack.c.l.b16 %v1881
    %v2583 = vunpack.c.h.b16 %v1881
    %v2584 = vunpack.c.l.b16 %v1882
    %v2585 = vunpack.c.h.b16 %v1882
    %v2586 = vunpack.c.l.b16 %v1883
    %v2587 = vunpack.c.h.b16 %v1883
    %v2588 = vunpack.c.l.b16 %v1884
    %v2589 = vunpack.c.h.b16 %v1884
    %v2590 = vunpack.c.l.b16 %v1885
    %v2591 = vunpack.c.h.b16 %v1885
    %v2592 = vunpack.c.l.b16 %v1886
    %v2593 = vunpack.c.h.b16 %v1886
    %v2594 = vunpack.c.l.b16 %v1887
    %v2595 = vunpack.c.h.b16 %v1887
    %v2596 = vunpack.c.l.b16 %v1888
    %v2597 = vunpack.c.h.b16 %v1888
    %v2598 = vunpack.c.l.b16 %v1889
    %v2599 = vunpack.c.h.b16 %v1889
    %v2600 = vunpack.c.l.b16 %v1890
    %v2601 = vunpack.c.h.b16 %v1890
    %v2602 = vunpack.c.l.b16 %v1891
    %v2603 = vunpack.c.h.b16 %v1891
    %v2604 = vunpack.c.l.b16 %v1892
    %v2605 = vunpack.c.h.b16 %v1892
    %v2606 = vunpack.c.l.b16 %v1893
    %v2607 = vunpack.c.h.b16 %v1893
    %v2608 = vunpack.c.l.b16 %v1894
    %v2609 = vunpack.c.h.b16 %v1894
    %v2610 = vunpack.c.l.b16 %v1895
    %v2611 = vunpack.c.h.b16 %v1895
    %v2612 = vunpack.c.l.b16 %v1896
    %v2613 = vunpack.c.h.b16 %v1896
    %v2614 = vunpack.c.l.b16 %v1897
    %v2615 = vunpack.c.h.b16 %v1897
    %v2616 = vunpack.c.l.b16 %v1898
    %v2617 = vunpack.c.h.b16 %v1898
    %v2618 = vunpack.c.l.b16 %v1899
    %v2619 = vunpack.c.h.b16 %v1899
    %v2620 = vunpack.c.l.b16 %v1900
    %v2621 = vunpack.c.h.b16 %v1900
    %v2622 = vunpack.c.l.b16 %v1901
    %v2623 = vunpack.c.h.b16 %v1901
    %v2624 = vunpack.c.l.b16 %v1902
    %v2625 = vunpack.c.h.b16 %v1902
    %v2626 = vunpack.c.l.b16 %v1903
    %v2627 = vunpack.c.h.b16 %v1903
    %v2628 = vunpack.c.l.b16 %v1904
    %v2629 = vunpack.c.h.b16 %v1904
    %v2630 = vunpack.c.l.b16 %v1905
    %v2631 = vunpack.c.h.b16 %v1905
    %v2632 = vunpack.c.l.b16 %v1906
    %v2633 = vunpack.c.h.b16 %v1906
    %v2634 = vunpack.c.l.b16 %v1907
    %v2635 = vunpack.c.h.b16 %v1907
    %v2636 = vunpack.c.l.b16 %v1908
    %v2637 = vunpack.c.h.b16 %v1908
    %v2638 = vunpack.c.l.b16 %v1909
    %v2639 = vunpack.c.h.b16 %v1909
    %v2640 = vunpack.c.l.b16 %v1910
    %v2641 = vunpack.c.h.b16 %v1910
    %v2642 = vunpack.c.l.b16 %v1911
    %v2643 = vunpack.c.h.b16 %v1911
    %v2644 = vunpack.c.l.b16 %v1912
    %v2645 = vunpack.c.h.b16 %v1912
    %v2646 = vunpack.c.l.b16 %v1913
    %v2647 = vunpack.c.h.b16 %v1913
    %v2648 = vunpack.c.l.b16 %v1914
    %v2649 = vunpack.c.h.b16 %v1914
    %v2650 = vunpack.c.l.b16 %v1915
    %v2651 = vunpack.c.h.b16 %v1915
    %v2652 = vunpack.c.l.b16 %v1916
    %v2653 = vunpack.c.h.b16 %v1916
    %v2654 = vunpack.c.l.b16 %v1917
    %v2655 = vunpack.c.h.b16 %v1917
    %v2656 = vunpack.c.l.b16 %v1918
    %v2657 = vunpack.c.h.b16 %v1918
    %v2658 = vunpack.c.l.b16 %v1919
    %v2659 = vunpack.c.h.b16 %v1919
    %v2660 = vunpack.c.l.b16 %v1920
    %v2661 = vunpack.c.h.b16 %v1920
    %v2662 = vunpack.c.l.b16 %v1921
    %v2663 = vunpack.c.h.b16 %v1921
    %v2664 = vunpack.c.l.b16 %v1922
    %v2665 = vunpack.c.h.b16 %v1922
    %v2666 = vunpack.c.l.b16 %v1923
    %v2667 = vunpack.c.h.b16 %v1923
    %v2668 = vunpack.c.l.b16 %v1924
    %v2669 = vunpack.c.h.b16 %v1924
    %v2670 = vunpack.c.l.b16 %v1925
    %v2671 = vunpack.c.h.b16 %v1925
    %v2672 = vunpack.c.l.b16 %v1926
    %v2673 = vunpack.c.h.b16 %v1926
    %v2674 = vunpack.c.l.b16 %v1927
    %v2675 = vunpack.c.h.b16 %v1927
    %v2676 = vunpack.c.l.b16 %v1928
    %v2677 = vunpack.c.h.b16 %v1928
    %v2678 = vunpack.c.l.b16 %v1929
    %v2679 = vunpack.c.h.b16 %v1929
    %v2680 = vunpack.c.l.b16 %v1930
    %v2681 = vunpack.c.h.b16 %v1930
    %v2682 = vunpack.c.l.b16 %v1931
    %v2683 = vunpack.c.h.b16 %v1931
    %v2684 = vunpack.c.l.b16 %v1932
    %v2685 = vunpack.c.h.b16 %v1932
    %v2686 = vunpack.c.l.b16 %v1933
    %v2687 = vunpack.c.h.b16 %v1933
    %v2688 = vunpack.c.l.b16 %v1934
    %v2689 = vunpack.c.h.b16 %v1934
    %v2690 = vunpack.c.l.b16 %v1935
    %v2691 = vunpack.c.h.b16 %v1935
    %v2692 = vunpack.c.l.b16 %v1936
    %v2693 = vunpack.c.h.b16 %v1936
    %v2694 = vunpack.c.l.b16 %v1937
    %v2695 = vunpack.c.h.b16 %v1937
    %v2696 = vunpack.c.l.b16 %v1938
    %v2697 = vunpack.c.h.b16 %v1938
    %v2698 = vunpack.c.l.b16 %v1939
    %v2699 = vunpack.c.h.b16 %v1939
    %v2700 = vunpack.c.l.b16 %v1940
    %v2701 = vunpack.c.h.b16 %v1940
    %v2702 = vunpack.c.l.b16 %v1941
    %v2703 = vunpack.c.h.b16 %v1941
    %v2704 = vunpack.c.l.b16 %v1942
    %v2705 = vunpack.c.h.b16 %v1942
    %v2706 = vunpack.c.l.b16 %v1943
    %v2707 = vunpack.c.h.b16 %v1943
    %v2708 = vunpack.c.l.b16 %v1944
    %v2709 = vunpack.c.h.b16 %v1944
    %v2710 = vunpack.c.l.b16 %v1945
    %v2711 = vunpack.c.h.b16 %v1945
    %v2712 = vunpack.c.l.b16 %v1946
    %v2713 = vunpack.c.h.b16 %v1946
    %v2714 = vunpack.c.l.b16 %v1947
    %v2715 = vunpack.c.h.b16 %v1947
    %v2716 = vunpack.c.l.b16 %v1948
    %v2717 = vunpack.c.h.b16 %v1948
    %v2718 = vunpack.c.l.b16 %v1949
    %v2719 = vunpack.c.h.b16 %v1949
    %v2720 = vunpack.c.l.b16 %v1950
    %v2721 = vunpack.c.h.b16 %v1950
    %v2722 = vunpack.c.l.b16 %v1951
    %v2723 = vunpack.c.h.b16 %v1951
    %v2724 = vunpack.c.l.b16 %v1952
    %v2725 = vunpack.c.h.b16 %v1952
    %v2726 = vunpack.c.l.b16 %v1953
    %v2727 = vunpack.c.h.b16 %v1953
    %v2728 = vunpack.c.l.b16 %v1954
    %v2729 = vunpack.c.h.b16 %v1954
    %v2730 = vunpack.c.l.b16 %v1955
    %v2731 = vunpack.c.h.b16 %v1955
    %v2732 = vunpack.c.l.b16 %v1956
    %v2733 = vunpack.c.h.b16 %v1956
    %v2734 = vunpack.c.l.b16 %v1957
    %v2735 = vunpack.c.h.b16 %v1957
    %v2736 = vunpack.c.l.b16 %v1958
    %v2737 = vunpack.c.h.b16 %v1958
    %v2738 = vunpack.c.l.b16 %v1959
    %v2739 = vunpack.c.h.b16 %v1959
    %v2740 = vunpack.c.l.b16 %v1960
    %v2741 = vunpack.c.h.b16 %v1960
    %v2742 = vunpack.c.l.b16 %v1961
    %v2743 = vunpack.c.h.b16 %v1961
    %v2744 = vunpack.c.l.b16 %v1962
    %v2745 = vunpack.c.h.b16 %v1962
    %v2746 = vunpack.c.l.b16 %v1963
    %v2747 = vunpack.c.h.b16 %v1963
    %v2748 = vunpack.c.l.b16 %v1964
    %v2749 = vunpack.c.h.b16 %v1964
    %v2750 = vunpack.c.l.b16 %v1965
    %v2751 = vunpack.c.h.b16 %v1965
    %v2752 = vunpack.c.l.b16 %v1966
    %v2753 = vunpack.c.h.b16 %v1966
    %v2754 = vunpack.c.l.b16 %v1967
    %v2755 = vunpack.c.h.b16 %v1967
    %v2756 = vunpack.c.l.b16 %v1968
    %v2757 = vunpack.c.h.b16 %v1968
    %v2758 = vunpack.c.l.b16 %v1969
    %v2759 = vunpack.c.h.b16 %v1969
    %v2760 = vpack.c.b16 %v2252, %v2248
    %v2761 = vpack.c.b16 %v2253, %v2249
    %v2762 = vpack.c.b16 %v2254, %v2250
    %v2763 = vpack.c.b16 %v2255, %v2251
    %v2764 = vpack.c.b16 %v2260, %v2256
    %v2765 = vpack.c.b16 %v2261, %v2257
    %v2766 = vpack.c.b16 %v2262, %v2258
    %v2767 = vpack.c.b16 %v2263, %v2259
    %v2768 = vpack.c.b16 %v2268, %v2264
    %v2769 = vpack.c.b16 %v2269, %v2265
    %v2770 = vpack.c.b16 %v2270, %v2266
    %v2771 = vpack.c.b16 %v2271, %v2267
    %v2772 = vpack.c.b16 %v2276, %v2272
    %v2773 = vpack.c.b16 %v2277, %v2273
    %v2774 = vpack.c.b16 %v2278, %v2274
    %v2775 = vpack.c.b16 %v2279, %v2275
    %v2776 = vpack.c.b16 %v2284, %v2280
    %v2777 = vpack.c.b16 %v2285, %v2281
    %v2778 = vpack.c.b16 %v2286, %v2282
    %v2779 = vpack.c.b16 %v2287, %v2283
    %v2780 = vpack.c.b16 %v2292, %v2288
    %v2781 = vpack.c.b16 %v2293, %v2289
    %v2782 = vpack.c.b16 %v2294, %v2290
    %v2783 = vpack.c.b16 %v2295, %v2291
    %v2784 = vpack.c.b16 %v2300, %v2296
    %v2785 = vpack.c.b16 %v2301, %v2297
    %v2786 = vpack.c.b16 %v2302, %v2298
    %v2787 = vpack.c.b16 %v2303, %v2299
    %v2788 = vpack.c.b16 %v2308, %v2304
    %v2789 = vpack.c.b16 %v2309, %v2305
    %v2790 = vpack.c.b16 %v2310, %v2306
    %v2791 = vpack.c.b16 %v2311, %v2307
    %v2792 = vpack.c.b16 %v2316, %v2312
    %v2793 = vpack.c.b16 %v2317, %v2313
    %v2794 = vpack.c.b16 %v2318, %v2314
    %v2795 = vpack.c.b16 %v2319, %v2315
    %v2796 = vpack.c.b16 %v2324, %v2320
    %v2797 = vpack.c.b16 %v2325, %v2321
    %v2798 = vpack.c.b16 %v2326, %v2322
    %v2799 = vpack.c.b16 %v2327, %v2323
    %v2800 = vpack.c.b16 %v2332, %v2328
    %v2801 = vpack.c.b16 %v2333, %v2329
    %v2802 = vpack.c.b16 %v2334, %v2330
    %v2803 = vpack.c.b16 %v2335, %v2331
    %v2804 = vpack.c.b16 %v2340, %v2336
    %v2805 = vpack.c.b16 %v2341, %v2337
    %v2806 = vpack.c.b16 %v2342, %v2338
    %v2807 = vpack.c.b16 %v2343, %v2339
    %v2808 = vpack.c.b16 %v2348, %v2344
    %v2809 = vpack.c.b16 %v2349, %v2345
    %v2810 = vpack.c.b16 %v2350, %v2346
    %v2811 = vpack.c.b16 %v2351, %v2347
    %v2812 = vpack.c.b16 %v2356, %v2352
    %v2813 = vpack.c.b16 %v2357, %v2353
    %v2814 = vpack.c.b16 %v2358, %v2354
    %v2815 = vpack.c.b16 %v2359, %v2355
    %v2816 = vpack.c.b16 %v2364, %v2360
    %v2817 = vpack.c.b16 %v2365, %v2361
    %v2818 = vpack.c.b16 %v2366, %v2362
    %v2819 = vpack.c.b16 %v2367, %v2363
    %v2820 = vpack.c.b16 %v2372, %v2368
    %v2821 = vpack.c.b16 %v2373, %v2369
    %v2822 = vpack.c.b16 %v2374, %v2370
    %v2823 = vpack.c.b16 %v2375, %v2371
    %v2824 = vpack.c.b16 %v2380, %v2376
    %v2825 = vpack.c.b16 %v2381, %v2377
    %v2826 = vpack.c.b16 %v2382, %v2378
    %v2827 = vpack.c.b16 %v2383, %v2379
    %v2828 = vpack.c.b16 %v2388, %v2384
    %v2829 = vpack.c.b16 %v2389, %v2385
    %v2830 = vpack.c.b16 %v2390, %v2386
    %v2831 = vpack.c.b16 %v2391, %v2387
    %v2832 = vpack.c.b16 %v2396, %v2392
    %v2833 = vpack.c.b16 %v2397, %v2393
    %v2834 = vpack.c.b16 %v2398, %v2394
    %v2835 = vpack.c.b16 %v2399, %v2395
    %v2836 = vpack.c.b16 %v2404, %v2400
    %v2837 = vpack.c.b16 %v2405, %v2401
    %v2838 = vpack.c.b16 %v2406, %v2402
    %v2839 = vpack.c.b16 %v2407, %v2403
    %v2840 = vpack.c.b16 %v2412, %v2408
    %v2841 = vpack.c.b16 %v2413, %v2409
    %v2842 = vpack.c.b16 %v2414, %v2410
    %v2843 = vpack.c.b16 %v2415, %v2411
    %v2844 = vpack.c.b16 %v2420, %v2416
    %v2845 = vpack.c.b16 %v2421, %v2417
    %v2846 = vpack.c.b16 %v2422, %v2418
    %v2847 = vpack.c.b16 %v2423, %v2419
    %v2848 = vpack.c.b16 %v2428, %v2424
    %v2849 = vpack.c.b16 %v2429, %v2425
    %v2850 = vpack.c.b16 %v2430, %v2426
    %v2851 = vpack.c.b16 %v2431, %v2427
    %v2852 = vpack.c.b16 %v2436, %v2432
    %v2853 = vpack.c.b16 %v2437, %v2433
    %v2854 = vpack.c.b16 %v2438, %v2434
    %v2855 = vpack.c.b16 %v2439, %v2435
    %v2856 = vpack.c.b16 %v2444, %v2440
    %v2857 = vpack.c.b16 %v2445, %v2441
    %v2858 = vpack.c.b16 %v2446, %v2442
    %v2859 = vpack.c.b16 %v2447, %v2443
    %v2860 = vpack.c.b16 %v2452, %v2448
    %v2861 = vpack.c.b16 %v2453, %v2449
    %v2862 = vpack.c.b16 %v2454, %v2450
    %v2863 = vpack.c.b16 %v2455, %v2451
    %v2864 = vpack.c.b16 %v2460, %v2456
    %v2865 = vpack.c.b16 %v2461, %v2457
    %v2866 = vpack.c.b16 %v2462, %v2458
    %v2867 = vpack.c.b16 %v2463, %v2459
    %v2868 = vpack.c.b16 %v2468, %v2464
    %v2869 = vpack.c.b16 %v2469, %v2465
    %v2870 = vpack.c.b16 %v2470, %v2466
    %v2871 = vpack.c.b16 %v2471, %v2467
    %v2872 = vpack.c.b16 %v2476, %v2472
    %v2873 = vpack.c.b16 %v2477, %v2473
    %v2874 = vpack.c.b16 %v2478, %v2474
    %v2875 = vpack.c.b16 %v2479, %v2475
    %v2876 = vpack.c.b16 %v2484, %v2480
    %v2877 = vpack.c.b16 %v2485, %v2481
    %v2878 = vpack.c.b16 %v2486, %v2482
    %v2879 = vpack.c.b16 %v2487, %v2483
    %v2880 = vpack.c.b16 %v2492, %v2488
    %v2881 = vpack.c.b16 %v2493, %v2489
    %v2882 = vpack.c.b16 %v2494, %v2490
    %v2883 = vpack.c.b16 %v2495, %v2491
    %v2884 = vpack.c.b16 %v2500, %v2496
    %v2885 = vpack.c.b16 %v2501, %v2497
    %v2886 = vpack.c.b16 %v2502, %v2498
    %v2887 = vpack.c.b16 %v2503, %v2499
    %v2888 = vpack.c.b16 %v2508, %v2504
    %v2889 = vpack.c.b16 %v2509, %v2505
    %v2890 = vpack.c.b16 %v2510, %v2506
    %v2891 = vpack.c.b16 %v2511, %v2507
    %v2892 = vpack.c.b16 %v2516, %v2512
    %v2893 = vpack.c.b16 %v2517, %v2513
    %v2894 = vpack.c.b16 %v2518, %v2514
    %v2895 = vpack.c.b16 %v2519, %v2515
    %v2896 = vpack.c.b16 %v2524, %v2520
    %v2897 = vpack.c.b16 %v2525, %v2521
    %v2898 = vpack.c.b16 %v2526, %v2522
    %v2899 = vpack.c.b16 %v2527, %v2523
    %v2900 = vpack.c.b16 %v2532, %v2528
    %v2901 = vpack.c.b16 %v2533, %v2529
    %v2902 = vpack.c.b16 %v2534, %v2530
    %v2903 = vpack.c.b16 %v2535, %v2531
    %v2904 = vpack.c.b16 %v2540, %v2536
    %v2905 = vpack.c.b16 %v2541, %v2537
    %v2906 = vpack.c.b16 %v2542, %v2538
    %v2907 = vpack.c.b16 %v2543, %v2539
    %v2908 = vpack.c.b16 %v2548, %v2544
    %v2909 = vpack.c.b16 %v2549, %v2545
    %v2910 = vpack.c.b16 %v2550, %v2546
    %v2911 = vpack.c.b16 %v2551, %v2547
    %v2912 = vpack.c.b16 %v2556, %v2552
    %v2913 = vpack.c.b16 %v2557, %v2553
    %v2914 = vpack.c.b16 %v2558, %v2554
    %v2915 = vpack.c.b16 %v2559, %v2555
    %v2916 = vpack.c.b16 %v2564, %v2560
    %v2917 = vpack.c.b16 %v2565, %v2561
    %v2918 = vpack.c.b16 %v2566, %v2562
    %v2919 = vpack.c.b16 %v2567, %v2563
    %v2920 = vpack.c.b16 %v2572, %v2568
    %v2921 = vpack.c.b16 %v2573, %v2569
    %v2922 = vpack.c.b16 %v2574, %v2570
    %v2923 = vpack.c.b16 %v2575, %v2571
    %v2924 = vpack.c.b16 %v2580, %v2576
    %v2925 = vpack.c.b16 %v2581, %v2577
    %v2926 = vpack.c.b16 %v2582, %v2578
    %v2927 = vpack.c.b16 %v2583, %v2579
    %v2928 = vpack.c.b16 %v2588, %v2584
    %v2929 = vpack.c.b16 %v2589, %v2585
    %v2930 = vpack.c.b16 %v2590, %v2586
    %v2931 = vpack.c.b16 %v2591, %v2587
    %v2932 = vpack.c.b16 %v2596, %v2592
    %v2933 = vpack.c.b16 %v2597, %v2593
    %v2934 = vpack.c.b16 %v2598, %v2594
    %v2935 = vpack.c.b16 %v2599, %v2595
    %v2936 = vpack.c.b16 %v2604, %v2600
    %v2937 = vpack.c.b16 %v2605, %v2601
    %v2938 = vpack.c.b16 %v2606, %v2602
    %v2939 = vpack.c.b16 %v2607, %v2603
    %v2940 = vpack.c.b16 %v2612, %v2608
    %v2941 = vpack.c.b16 %v2613, %v2609
    %v2942 = vpack.c.b16 %v2614, %v2610
    %v2943 = vpack.c.b16 %v2615, %v2611
    %v2944 = vpack.c.b16 %v2620, %v2616
    %v2945 = vpack.c.b16 %v2621, %v2617
    %v2946 = vpack.c.b16 %v2622, %v2618
    %v2947 = vpack.c.b16 %v2623, %v2619
    %v2948 = vpack.c.b16 %v2628, %v2624
    %v2949 = vpack.c.b16 %v2629, %v2625
    %v2950 = vpack.c.b16 %v2630, %v2626
    %v2951 = vpack.c.b16 %v2631, %v2627
    %v2952 = vpack.c.b16 %v2636, %v2632
    %v2953 = vpack.c.b16 %v2637, %v2633
    %v2954 = vpack.c.b16 %v2638, %v2634
    %v2955 = vpack.c.b16 %v2639, %v2635
    %v2956 = vpack.c.b16 %v2644, %v2640
    %v2957 = vpack.c.b16 %v2645, %v2641
    %v2958 = vpack.c.b16 %v2646, %v2642
    %v2959 = vpack.c.b16 %v2647, %v2643
    %v2960 = vpack.c.b16 %v2652, %v2648
    %v2961 = vpack.c.b16 %v2653, %v2649
    %v2962 = vpack.c.b16 %v2654, %v2650
    %v2963 = vpack.c.b16 %v2655, %v2651
    %v2964 = vpack.c.b16 %v2660, %v2656
    %v2965 = vpack.c.b16 %v2661, %v2657
    %v2966 = vpack.c.b16 %v2662, %v2658
    %v2967 = vpack.c.b16 %v2663, %v2659
    %v2968 = vpack.c.b16 %v2668, %v2664
    %v2969 = vpack.c.b16 %v2669, %v2665
    %v2970 = vpack.c.b16 %v2670, %v2666
    %v2971 = vpack.c.b16 %v2671, %v2667
    %v2972 = vpack.c.b16 %v2676, %v2672
    %v2973 = vpack.c.b16 %v2677, %v2673
    %v2974 = vpack.c.b16 %v2678, %v2674
    %v2975 = vpack.c.b16 %v2679, %v2675
    %v2976 = vpack.c.b16 %v2684, %v2680
    %v2977 = vpack.c.b16 %v2685, %v2681
    %v2978 = vpack.c.b16 %v2686, %v2682
    %v2979 = vpack.c.b16 %v2687, %v2683
    %v2980 = vpack.c.b16 %v2692, %v2688
    %v2981 = vpack.c.b16 %v2693, %v2689
    %v2982 = vpack.c.b16 %v2694, %v2690
    %v2983 = vpack.c.b16 %v2695, %v2691
    %v2984 = vpack.c.b16 %v2700, %v2696
    %v2985 = vpack.c.b16 %v2701, %v2697
    %v2986 = vpack.c.b16 %v2702, %v2698
    %v2987 = vpack.c.b16 %v2703, %v2699
    %v2988 = vpack.c.b16 %v2708, %v2704
    %v2989 = vpack.c.b16 %v2709, %v2705
    %v2990 = vpack.c.b16 %v2710, %v2706
    %v2991 = vpack.c.b16 %v2711, %v2707
    %v2992 = vpack.c.b16 %v2716, %v2712
    %v2993 = vpack.c.b16 %v2717, %v2713
    %v2994 = vpack.c.b16 %v2718, %v2714
    %v2995 = vpack.c.b16 %v2719, %v2715
    %v2996 = vpack.c.b16 %v2724, %v2720
    %v2997 = vpack.c.b16 %v2725, %v2721
    %v2998 = vpack.c.b16 %v2726, %v2722
    %v2999 = vpack.c.b16 %v2727, %v2723
    %v3000 = vpack.c.b16 %v2732, %v2728
    %v3001 = vpack.c.b16 %v2733, %v2729
    %v3002 = vpack.c.b16 %v2734, %v2730
    %v3003 = vpack.c.b16 %v2735, %v2731
    %v3004 = vpack.c.b16 %v2740, %v2736
    %v3005 = vpack.c.b16 %v2741, %v2737
    %v3006 = vpack.c.b16 %v2742, %v2738
    %v3007 = vpack.c.b16 %v2743, %v2739
    %v3008 = vpack.c.b16 %v2748, %v2744
    %v3009 = vpack.c.b16 %v2749, %v2745
    %v3010 = vpack.c.b16 %v2750, %v2746
    %v3011 = vpack.c.b16 %v2751, %v2747
    %v3012 = vpack.c.b16 %v2756, %v2752
    %v3013 = vpack.c.b16 %v2757, %v2753
    %v3014 = vpack.c.b16 %v2758, %v2754
    %v3015 = vpack.c.b16 %v2759, %v2755
    %3272 = vmatprep.subr.bf16.mxu0 %v2789
    %3273 = vmatpush1.bf16.msra.mxu0 %v2788
    %3274 = vmatprep.subr.bf16.mxu0 %v2785
    %3275 = vmatpush1.bf16.msra.mxu0 %v2784
    %3276 = vmatprep.subr.bf16.mxu0 %v2781
    %3277 = vmatpush1.bf16.msra.mxu0 %v2780
    %3278 = vmatprep.subr.bf16.mxu0 %v2777
    %3279 = vmatpush1.bf16.msra.mxu0 %v2776
    %3280 = vmatprep.subr.bf16.mxu0 %v2773
    %3281 = vmatpush1.bf16.msra.mxu0 %v2772
    %3282 = vmatprep.subr.bf16.mxu0 %v2769
    %3283 = vmatpush1.bf16.msra.mxu0 %v2768
    %3284 = vmatprep.subr.bf16.mxu0 %v2765
    %3285 = vmatpush1.bf16.msra.mxu0 %v2764
    %3286 = vmatprep.subr.bf16.mxu0 %v2761
    %3287 = vmatpush1.bf16.msra.mxu0 %v2760
    %3288 = vmatprep.subr.bf16.mxu0 %v2821
    %3289 = vmatpush2.bf16.msra.mxu0 %v2820
    %3290 = vmatprep.subr.bf16.mxu0 %v2817
    %3291 = vmatpush2.bf16.msra.mxu0 %v2816
    %3292 = vmatprep.subr.bf16.mxu0 %v2813
    %3293 = vmatpush2.bf16.msra.mxu0 %v2812
    %3294 = vmatprep.subr.bf16.mxu0 %v2809
    %3295 = vmatpush2.bf16.msra.mxu0 %v2808
    %3296 = vmatprep.subr.bf16.mxu0 %v2805
    %3297 = vmatpush2.bf16.msra.mxu0 %v2804
    %3298 = vmatprep.subr.bf16.mxu0 %v2801
    %3299 = vmatpush2.bf16.msra.mxu0 %v2800
    %3300 = vmatprep.subr.bf16.mxu0 %v2797
    %3301 = vmatpush2.bf16.msra.mxu0 %v2796
    %3302 = vmatprep.subr.bf16.mxu0 %v2793
    %3303 = vmatpush2.bf16.msra.mxu0 %v2792
    %3304 = vmatprep.mubr.bf16.mxu0 %v1707
    %3305 = vmatmul.mubr.bf16.gmra.mxu0 %v1706
    %v3306 = vpop.f32.mrf.mxu0
    %v3307 = vadd.f32 %v1975, %v3306
    %v3308 = vpop.f32.mrf.mxu0
    %v3309 = vadd.f32 %v1979, %v3308
    %v3310 = vpop.f32.mrf.mxu0
    %v3311 = vpop.f32.mrf.mxu0
    %3312 = vdwg.mxu0
    %3313 = vmatprep.subr.bf16.mxu0 %v2853
    %3314 = vmatpush1.bf16.msra.mxu0 %v2852
    %3315 = vmatprep.subr.bf16.mxu0 %v2849
    %3316 = vmatpush1.bf16.msra.mxu0 %v2848
    %3317 = vmatprep.subr.bf16.mxu0 %v2845
    %3318 = vmatpush1.bf16.msra.mxu0 %v2844
    %3319 = vmatprep.subr.bf16.mxu0 %v2841
    %3320 = vmatpush1.bf16.msra.mxu0 %v2840
    %3321 = vmatprep.subr.bf16.mxu0 %v2837
    %3322 = vmatpush1.bf16.msra.mxu0 %v2836
    %3323 = vmatprep.subr.bf16.mxu0 %v2833
    %3324 = vmatpush1.bf16.msra.mxu0 %v2832
    %3325 = vmatprep.subr.bf16.mxu0 %v2829
    %3326 = vmatpush1.bf16.msra.mxu0 %v2828
    %3327 = vmatprep.subr.bf16.mxu0 %v2825
    %3328 = vmatpush1.bf16.msra.mxu0 %v2824
    %3329 = vmatprep.subr.bf16.mxu0 %v2885
    %3330 = vmatpush2.bf16.msra.mxu0 %v2884
    %3331 = vmatprep.subr.bf16.mxu0 %v2881
    %3332 = vmatpush2.bf16.msra.mxu0 %v2880
    %3333 = vmatprep.subr.bf16.mxu0 %v2877
    %3334 = vmatpush2.bf16.msra.mxu0 %v2876
    %3335 = vmatprep.subr.bf16.mxu0 %v2873
    %3336 = vmatpush2.bf16.msra.mxu0 %v2872
    %3337 = vmatprep.subr.bf16.mxu0 %v2869
    %3338 = vmatpush2.bf16.msra.mxu0 %v2868
    %3339 = vmatprep.subr.bf16.mxu0 %v2865
    %3340 = vmatpush2.bf16.msra.mxu0 %v2864
    %3341 = vmatprep.subr.bf16.mxu0 %v2861
    %3342 = vmatpush2.bf16.msra.mxu0 %v2860
    %3343 = vmatprep.subr.bf16.mxu0 %v2857
    %3344 = vmatpush2.bf16.msra.mxu0 %v2856
    %3345 = vmatprep.mubr.bf16.mxu0 %v1709
    %3346 = vmatmul.mubr.bf16.gmra.mxu0 %v1708
    %v3347 = vpop.f32.mrf.mxu0
    %v3348 = vadd.f32 %v3307, %v3347
    %v3349 = vpop.f32.mrf.mxu0
    %v3350 = vadd.f32 %v3309, %v3349
    %v3351 = vpop.f32.mrf.mxu0
    %v3352 = vpop.f32.mrf.mxu0
    %3353 = vdwg.mxu0
    %3354 = vmatprep.subr.bf16.mxu0 %v2917
    %3355 = vmatpush1.bf16.msra.mxu0 %v2916
    %3356 = vmatprep.subr.bf16.mxu0 %v2913
    %3357 = vmatpush1.bf16.msra.mxu0 %v2912
    %3358 = vmatprep.subr.bf16.mxu0 %v2909
    %3359 = vmatpush1.bf16.msra.mxu0 %v2908
    %3360 = vmatprep.subr.bf16.mxu0 %v2905
    %3361 = vmatpush1.bf16.msra.mxu0 %v2904
    %3362 = vmatprep.subr.bf16.mxu0 %v2901
    %3363 = vmatpush1.bf16.msra.mxu0 %v2900
    %3364 = vmatprep.subr.bf16.mxu0 %v2897
    %3365 = vmatpush1.bf16.msra.mxu0 %v2896
    %3366 = vmatprep.subr.bf16.mxu0 %v2893
    %3367 = vmatpush1.bf16.msra.mxu0 %v2892
    %3368 = vmatprep.subr.bf16.mxu0 %v2889
    %3369 = vmatpush1.bf16.msra.mxu0 %v2888
    %3370 = vmatprep.subr.bf16.mxu0 %v2949
    %3371 = vmatpush2.bf16.msra.mxu0 %v2948
    %3372 = vmatprep.subr.bf16.mxu0 %v2945
    %3373 = vmatpush2.bf16.msra.mxu0 %v2944
    %3374 = vmatprep.subr.bf16.mxu0 %v2941
    %3375 = vmatpush2.bf16.msra.mxu0 %v2940
    %3376 = vmatprep.subr.bf16.mxu0 %v2937
    %3377 = vmatpush2.bf16.msra.mxu0 %v2936
    %3378 = vmatprep.subr.bf16.mxu0 %v2933
    %3379 = vmatpush2.bf16.msra.mxu0 %v2932
    %3380 = vmatprep.subr.bf16.mxu0 %v2929
    %3381 = vmatpush2.bf16.msra.mxu0 %v2928
    %3382 = vmatprep.subr.bf16.mxu0 %v2925
    %3383 = vmatpush2.bf16.msra.mxu0 %v2924
    %3384 = vmatprep.subr.bf16.mxu0 %v2921
    %3385 = vmatpush2.bf16.msra.mxu0 %v2920
    %3386 = vmatprep.mubr.bf16.mxu0 %v1711
    %3387 = vmatmul.mubr.bf16.gmra.mxu0 %v1710
    %v3388 = vpop.f32.mrf.mxu0
    %v3389 = vadd.f32 %v3348, %v3388
    %v3390 = vpop.f32.mrf.mxu0
    %v3391 = vadd.f32 %v3350, %v3390
    %v3392 = vpop.f32.mrf.mxu0
    %v3393 = vpop.f32.mrf.mxu0
    %3394 = vdwg.mxu0
    %3395 = vmatprep.subr.bf16.mxu0 %v2981
    %3396 = vmatpush1.bf16.msra.mxu0 %v2980
    %3397 = vmatprep.subr.bf16.mxu0 %v2977
    %3398 = vmatpush1.bf16.msra.mxu0 %v2976
    %3399 = vmatprep.subr.bf16.mxu0 %v2973
    %3400 = vmatpush1.bf16.msra.mxu0 %v2972
    %3401 = vmatprep.subr.bf16.mxu0 %v2969
    %3402 = vmatpush1.bf16.msra.mxu0 %v2968
    %3403 = vmatprep.subr.bf16.mxu0 %v2965
    %3404 = vmatpush1.bf16.msra.mxu0 %v2964
    %3405 = vmatprep.subr.bf16.mxu0 %v2961
    %3406 = vmatpush1.bf16.msra.mxu0 %v2960
    %3407 = vmatprep.subr.bf16.mxu0 %v2957
    %3408 = vmatpush1.bf16.msra.mxu0 %v2956
    %3409 = vmatprep.subr.bf16.mxu0 %v2953
    %3410 = vmatpush1.bf16.msra.mxu0 %v2952
    %3411 = vmatprep.subr.bf16.mxu0 %v3013
    %3412 = vmatpush2.bf16.msra.mxu0 %v3012
    %3413 = vmatprep.subr.bf16.mxu0 %v3009
    %3414 = vmatpush2.bf16.msra.mxu0 %v3008
    %3415 = vmatprep.subr.bf16.mxu0 %v3005
    %3416 = vmatpush2.bf16.msra.mxu0 %v3004
    %3417 = vmatprep.subr.bf16.mxu0 %v3001
    %3418 = vmatpush2.bf16.msra.mxu0 %v3000
    %3419 = vmatprep.subr.bf16.mxu0 %v2997
    %3420 = vmatpush2.bf16.msra.mxu0 %v2996
    %3421 = vmatprep.subr.bf16.mxu0 %v2993
    %3422 = vmatpush2.bf16.msra.mxu0 %v2992
    %3423 = vmatprep.subr.bf16.mxu0 %v2989
    %3424 = vmatpush2.bf16.msra.mxu0 %v2988
    %3425 = vmatprep.subr.bf16.mxu0 %v2985
    %3426 = vmatpush2.bf16.msra.mxu0 %v2984
    %3427 = vmatprep.mubr.bf16.mxu0 %v1713
    %3428 = vmatmul.mubr.bf16.gmra.mxu0 %v1712
    %v3429 = vpop.f32.mrf.mxu0
    %v3430 = vadd.f32 %v3389, %v3429
    %v3431 = vpop.f32.mrf.mxu0
    %v3432 = vadd.f32 %v3391, %v3431
    %v3433 = vpop.f32.mrf.mxu0
    %v3434 = vpop.f32.mrf.mxu0
    %3435 = vdwg.mxu0
    %3436 = vmatprep.subr.bf16.mxu0 %v2791
    %3437 = vmatpush1.bf16.msra.mxu0 %v2790
    %3438 = vmatprep.subr.bf16.mxu0 %v2787
    %3439 = vmatpush1.bf16.msra.mxu0 %v2786
    %3440 = vmatprep.subr.bf16.mxu0 %v2783
    %3441 = vmatpush1.bf16.msra.mxu0 %v2782
    %3442 = vmatprep.subr.bf16.mxu0 %v2779
    %3443 = vmatpush1.bf16.msra.mxu0 %v2778
    %3444 = vmatprep.subr.bf16.mxu0 %v2775
    %3445 = vmatpush1.bf16.msra.mxu0 %v2774
    %3446 = vmatprep.subr.bf16.mxu0 %v2771
    %3447 = vmatpush1.bf16.msra.mxu0 %v2770
    %3448 = vmatprep.subr.bf16.mxu0 %v2767
    %3449 = vmatpush1.bf16.msra.mxu0 %v2766
    %3450 = vmatprep.subr.bf16.mxu0 %v2763
    %3451 = vmatpush1.bf16.msra.mxu0 %v2762
    %3452 = vmatprep.subr.bf16.mxu0 %v2823
    %3453 = vmatpush2.bf16.msra.mxu0 %v2822
    %3454 = vmatprep.subr.bf16.mxu0 %v2819
    %3455 = vmatpush2.bf16.msra.mxu0 %v2818
    %3456 = vmatprep.subr.bf16.mxu0 %v2815
    %3457 = vmatpush2.bf16.msra.mxu0 %v2814
    %3458 = vmatprep.subr.bf16.mxu0 %v2811
    %3459 = vmatpush2.bf16.msra.mxu0 %v2810
    %3460 = vmatprep.subr.bf16.mxu0 %v2807
    %3461 = vmatpush2.bf16.msra.mxu0 %v2806
    %3462 = vmatprep.subr.bf16.mxu0 %v2803
    %3463 = vmatpush2.bf16.msra.mxu0 %v2802
    %3464 = vmatprep.subr.bf16.mxu0 %v2799
    %3465 = vmatpush2.bf16.msra.mxu0 %v2798
    %3466 = vmatprep.subr.bf16.mxu0 %v2795
    %3467 = vmatpush2.bf16.msra.mxu0 %v2794
    %3468 = vmatprep.mubr.bf16.mxu0 %v1707
    %3469 = vmatmul.mubr.bf16.gmra.mxu0 %v1706
    %v3470 = vpop.f32.mrf.mxu0
    %v3471 = vadd.f32 %v1983, %v3470
    %v3472 = vpop.f32.mrf.mxu0
    %v3473 = vadd.f32 %v1987, %v3472
    %v3474 = vpop.f32.mrf.mxu0
    %v3475 = vpop.f32.mrf.mxu0
    %3476 = vdwg.mxu0
    %3477 = vmatprep.subr.bf16.mxu0 %v2855
    %3478 = vmatpush1.bf16.msra.mxu0 %v2854
    %3479 = vmatprep.subr.bf16.mxu0 %v2851
    %3480 = vmatpush1.bf16.msra.mxu0 %v2850
    %3481 = vmatprep.subr.bf16.mxu0 %v2847
    %3482 = vmatpush1.bf16.msra.mxu0 %v2846
    %3483 = vmatprep.subr.bf16.mxu0 %v2843
    %3484 = vmatpush1.bf16.msra.mxu0 %v2842
    %3485 = vmatprep.subr.bf16.mxu0 %v2839
    %3486 = vmatpush1.bf16.msra.mxu0 %v2838
    %3487 = vmatprep.subr.bf16.mxu0 %v2835
    %3488 = vmatpush1.bf16.msra.mxu0 %v2834
    %3489 = vmatprep.subr.bf16.mxu0 %v2831
    %3490 = vmatpush1.bf16.msra.mxu0 %v2830
    %3491 = vmatprep.subr.bf16.mxu0 %v2827
    %3492 = vmatpush1.bf16.msra.mxu0 %v2826
    %3493 = vmatprep.subr.bf16.mxu0 %v2887
    %3494 = vmatpush2.bf16.msra.mxu0 %v2886
    %3495 = vmatprep.subr.bf16.mxu0 %v2883
    %3496 = vmatpush2.bf16.msra.mxu0 %v2882
    %3497 = vmatprep.subr.bf16.mxu0 %v2879
    %3498 = vmatpush2.bf16.msra.mxu0 %v2878
    %3499 = vmatprep.subr.bf16.mxu0 %v2875
    %3500 = vmatpush2.bf16.msra.mxu0 %v2874
    %3501 = vmatprep.subr.bf16.mxu0 %v2871
    %3502 = vmatpush2.bf16.msra.mxu0 %v2870
    %3503 = vmatprep.subr.bf16.mxu0 %v2867
    %3504 = vmatpush2.bf16.msra.mxu0 %v2866
    %3505 = vmatprep.subr.bf16.mxu0 %v2863
    %3506 = vmatpush2.bf16.msra.mxu0 %v2862
    %3507 = vmatprep.subr.bf16.mxu0 %v2859
    %3508 = vmatpush2.bf16.msra.mxu0 %v2858
    %3509 = vmatprep.mubr.bf16.mxu0 %v1709
    %3510 = vmatmul.mubr.bf16.gmra.mxu0 %v1708
    %v3511 = vpop.f32.mrf.mxu0
    %v3512 = vadd.f32 %v3471, %v3511
    %v3513 = vpop.f32.mrf.mxu0
    %v3514 = vadd.f32 %v3473, %v3513
    %v3515 = vpop.f32.mrf.mxu0
    %v3516 = vpop.f32.mrf.mxu0
    %3517 = vdwg.mxu0
    %3518 = vmatprep.subr.bf16.mxu0 %v2919
    %3519 = vmatpush1.bf16.msra.mxu0 %v2918
    %3520 = vmatprep.subr.bf16.mxu0 %v2915
    %3521 = vmatpush1.bf16.msra.mxu0 %v2914
    %3522 = vmatprep.subr.bf16.mxu0 %v2911
    %3523 = vmatpush1.bf16.msra.mxu0 %v2910
    %3524 = vmatprep.subr.bf16.mxu0 %v2907
    %3525 = vmatpush1.bf16.msra.mxu0 %v2906
    %3526 = vmatprep.subr.bf16.mxu0 %v2903
    %3527 = vmatpush1.bf16.msra.mxu0 %v2902
    %3528 = vmatprep.subr.bf16.mxu0 %v2899
    %3529 = vmatpush1.bf16.msra.mxu0 %v2898
    %3530 = vmatprep.subr.bf16.mxu0 %v2895
    %3531 = vmatpush1.bf16.msra.mxu0 %v2894
    %3532 = vmatprep.subr.bf16.mxu0 %v2891
    %3533 = vmatpush1.bf16.msra.mxu0 %v2890
    %3534 = vmatprep.subr.bf16.mxu0 %v2951
    %3535 = vmatpush2.bf16.msra.mxu0 %v2950
    %3536 = vmatprep.subr.bf16.mxu0 %v2947
    %3537 = vmatpush2.bf16.msra.mxu0 %v2946
    %3538 = vmatprep.subr.bf16.mxu0 %v2943
    %3539 = vmatpush2.bf16.msra.mxu0 %v2942
    %3540 = vmatprep.subr.bf16.mxu0 %v2939
    %3541 = vmatpush2.bf16.msra.mxu0 %v2938
    %3542 = vmatprep.subr.bf16.mxu0 %v2935
    %3543 = vmatpush2.bf16.msra.mxu0 %v2934
    %3544 = vmatprep.subr.bf16.mxu0 %v2931
    %3545 = vmatpush2.bf16.msra.mxu0 %v2930
    %3546 = vmatprep.subr.bf16.mxu0 %v2927
    %3547 = vmatpush2.bf16.msra.mxu0 %v2926
    %3548 = vmatprep.subr.bf16.mxu0 %v2923
    %3549 = vmatpush2.bf16.msra.mxu0 %v2922
    %3550 = vmatprep.mubr.bf16.mxu0 %v1711
    %3551 = vmatmul.mubr.bf16.gmra.mxu0 %v1710
    %v3552 = vpop.f32.mrf.mxu0
    %v3553 = vadd.f32 %v3512, %v3552
    %v3554 = vpop.f32.mrf.mxu0
    %v3555 = vadd.f32 %v3514, %v3554
    %v3556 = vpop.f32.mrf.mxu0
    %v3557 = vpop.f32.mrf.mxu0
    %3558 = vdwg.mxu0
    %3559 = vmatprep.subr.bf16.mxu0 %v2983
    %3560 = vmatpush1.bf16.msra.mxu0 %v2982
    %3561 = vmatprep.subr.bf16.mxu0 %v2979
    %3562 = vmatpush1.bf16.msra.mxu0 %v2978
    %3563 = vmatprep.subr.bf16.mxu0 %v2975
    %3564 = vmatpush1.bf16.msra.mxu0 %v2974
    %3565 = vmatprep.subr.bf16.mxu0 %v2971
    %3566 = vmatpush1.bf16.msra.mxu0 %v2970
    %3567 = vmatprep.subr.bf16.mxu0 %v2967
    %3568 = vmatpush1.bf16.msra.mxu0 %v2966
    %3569 = vmatprep.subr.bf16.mxu0 %v2963
    %3570 = vmatpush1.bf16.msra.mxu0 %v2962
    %3571 = vmatprep.subr.bf16.mxu0 %v2959
    %3572 = vmatpush1.bf16.msra.mxu0 %v2958
    %3573 = vmatprep.subr.bf16.mxu0 %v2955
    %3574 = vmatpush1.bf16.msra.mxu0 %v2954
    %3575 = vmatprep.subr.bf16.mxu0 %v3015
    %3576 = vmatpush2.bf16.msra.mxu0 %v3014
    %3577 = vmatprep.subr.bf16.mxu0 %v3011
    %3578 = vmatpush2.bf16.msra.mxu0 %v3010
    %3579 = vmatprep.subr.bf16.mxu0 %v3007
    %3580 = vmatpush2.bf16.msra.mxu0 %v3006
    %3581 = vmatprep.subr.bf16.mxu0 %v3003
    %3582 = vmatpush2.bf16.msra.mxu0 %v3002
    %3583 = vmatprep.subr.bf16.mxu0 %v2999
    %3584 = vmatpush2.bf16.msra.mxu0 %v2998
    %3585 = vmatprep.subr.bf16.mxu0 %v2995
    %3586 = vmatpush2.bf16.msra.mxu0 %v2994
    %3587 = vmatprep.subr.bf16.mxu0 %v2991
    %3588 = vmatpush2.bf16.msra.mxu0 %v2990
    %3589 = vmatprep.subr.bf16.mxu0 %v2987
    %3590 = vmatpush2.bf16.msra.mxu0 %v2986
    %3591 = vmatprep.mubr.bf16.mxu0 %v1713
    %3592 = vmatmul.mubr.bf16.gmra.mxu0 %v1712
    %v3593 = vpop.f32.mrf.mxu0
    %v3594 = vadd.f32 %v3553, %v3593
    %v3595 = vpop.f32.mrf.mxu0
    %v3596 = vadd.f32 %v3555, %v3595
    %v3597 = vpop.f32.mrf.mxu0
    %v3598 = vpop.f32.mrf.mxu0
    %3599 = vdwg.mxu0
    %vm3600 = vcmp.gt.f32.partialorder %v3430, 0.0
    %vm3601 = vcmp.gt.f32.partialorder %v3432, 0.0
    %vm3602 = vcmp.gt.f32.partialorder %v3594, 0.0
    %vm3603 = vcmp.gt.f32.partialorder %v3596, 0.0
    %v3604 = vmul.f32 %v3430, 0.2
    %v3605 = vmul.f32 %v3432, 0.2
    %v3606 = vmul.f32 %v3594, 0.2
    %v3607 = vmul.f32 %v3596, 0.2
    %v3608 = vsel %vm3600, %v3430, %v3604
    %v3609 = vsel %vm3601, %v3432, %v3605
    %v3610 = vsel %vm3602, %v3594, %v3606
    %v3611 = vsel %vm3603, %v3596, %v3607
    %v3612 = vpack.c.bf16 %v3608, %v3608
    %v3613 = vpack.c.bf16 %v3609, %v3609
    %v3614 = vpack.c.bf16 %v3610, %v3610
    %v3615 = vpack.c.bf16 %v3611, %v3611
    %v3616 = vld [vmem:[#allocation10] sm:$0xff]
    %v3617 = vld [vmem:[#allocation10 + $0x8] sm:$0xff]
    %v3618 = vld [vmem:[#allocation10 + $0x10] sm:$0xff]
    %v3619 = vld [vmem:[#allocation10 + $0x18] sm:$0xff]
    %v3620 = vld [vmem:[#allocation10 + $0x20] sm:$0xff]
    %v3621 = vld [vmem:[#allocation10 + $0x28] sm:$0xff]
    %v3622 = vld [vmem:[#allocation10 + $0x30] sm:$0xff]
    %v3623 = vld [vmem:[#allocation10 + $0x38] sm:$0xff]
    %v3624 = vld [vmem:[#allocation10 + $0x40] sm:$0xff]
    %v3625 = vld [vmem:[#allocation10 + $0x48] sm:$0xff]
    %v3626 = vld [vmem:[#allocation10 + $0x50] sm:$0xff]
    %v3627 = vld [vmem:[#allocation10 + $0x58] sm:$0xff]
    %v3628 = vld [vmem:[#allocation10 + $0x60] sm:$0xff]
    %v3629 = vld [vmem:[#allocation10 + $0x68] sm:$0xff]
    %v3630 = vld [vmem:[#allocation10 + $0x70] sm:$0xff]
    %v3631 = vld [vmem:[#allocation10 + $0x78] sm:$0xff]
    %v3632 = vld [vmem:[#allocation10 + $0x80] sm:$0xff]
    %v3633 = vld [vmem:[#allocation10 + $0x88] sm:$0xff]
    %v3634 = vld [vmem:[#allocation10 + $0x90] sm:$0xff]
    %v3635 = vld [vmem:[#allocation10 + $0x98] sm:$0xff]
    %v3636 = vld [vmem:[#allocation10 + $0xa0] sm:$0xff]
    %v3637 = vld [vmem:[#allocation10 + $0xa8] sm:$0xff]
    %v3638 = vld [vmem:[#allocation10 + $0xb0] sm:$0xff]
    %v3639 = vld [vmem:[#allocation10 + $0xb8] sm:$0xff]
    %v3640 = vld [vmem:[#allocation10 + $0xc0] sm:$0xff]
    %v3641 = vld [vmem:[#allocation10 + $0xc8] sm:$0xff]
    %v3642 = vld [vmem:[#allocation10 + $0xd0] sm:$0xff]
    %v3643 = vld [vmem:[#allocation10 + $0xd8] sm:$0xff]
    %v3644 = vld [vmem:[#allocation10 + $0xe0] sm:$0xff]
    %v3645 = vld [vmem:[#allocation10 + $0xe8] sm:$0xff]
    %v3646 = vld [vmem:[#allocation10 + $0xf0] sm:$0xff]
    %v3647 = vld [vmem:[#allocation10 + $0xf8] sm:$0xff]
    %v3648 = vld [vmem:[#allocation10 + $0x100] sm:$0xff]
    %v3649 = vld [vmem:[#allocation10 + $0x108] sm:$0xff]
    %v3650 = vld [vmem:[#allocation10 + $0x110] sm:$0xff]
    %v3651 = vld [vmem:[#allocation10 + $0x118] sm:$0xff]
    %v3652 = vld [vmem:[#allocation10 + $0x120] sm:$0xff]
    %v3653 = vld [vmem:[#allocation10 + $0x128] sm:$0xff]
    %v3654 = vld [vmem:[#allocation10 + $0x130] sm:$0xff]
    %v3655 = vld [vmem:[#allocation10 + $0x138] sm:$0xff]
    %v3656 = vld [vmem:[#allocation10 + $0x140] sm:$0xff]
    %v3657 = vld [vmem:[#allocation10 + $0x148] sm:$0xff]
    %v3658 = vld [vmem:[#allocation10 + $0x150] sm:$0xff]
    %v3659 = vld [vmem:[#allocation10 + $0x158] sm:$0xff]
    %v3660 = vld [vmem:[#allocation10 + $0x160] sm:$0xff]
    %v3661 = vld [vmem:[#allocation10 + $0x168] sm:$0xff]
    %v3662 = vld [vmem:[#allocation10 + $0x170] sm:$0xff]
    %v3663 = vld [vmem:[#allocation10 + $0x178] sm:$0xff]
    %v3664 = vld [vmem:[#allocation10 + $0x180] sm:$0xff]
    %v3665 = vld [vmem:[#allocation10 + $0x188] sm:$0xff]
    %v3666 = vld [vmem:[#allocation10 + $0x190] sm:$0xff]
    %v3667 = vld [vmem:[#allocation10 + $0x198] sm:$0xff]
    %v3668 = vld [vmem:[#allocation10 + $0x1a0] sm:$0xff]
    %v3669 = vld [vmem:[#allocation10 + $0x1a8] sm:$0xff]
    %v3670 = vld [vmem:[#allocation10 + $0x1b0] sm:$0xff]
    %v3671 = vld [vmem:[#allocation10 + $0x1b8] sm:$0xff]
    %v3672 = vld [vmem:[#allocation10 + $0x1c0] sm:$0xff]
    %v3673 = vld [vmem:[#allocation10 + $0x1c8] sm:$0xff]
    %v3674 = vld [vmem:[#allocation10 + $0x1d0] sm:$0xff]
    %v3675 = vld [vmem:[#allocation10 + $0x1d8] sm:$0xff]
    %v3676 = vld [vmem:[#allocation10 + $0x1e0] sm:$0xff]
    %v3677 = vld [vmem:[#allocation10 + $0x1e8] sm:$0xff]
    %v3678 = vld [vmem:[#allocation10 + $0x1f0] sm:$0xff]
    %v3679 = vld [vmem:[#allocation10 + $0x1f8] sm:$0xff]
    %v3680 = vld [vmem:[%s6] sm:$0x3]
    %v3682 = vlaneseq
    %v3683 = vshrl.u32 %v3682, 7
    %v3684 = vsub.s32 0, %v3683
    %v3685 = vrot.slane %v3680, %v3684
    %v3686 = vlaneseq
    %v3687 = vshrl.u32 %v3686, 7
    %v3688 = vsub.s32 1, %v3687
    %v3689 = vrot.slane %v3680, %v3688
    %v3756 = vunpack.c.l.b16 %v3616
    %v3757 = vunpack.c.h.b16 %v3616
    %v3758 = vunpack.c.l.b16 %v3617
    %v3759 = vunpack.c.h.b16 %v3617
    %v3760 = vunpack.c.l.b16 %v3618
    %v3761 = vunpack.c.h.b16 %v3618
    %v3762 = vunpack.c.l.b16 %v3619
    %v3763 = vunpack.c.h.b16 %v3619
    %v3764 = vunpack.c.l.b16 %v3620
    %v3765 = vunpack.c.h.b16 %v3620
    %v3766 = vunpack.c.l.b16 %v3621
    %v3767 = vunpack.c.h.b16 %v3621
    %v3768 = vunpack.c.l.b16 %v3622
    %v3769 = vunpack.c.h.b16 %v3622
    %v3770 = vunpack.c.l.b16 %v3623
    %v3771 = vunpack.c.h.b16 %v3623
    %v3772 = vunpack.c.l.b16 %v3624
    %v3773 = vunpack.c.h.b16 %v3624
    %v3774 = vunpack.c.l.b16 %v3625
    %v3775 = vunpack.c.h.b16 %v3625
    %v3776 = vunpack.c.l.b16 %v3626
    %v3777 = vunpack.c.h.b16 %v3626
    %v3778 = vunpack.c.l.b16 %v3627
    %v3779 = vunpack.c.h.b16 %v3627
    %v3780 = vunpack.c.l.b16 %v3628
    %v3781 = vunpack.c.h.b16 %v3628
    %v3782 = vunpack.c.l.b16 %v3629
    %v3783 = vunpack.c.h.b16 %v3629
    %v3784 = vunpack.c.l.b16 %v3630
    %v3785 = vunpack.c.h.b16 %v3630
    %v3786 = vunpack.c.l.b16 %v3631
    %v3787 = vunpack.c.h.b16 %v3631
    %v3788 = vunpack.c.l.b16 %v3632
    %v3789 = vunpack.c.h.b16 %v3632
    %v3790 = vunpack.c.l.b16 %v3633
    %v3791 = vunpack.c.h.b16 %v3633
    %v3792 = vunpack.c.l.b16 %v3634
    %v3793 = vunpack.c.h.b16 %v3634
    %v3794 = vunpack.c.l.b16 %v3635
    %v3795 = vunpack.c.h.b16 %v3635
    %v3796 = vunpack.c.l.b16 %v3636
    %v3797 = vunpack.c.h.b16 %v3636
    %v3798 = vunpack.c.l.b16 %v3637
    %v3799 = vunpack.c.h.b16 %v3637
    %v3800 = vunpack.c.l.b16 %v3638
    %v3801 = vunpack.c.h.b16 %v3638
    %v3802 = vunpack.c.l.b16 %v3639
    %v3803 = vunpack.c.h.b16 %v3639
    %v3804 = vunpack.c.l.b16 %v3640
    %v3805 = vunpack.c.h.b16 %v3640
    %v3806 = vunpack.c.l.b16 %v3641
    %v3807 = vunpack.c.h.b16 %v3641
    %v3808 = vunpack.c.l.b16 %v3642
    %v3809 = vunpack.c.h.b16 %v3642
    %v3810 = vunpack.c.l.b16 %v3643
    %v3811 = vunpack.c.h.b16 %v3643
    %v3812 = vunpack.c.l.b16 %v3644
    %v3813 = vunpack.c.h.b16 %v3644
    %v3814 = vunpack.c.l.b16 %v3645
    %v3815 = vunpack.c.h.b16 %v3645
    %v3816 = vunpack.c.l.b16 %v3646
    %v3817 = vunpack.c.h.b16 %v3646
    %v3818 = vunpack.c.l.b16 %v3647
    %v3819 = vunpack.c.h.b16 %v3647
    %v3820 = vunpack.c.l.b16 %v3648
    %v3821 = vunpack.c.h.b16 %v3648
    %v3822 = vunpack.c.l.b16 %v3649
    %v3823 = vunpack.c.h.b16 %v3649
    %v3824 = vunpack.c.l.b16 %v3650
    %v3825 = vunpack.c.h.b16 %v3650
    %v3826 = vunpack.c.l.b16 %v3651
    %v3827 = vunpack.c.h.b16 %v3651
    %v3828 = vunpack.c.l.b16 %v3652
    %v3829 = vunpack.c.h.b16 %v3652
    %v3830 = vunpack.c.l.b16 %v3653
    %v3831 = vunpack.c.h.b16 %v3653
    %v3832 = vunpack.c.l.b16 %v3654
    %v3833 = vunpack.c.h.b16 %v3654
    %v3834 = vunpack.c.l.b16 %v3655
    %v3835 = vunpack.c.h.b16 %v3655
    %v3836 = vunpack.c.l.b16 %v3656
    %v3837 = vunpack.c.h.b16 %v3656
    %v3838 = vunpack.c.l.b16 %v3657
    %v3839 = vunpack.c.h.b16 %v3657
    %v3840 = vunpack.c.l.b16 %v3658
    %v3841 = vunpack.c.h.b16 %v3658
    %v3842 = vunpack.c.l.b16 %v3659
    %v3843 = vunpack.c.h.b16 %v3659
    %v3844 = vunpack.c.l.b16 %v3660
    %v3845 = vunpack.c.h.b16 %v3660
    %v3846 = vunpack.c.l.b16 %v3661
    %v3847 = vunpack.c.h.b16 %v3661
    %v3848 = vunpack.c.l.b16 %v3662
    %v3849 = vunpack.c.h.b16 %v3662
    %v3850 = vunpack.c.l.b16 %v3663
    %v3851 = vunpack.c.h.b16 %v3663
    %v3852 = vunpack.c.l.b16 %v3664
    %v3853 = vunpack.c.h.b16 %v3664
    %v3854 = vunpack.c.l.b16 %v3665
    %v3855 = vunpack.c.h.b16 %v3665
    %v3856 = vunpack.c.l.b16 %v3666
    %v3857 = vunpack.c.h.b16 %v3666
    %v3858 = vunpack.c.l.b16 %v3667
    %v3859 = vunpack.c.h.b16 %v3667
    %v3860 = vunpack.c.l.b16 %v3668
    %v3861 = vunpack.c.h.b16 %v3668
    %v3862 = vunpack.c.l.b16 %v3669
    %v3863 = vunpack.c.h.b16 %v3669
    %v3864 = vunpack.c.l.b16 %v3670
    %v3865 = vunpack.c.h.b16 %v3670
    %v3866 = vunpack.c.l.b16 %v3671
    %v3867 = vunpack.c.h.b16 %v3671
    %v3868 = vunpack.c.l.b16 %v3672
    %v3869 = vunpack.c.h.b16 %v3672
    %v3870 = vunpack.c.l.b16 %v3673
    %v3871 = vunpack.c.h.b16 %v3673
    %v3872 = vunpack.c.l.b16 %v3674
    %v3873 = vunpack.c.h.b16 %v3674
    %v3874 = vunpack.c.l.b16 %v3675
    %v3875 = vunpack.c.h.b16 %v3675
    %v3876 = vunpack.c.l.b16 %v3676
    %v3877 = vunpack.c.h.b16 %v3676
    %v3878 = vunpack.c.l.b16 %v3677
    %v3879 = vunpack.c.h.b16 %v3677
    %v3880 = vunpack.c.l.b16 %v3678
    %v3881 = vunpack.c.h.b16 %v3678
    %v3882 = vunpack.c.l.b16 %v3679
    %v3883 = vunpack.c.h.b16 %v3679
    %v3884 = vpack.c.b16 %v3758, %v3756
    %v3885 = vpack.c.b16 %v3759, %v3757
    %v3886 = vpack.c.b16 %v3762, %v3760
    %v3887 = vpack.c.b16 %v3763, %v3761
    %v3888 = vpack.c.b16 %v3766, %v3764
    %v3889 = vpack.c.b16 %v3767, %v3765
    %v3890 = vpack.c.b16 %v3770, %v3768
    %v3891 = vpack.c.b16 %v3771, %v3769
    %v3892 = vpack.c.b16 %v3774, %v3772
    %v3893 = vpack.c.b16 %v3775, %v3773
    %v3894 = vpack.c.b16 %v3778, %v3776
    %v3895 = vpack.c.b16 %v3779, %v3777
    %v3896 = vpack.c.b16 %v3782, %v3780
    %v3897 = vpack.c.b16 %v3783, %v3781
    %v3898 = vpack.c.b16 %v3786, %v3784
    %v3899 = vpack.c.b16 %v3787, %v3785
    %v3900 = vpack.c.b16 %v3790, %v3788
    %v3901 = vpack.c.b16 %v3791, %v3789
    %v3902 = vpack.c.b16 %v3794, %v3792
    %v3903 = vpack.c.b16 %v3795, %v3793
    %v3904 = vpack.c.b16 %v3798, %v3796
    %v3905 = vpack.c.b16 %v3799, %v3797
    %v3906 = vpack.c.b16 %v3802, %v3800
    %v3907 = vpack.c.b16 %v3803, %v3801
    %v3908 = vpack.c.b16 %v3806, %v3804
    %v3909 = vpack.c.b16 %v3807, %v3805
    %v3910 = vpack.c.b16 %v3810, %v3808
    %v3911 = vpack.c.b16 %v3811, %v3809
    %v3912 = vpack.c.b16 %v3814, %v3812
    %v3913 = vpack.c.b16 %v3815, %v3813
    %v3914 = vpack.c.b16 %v3818, %v3816
    %v3915 = vpack.c.b16 %v3819, %v3817
    %v3916 = vpack.c.b16 %v3822, %v3820
    %v3917 = vpack.c.b16 %v3823, %v3821
    %v3918 = vpack.c.b16 %v3826, %v3824
    %v3919 = vpack.c.b16 %v3827, %v3825
    %v3920 = vpack.c.b16 %v3830, %v3828
    %v3921 = vpack.c.b16 %v3831, %v3829
    %v3922 = vpack.c.b16 %v3834, %v3832
    %v3923 = vpack.c.b16 %v3835, %v3833
    %v3924 = vpack.c.b16 %v3838, %v3836
    %v3925 = vpack.c.b16 %v3839, %v3837
    %v3926 = vpack.c.b16 %v3842, %v3840
    %v3927 = vpack.c.b16 %v3843, %v3841
    %v3928 = vpack.c.b16 %v3846, %v3844
    %v3929 = vpack.c.b16 %v3847, %v3845
    %v3930 = vpack.c.b16 %v3850, %v3848
    %v3931 = vpack.c.b16 %v3851, %v3849
    %v3932 = vpack.c.b16 %v3854, %v3852
    %v3933 = vpack.c.b16 %v3855, %v3853
    %v3934 = vpack.c.b16 %v3858, %v3856
    %v3935 = vpack.c.b16 %v3859, %v3857
    %v3936 = vpack.c.b16 %v3862, %v3860
    %v3937 = vpack.c.b16 %v3863, %v3861
    %v3938 = vpack.c.b16 %v3866, %v3864
    %v3939 = vpack.c.b16 %v3867, %v3865
    %v3940 = vpack.c.b16 %v3870, %v3868
    %v3941 = vpack.c.b16 %v3871, %v3869
    %v3942 = vpack.c.b16 %v3874, %v3872
    %v3943 = vpack.c.b16 %v3875, %v3873
    %v3944 = vpack.c.b16 %v3878, %v3876
    %v3945 = vpack.c.b16 %v3879, %v3877
    %v3946 = vpack.c.b16 %v3882, %v3880
    %v3947 = vpack.c.b16 %v3883, %v3881
    %4012 = vmatprep.subr.bf16.mxu0 %v3899
    %4013 = vmatpush1.bf16.msra.mxu0 %v3898
    %4014 = vmatprep.subr.bf16.mxu0 %v3897
    %4015 = vmatpush1.bf16.msra.mxu0 %v3896
    %4016 = vmatprep.subr.bf16.mxu0 %v3895
    %4017 = vmatpush1.bf16.msra.mxu0 %v3894
    %4018 = vmatprep.subr.bf16.mxu0 %v3893
    %4019 = vmatpush1.bf16.msra.mxu0 %v3892
    %4020 = vmatprep.subr.bf16.mxu0 %v3891
    %4021 = vmatpush1.bf16.msra.mxu0 %v3890
    %4022 = vmatprep.subr.bf16.mxu0 %v3889
    %4023 = vmatpush1.bf16.msra.mxu0 %v3888
    %4024 = vmatprep.subr.bf16.mxu0 %v3887
    %4025 = vmatpush1.bf16.msra.mxu0 %v3886
    %4026 = vmatprep.subr.bf16.mxu0 %v3885
    %4027 = vmatpush1.bf16.msra.mxu0 %v3884
    %4028 = vmatprep.subr.bf16.mxu0 %v3915
    %4029 = vmatpush2.bf16.msra.mxu0 %v3914
    %4030 = vmatprep.subr.bf16.mxu0 %v3913
    %4031 = vmatpush2.bf16.msra.mxu0 %v3912
    %4032 = vmatprep.subr.bf16.mxu0 %v3911
    %4033 = vmatpush2.bf16.msra.mxu0 %v3910
    %4034 = vmatprep.subr.bf16.mxu0 %v3909
    %4035 = vmatpush2.bf16.msra.mxu0 %v3908
    %4036 = vmatprep.subr.bf16.mxu0 %v3907
    %4037 = vmatpush2.bf16.msra.mxu0 %v3906
    %4038 = vmatprep.subr.bf16.mxu0 %v3905
    %4039 = vmatpush2.bf16.msra.mxu0 %v3904
    %4040 = vmatprep.subr.bf16.mxu0 %v3903
    %4041 = vmatpush2.bf16.msra.mxu0 %v3902
    %4042 = vmatprep.subr.bf16.mxu0 %v3901
    %4043 = vmatpush2.bf16.msra.mxu0 %v3900
    %4044 = vmatprep.mubr.bf16.mxu0 %v3613
    %4045 = vmatmul.mubr.bf16.gmra.mxu0 %v3612
    %v4046 = vpop.f32.mrf.mxu0
    %v4047 = vadd.f32 %v3685, %v4046
    %v4048 = vpop.f32.mrf.mxu0
    %v4049 = vadd.f32 %v3689, %v4048
    %v4050 = vpop.f32.mrf.mxu0
    %v4051 = vpop.f32.mrf.mxu0
    %4052 = vdwg.mxu0
    %4053 = vmatprep.subr.bf16.mxu0 %v3931
    %4054 = vmatpush1.bf16.msra.mxu0 %v3930
    %4055 = vmatprep.subr.bf16.mxu0 %v3929
    %4056 = vmatpush1.bf16.msra.mxu0 %v3928
    %4057 = vmatprep.subr.bf16.mxu0 %v3927
    %4058 = vmatpush1.bf16.msra.mxu0 %v3926
    %4059 = vmatprep.subr.bf16.mxu0 %v3925
    %4060 = vmatpush1.bf16.msra.mxu0 %v3924
    %4061 = vmatprep.subr.bf16.mxu0 %v3923
    %4062 = vmatpush1.bf16.msra.mxu0 %v3922
    %4063 = vmatprep.subr.bf16.mxu0 %v3921
    %4064 = vmatpush1.bf16.msra.mxu0 %v3920
    %4065 = vmatprep.subr.bf16.mxu0 %v3919
    %4066 = vmatpush1.bf16.msra.mxu0 %v3918
    %4067 = vmatprep.subr.bf16.mxu0 %v3917
    %4068 = vmatpush1.bf16.msra.mxu0 %v3916
    %4069 = vmatprep.subr.bf16.mxu0 %v3947
    %4070 = vmatpush2.bf16.msra.mxu0 %v3946
    %4071 = vmatprep.subr.bf16.mxu0 %v3945
    %4072 = vmatpush2.bf16.msra.mxu0 %v3944
    %4073 = vmatprep.subr.bf16.mxu0 %v3943
    %4074 = vmatpush2.bf16.msra.mxu0 %v3942
    %4075 = vmatprep.subr.bf16.mxu0 %v3941
    %4076 = vmatpush2.bf16.msra.mxu0 %v3940
    %4077 = vmatprep.subr.bf16.mxu0 %v3939
    %4078 = vmatpush2.bf16.msra.mxu0 %v3938
    %4079 = vmatprep.subr.bf16.mxu0 %v3937
    %4080 = vmatpush2.bf16.msra.mxu0 %v3936
    %4081 = vmatprep.subr.bf16.mxu0 %v3935
    %4082 = vmatpush2.bf16.msra.mxu0 %v3934
    %4083 = vmatprep.subr.bf16.mxu0 %v3933
    %4084 = vmatpush2.bf16.msra.mxu0 %v3932
    %4085 = vmatprep.mubr.bf16.mxu0 %v3615
    %4086 = vmatmul.mubr.bf16.gmra.mxu0 %v3614
    %v4087 = vpop.f32.mrf.mxu0
    %v4088 = vadd.f32 %v4047, %v4087
    %v4089 = vpop.f32.mrf.mxu0
    %v4090 = vadd.f32 %v4049, %v4089
    %v4091 = vpop.f32.mrf.mxu0
    %v4092 = vpop.f32.mrf.mxu0
    %4093 = vdwg.mxu0
    %vm4094 = vcmp.gt.f32.partialorder %v4088, 0.0
    %vm4095 = vcmp.gt.f32.partialorder %v4090, 0.0
    %v4096 = vmul.f32 %v4088, 0.2
    %v4097 = vmul.f32 %v4090, 0.2
    %v4098 = vsel %vm4094, %v4088, %v4096
    %v4099 = vsel %vm4095, %v4090, %v4097
    %v4100 = vld [vmem:[%s7] sm:$0x3]
    %v4102 = vlaneseq
    %v4103 = vshrl.u32 %v4102, 7
    %v4104 = vsub.s32 0, %v4103
    %v4105 = vrot.slane %v4100, %v4104
    %v4106 = vlaneseq
    %v4107 = vshrl.u32 %v4106, 7
    %v4108 = vsub.s32 1, %v4107
    %v4109 = vrot.slane %v4100, %v4108
    %v4112 = vmul.f32 %v4098, %v4105
    %v4113 = vmul.f32 %v4099, %v4109
    %v4114 = vadd.f32 %v4112, %v4113
    %4115 = vadd.xlane.f32.xlu0 %v4114
    %v4116 = vpop.xlane.xlu0 %4115
    %v4117 = vld [vmem:[#allocation2] sm:$0x1]
    %v4119 = vlaneseq
    %v4120 = vshrl.u32 %v4119, 7
    %v4121 = vsub.s32 0, %v4120
    %v4122 = vrot.slane %v4117, %v4121
    %v4124 = vadd.f32 %v4116, %v4122
    %v4125 = vxor.u32 %v4124, 2147483648
    %v4126 = vmul.f32 %v4125, 1.442695
    %v4127 = vpow.pop %v4126
    %v4128 = vadd.f32 %v4127, 1.0
    %v4129 = vrcp.pop %v4128
    %v4130 = vmul.f32 1.0, %v4129
    %vm4131 = vcmask 7168
    %4132 = vst.msk [vmem:[%s9] sm:$0xff] %vm4131, %v4130
    // Predicated region
    $region58: #{tpu_custom_call.1} parent=1 // pred_check
      _
    $region59: #{tpu_custom_call.1} parent=1 // pred_check_branch
      %4134 = sbr.rel (0) target = $region61
    $region60: #{tpu_custom_call.1} parent=1 // pred_region
      _
    $region61: #{tpu_custom_call.1} parent=1 // pred_fallthru
      _
    // Predicated region
    $region62: #{tpu_custom_call.1} parent=1 // pred_check
      _
    $region63: #{tpu_custom_call.1} parent=1 // pred_check_branch
      %4136 = sbr.rel (0) target = $region65
    $region64: #{tpu_custom_call.1} parent=1 // pred_region
      _
    $region65: #{tpu_custom_call.1} parent=1 // pred_fallthru
      _
    %4137 = vsyncpa [#allocation4], 1
    %4138 = vsyncpa [#allocation6], 1
    %4139 = vsyncpa [#allocation9], 1

</llo_original>
